<compile_context>
chip_gen: v6e
topology: v6e:2x2x1
jax: 0.10.0
libtpu: 0.0.40
codegen_flags: <defaults>
</compile_context>

<pallas_src>
import numpy as np
import jax
import jax.numpy as jnp
from jax.experimental import pallas as pl
from jax.experimental.pallas import tpu as pltpu

_EPS = 1e-5


# ---------------------------------------------------------------------------
# Wrapper-side constant construction
# ---------------------------------------------------------------------------

def _fold_bn(gamma, beta, mean, var):
    scale = gamma / jnp.sqrt(var + _EPS)
    bias = beta - mean * scale
    return scale.astype(jnp.float32), bias.astype(jnp.float32)


def _banded_resconv_weight(w, wp):
    """w: (3, 3, C, C) HWIO -> (3, wp*C, wp*C) bf16 banded matrices B[kh].

    On a lane-dense activation a[h, w*C + ci], the 3x3 "same" conv is
        y[h] = a[h-1] @ B[0] + a[h] @ B[1] + a[h+1] @ B[2]
    (rows outside [0, Hp) are zero).  The kw taps and the W-direction zero
    padding are encoded in the band structure of B[kh].
    """
    c = w.shape[2]
    q = np.zeros((3, wp, wp), np.float32)           # q[kw, w_in, w_out]
    for kw in range(3):
        for wo in range(wp):
            wi = wo + kw - 1
            if 0 <= wi < wp:
                q[kw, wi, wo] = 1.0
    b = jnp.einsum("kvw,hkio->hviwo", jnp.asarray(q), w.astype(jnp.float32))
    return b.reshape(3, wp * c, wp * c).astype(jnp.bfloat16)


def _banded_stem_weight(w, wdim):
    """w: (3, 3, Cin, Cout) -> (4, wdim*Cin, 4*wp*Cout) bf16.

    Fuses conv3x3(pad=1, stride=1) with the following 2x2/2 maxpool: LHS row
    block j consumes input row (2*hp - 1 + j); output column block (bh, bw)
    holds the conv result at pixel (2*hp + bh, 2*wp + bw), i.e. the four
    pooling candidates of pooled position (hp, wp).
    """
    cin, cout = w.shape[2], w.shape[3]
    wp = wdim // 2
    p = np.zeros((3, 3, 4, wdim, 2, 2, wp), np.float32)
    for kh in range(3):
        for kw in range(3):
            for bh in range(2):
                for bw in range(2):
                    for wpi in range(wp):
                        wi = 2 * wpi + bw + kw - 1
                        if 0 <= wi < wdim:
                            p[kh, kw, kh + bh, wi, bh, bw, wpi] = 1.0
    big = jnp.einsum("abjdefg,abio->jdiefgo", jnp.asarray(p),
                     w.astype(jnp.float32))
    return big.reshape(4, wdim * cin, 4 * wp * cout).astype(jnp.bfloat16)


# ---------------------------------------------------------------------------
# Kernel
# ---------------------------------------------------------------------------

def _make_kernel(wpc):
    f32 = jnp.float32
    bf16 = jnp.bfloat16

    def kernel(xe_ref, xo_ref, sh_ref, w0_ref, w1_ref, w2_ref, bn_ref,
               out_ref):
        s_dn = sh_ref[0]                     # (Hp, Hp) bf16: y[i] = x[i-1]
        s_up = sh_ref[1]                     # (Hp, Hp) bf16: y[i] = x[i+1]

        def dn(v):                           # row halo shift on the idle MXU
            return jnp.dot(s_dn, v, preferred_element_type=f32).astype(bf16)

        def up(v):
            return jnp.dot(s_up, v, preferred_element_type=f32).astype(bf16)

        # ---- stem: conv3x3 fused with 2x2/2 maxpool ----------------------
        xe = xe_ref[0]                       # even input rows, (Hp, W*Cin) bf16
        xo = xo_ref[0]                       # odd  input rows
        acc = jnp.dot(dn(xo), w0_ref[0], preferred_element_type=f32)
        acc = acc + jnp.dot(xe, w0_ref[1], preferred_element_type=f32)
        acc = acc + jnp.dot(xo, w0_ref[2], preferred_element_type=f32)
        acc = acc + jnp.dot(up(xe), w0_ref[3], preferred_element_type=f32)
        # acc: (Hp, 4*wpc) f32; the four 256-lane blocks are the pool inputs.
        pooled = jnp.maximum(
            jnp.maximum(acc[:, 0 * wpc:1 * wpc], acc[:, 1 * wpc:2 * wpc]),
            jnp.maximum(acc[:, 2 * wpc:3 * wpc], acc[:, 3 * wpc:4 * wpc]))

        bn = bn_ref[...]                     # (6, wpc) f32 tiled scale/bias
        out_b = jnp.maximum(pooled * bn[0:1] + bn[1:2], 0.0)   # BN + ReLU

        # ---- ResBlock ----------------------------------------------------
        def conv3x3(a, w_ref):               # banded 3x3 conv, lane-dense
            a16 = a.astype(bf16)
            y = jnp.dot(dn(a16), w_ref[0], preferred_element_type=f32)
            y = y + jnp.dot(a16, w_ref[1], preferred_element_type=f32)
            y = y + jnp.dot(up(a16), w_ref[2], preferred_element_type=f32)
            return y

        r1 = jnp.maximum(conv3x3(out_b, w1_ref) * bn[2:3] + bn[3:4], 0.0)
        r2 = conv3x3(r1, w2_ref) * bn[4:5] + bn[5:6]
        res = jnp.maximum(r2 + out_b, 0.0)

        # ---- LayerBlock output: out + res, lane-dense (Hp, Wp*Cout) store --
        out_ref[0] = (out_b + res).astype(out_ref.dtype)

    return kernel


# ---------------------------------------------------------------------------
# Wrapper
# ---------------------------------------------------------------------------

def layer_block_forward(x_nchw, params):
    """LayerBlock forward (NCHW in, NCHW out); BatchNorm in inference mode."""
    x = jnp.transpose(x_nchw, (0, 2, 3, 1)).astype(jnp.float32)  # NCHW->NHWC
    n, h, w, cin = x.shape
    assert h % 2 == 0 and w % 2 == 0, "2x2/2 maxpool needs even H and W"
    w0, w1, w2 = params["w0"], params["w1"], params["w2"]
    cout = w0.shape[-1]
    hp, wp = h // 2, w // 2
    wpc = wp * cout

    # Lane-dense, row-parity-split input (bf16: it only feeds the MXU).
    x_ld = x.reshape(n, h, w * cin)
    x_e = x_ld[:, 0::2, :].astype(jnp.bfloat16)      # rows 0, 2, 4, ...
    x_o = x_ld[:, 1::2, :].astype(jnp.bfloat16)      # rows 1, 3, 5, ...

    shifts = jnp.asarray(np.stack([np.eye(hp, k=-1), np.eye(hp, k=1)]),
                         dtype=jnp.bfloat16)          # (2, Hp, Hp)

    w0_big = _banded_stem_weight(w0, w)               # (4, W*Cin, 4*Wp*Cout)
    w1_b = _banded_resconv_weight(w1, wp)             # (3, Wp*Cout, Wp*Cout)
    w2_b = _banded_resconv_weight(w2, wp)

    s0, b0 = _fold_bn(*params["bn"])
    s1, b1 = _fold_bn(*params["bn1"])
    s2, b2 = _fold_bn(*params["bn2"])
    bn = jnp.stack([jnp.tile(v, wp) for v in (s0, b0, s1, b1, s2, b2)])

    kernel = _make_kernel(wpc)

    # Advisory cost estimate so XLA schedules the surrounding layout ops
    # sensibly around the custom call.
    flops = n * (4 * 2 * hp * (w * cin) * (4 * wpc)       # stem matmuls
                 + 6 * 2 * hp * wpc * wpc                 # resblock matmuls
                 + 2 * 2 * hp * hp * (w * cin)            # stem row shifts
                 + 4 * 2 * hp * hp * wpc)                 # resblock row shifts
    bytes_accessed = int((x_e.size + x_o.size) * 2
                         + (w0_big.size + w1_b.size + w2_b.size) * 2
                         + shifts.size * 2 + bn.size * 4
                         + n * hp * wpc * 4)
    cost = pl.CostEstimate(flops=int(flops), transcendentals=0,
                           bytes_accessed=bytes_accessed)

    grid_spec = pltpu.PrefetchScalarGridSpec(
        num_scalar_prefetch=0,
        grid=(n,),
        in_specs=[
            pl.BlockSpec((1, hp, w * cin), lambda i: (i, 0, 0)),
            pl.BlockSpec((1, hp, w * cin), lambda i: (i, 0, 0)),
            # Constant index_maps: these blocks are DMA'd once and reused.
            pl.BlockSpec((2, hp, hp), lambda i: (0, 0, 0)),
            pl.BlockSpec((4, w * cin, 4 * wpc), lambda i: (0, 0, 0)),
            pl.BlockSpec((3, wpc, wpc), lambda i: (0, 0, 0)),
            pl.BlockSpec((3, wpc, wpc), lambda i: (0, 0, 0)),
            pl.BlockSpec((6, wpc), lambda i: (0, 0)),
        ],
        out_specs=pl.BlockSpec((1, hp, wpc), lambda i: (i, 0, 0)),
    )

    out_ld = pl.pallas_call(
        kernel,
        out_shape=jax.ShapeDtypeStruct((n, hp, wpc), jnp.float32),
        grid_spec=grid_spec,
        compiler_params=pltpu.CompilerParams(
            dimension_semantics=("parallel",)),   # v7x: batch across both TCs
        cost_estimate=cost,
    )(x_e, x_o, shifts, w0_big, w1_b, w2_b, bn)

    out = out_ld.reshape(n, hp, wp, cout)            # undo lane-dense packing
    return jnp.transpose(out, (0, 3, 1, 2))          # NHWC -> NCHW


# ---------------------------------------------------------------------------
# Pure-JAX reference (f32) for correctness checking
# ---------------------------------------------------------------------------

def _reference_forward(x_nchw, params):
    x = jnp.transpose(x_nchw, (0, 2, 3, 1)).astype(jnp.float32)
    dn = ("NHWC", "HWIO", "NHWC")

    def conv(v, w):
        return jax.lax.conv_general_dilated(
            v, w, (1, 1), ((1, 1), (1, 1)), dimension_numbers=dn)

    def bn(v, p):
        gamma, beta, mean, var = p
        return (v - mean) / jnp.sqrt(var + _EPS) * gamma + beta

    y = conv(x, params["w0"])
    y = jax.lax.reduce_window(y, -jnp.inf, jax.lax.max,
                              (1, 2, 2, 1), (1, 2, 2, 1), "VALID")
    out = jax.nn.relu(bn(y, params["bn"]))
    r = jax.nn.relu(bn(conv(out, params["w1"]), params["bn1"]))
    r = bn(conv(r, params["w2"]), params["bn2"])
    res = jax.nn.relu(r + out)
    return jnp.transpose(out + res, (0, 3, 1, 2))


if __name__ == "__main__":
    N, Cin, H, W = 2, 4, 16, 16
    Cout = 32  # planes

    key = jax.random.PRNGKey(0)
    ks = jax.random.split(key, 8)

    def bn_params(k):
        k1, k2, k3, k4 = jax.random.split(k, 4)
        gamma = 1.0 + 0.1 * jax.random.normal(k1, (Cout,), jnp.float32)
        beta = 0.1 * jax.random.normal(k2, (Cout,), jnp.float32)
        mean = 0.1 * jax.random.normal(k3, (Cout,), jnp.float32)
        var = jax.random.uniform(k4, (Cout,), jnp.float32, 0.5, 1.5)
        return (gamma, beta, mean, var)

    x = jax.random.normal(ks[0], (N, Cin, H, W), jnp.float32)
    params = {
        "w0": 0.1 * jax.random.normal(ks[1], (3, 3, Cin, Cout), jnp.float32),
        "w1": 0.1 * jax.random.normal(ks[2], (3, 3, Cout, Cout), jnp.float32),
        "w2": 0.1 * jax.random.normal(ks[3], (3, 3, Cout, Cout), jnp.float32),
        "bn": bn_params(ks[4]),
        "bn1": bn_params(ks[5]),
        "bn2": bn_params(ks[6]),
    }

    # jit the whole wrapper so the layout plumbing (transposes, banded-weight
    # einsums, BN folding) fuses into one XLA program around the custom call.
    fwd = jax.jit(layer_block_forward)
    out = jax.block_until_ready(fwd(x, params))
    assert out.shape == (N, Cout, H // 2, W // 2)

    ref = _reference_forward(x, params)
    # Kernel matmul operands are bf16 (f32 accumulation) per perf guidance for
    # v6e/v7x; tolerance vs. the f32 reference is sized for bf16 precision.
    err = float(jnp.max(jnp.abs(out - ref)))
    assert jnp.allclose(out, ref, atol=5e-2, rtol=5e-2), err

    print("KERNEL_OK")
</pallas_src>

<mosaic_0001>
module attributes {stable_mosaic.version = 11 : i64} {
  func.func @kernel(%arg0: i32, %arg1: memref<1x8x64xbf16, #tpu.memory_space<vmem>>, %arg2: memref<1x8x64xbf16, #tpu.memory_space<vmem>>, %arg3: memref<2x8x8xbf16, #tpu.memory_space<vmem>>, %arg4: memref<4x64x1024xbf16, #tpu.memory_space<vmem>>, %arg5: memref<3x256x256xbf16, #tpu.memory_space<vmem>>, %arg6: memref<3x256x256xbf16, #tpu.memory_space<vmem>>, %arg7: memref<6x256xf32, #tpu.memory_space<vmem>>, %arg8: memref<1x8x256xf32, #tpu.memory_space<vmem>>) attributes {dimension_semantics = [#tpu.dimension_semantics<parallel>], iteration_bounds = array<i64: 2>, scalar_prefetch = 0 : i64, scratch_operands = 0 : i64, tpu.core_type = #tpu.core_type<tc>, window_params = [{transform_indices = @transform_0, window_bounds = array<i64: 1, 8, 64>}, {transform_indices = @transform_1, window_bounds = array<i64: 1, 8, 64>}, {pipeline_mode = #tpu.pipeline_mode<synchronous>, transform_indices = @transform_2, window_bounds = array<i64: 2, 8, 8>}, {pipeline_mode = #tpu.pipeline_mode<synchronous>, transform_indices = @transform_3, window_bounds = array<i64: 4, 64, 1024>}, {pipeline_mode = #tpu.pipeline_mode<synchronous>, transform_indices = @transform_4, window_bounds = array<i64: 3, 256, 256>}, {pipeline_mode = #tpu.pipeline_mode<synchronous>, transform_indices = @transform_5, window_bounds = array<i64: 3, 256, 256>}, {pipeline_mode = #tpu.pipeline_mode<synchronous>, transform_indices = @transform_6, window_bounds = array<i64: 6, 256>}, {transform_indices = @transform_7, window_bounds = array<i64: 1, 8, 256>}]} {
    %c0 = arith.constant 0 : index
    %c0_0 = arith.constant 0 : index
    %c0_1 = arith.constant 0 : index
    %0 = vector.load %arg3[%c0, %c0_0, %c0_1] : memref<2x8x8xbf16, #tpu.memory_space<vmem>>, vector<1x8x8xbf16>
    %1 = vector.shape_cast %0 : vector<1x8x8xbf16> to vector<8x8xbf16>
    %c1 = arith.constant 1 : index
    %c0_2 = arith.constant 0 : index
    %c0_3 = arith.constant 0 : index
    %2 = vector.load %arg3[%c1, %c0_2, %c0_3] : memref<2x8x8xbf16, #tpu.memory_space<vmem>>, vector<1x8x8xbf16>
    %3 = vector.shape_cast %2 : vector<1x8x8xbf16> to vector<8x8xbf16>
    %c0_4 = arith.constant 0 : index
    %c0_5 = arith.constant 0 : index
    %c0_6 = arith.constant 0 : index
    %4 = vector.load %arg1[%c0_4, %c0_5, %c0_6] : memref<1x8x64xbf16, #tpu.memory_space<vmem>>, vector<1x8x64xbf16>
    %5 = vector.shape_cast %4 : vector<1x8x64xbf16> to vector<8x64xbf16>
    %c0_7 = arith.constant 0 : index
    %c0_8 = arith.constant 0 : index
    %c0_9 = arith.constant 0 : index
    %6 = vector.load %arg2[%c0_7, %c0_8, %c0_9] : memref<1x8x64xbf16, #tpu.memory_space<vmem>>, vector<1x8x64xbf16>
    %7 = vector.shape_cast %6 : vector<1x8x64xbf16> to vector<8x64xbf16>
    %cst = arith.constant dense<0.000000e+00> : vector<8x64xf32>
    %8 = tpu.matmul %1, %7, %cst {dimension_numbers = #tpu.dot_dimension_numbers<[1], [0], [0], [1], [0, 0, 1, 1], [], []>} : vector<8x8xbf16>, vector<8x64xbf16>, vector<8x64xf32> -> vector<8x64xf32>
    %9 = arith.truncf %8 : vector<8x64xf32> to vector<8x64xbf16>
    %c0_10 = arith.constant 0 : index
    %c0_11 = arith.constant 0 : index
    %c0_12 = arith.constant 0 : index
    %10 = vector.load %arg4[%c0_10, %c0_11, %c0_12] : memref<4x64x1024xbf16, #tpu.memory_space<vmem>>, vector<1x64x1024xbf16>
    %11 = vector.shape_cast %10 : vector<1x64x1024xbf16> to vector<64x1024xbf16>
    %cst_13 = arith.constant dense<0.000000e+00> : vector<8x1024xf32>
    %12 = tpu.matmul %9, %11, %cst_13 {dimension_numbers = #tpu.dot_dimension_numbers<[1], [0], [0], [1], [0, 0, 1, 1], [], []>} : vector<8x64xbf16>, vector<64x1024xbf16>, vector<8x1024xf32> -> vector<8x1024xf32>
    %c1_14 = arith.constant 1 : index
    %c0_15 = arith.constant 0 : index
    %c0_16 = arith.constant 0 : index
    %13 = vector.load %arg4[%c1_14, %c0_15, %c0_16] : memref<4x64x1024xbf16, #tpu.memory_space<vmem>>, vector<1x64x1024xbf16>
    %14 = vector.shape_cast %13 : vector<1x64x1024xbf16> to vector<64x1024xbf16>
    %cst_17 = arith.constant dense<0.000000e+00> : vector<8x1024xf32>
    %15 = tpu.matmul %5, %14, %cst_17 {dimension_numbers = #tpu.dot_dimension_numbers<[1], [0], [0], [1], [0, 0, 1, 1], [], []>} : vector<8x64xbf16>, vector<64x1024xbf16>, vector<8x1024xf32> -> vector<8x1024xf32>
    %16 = arith.addf %12, %15 : vector<8x1024xf32>
    %c2 = arith.constant 2 : index
    %c0_18 = arith.constant 0 : index
    %c0_19 = arith.constant 0 : index
    %17 = vector.load %arg4[%c2, %c0_18, %c0_19] : memref<4x64x1024xbf16, #tpu.memory_space<vmem>>, vector<1x64x1024xbf16>
    %18 = vector.shape_cast %17 : vector<1x64x1024xbf16> to vector<64x1024xbf16>
    %cst_20 = arith.constant dense<0.000000e+00> : vector<8x1024xf32>
    %19 = tpu.matmul %7, %18, %cst_20 {dimension_numbers = #tpu.dot_dimension_numbers<[1], [0], [0], [1], [0, 0, 1, 1], [], []>} : vector<8x64xbf16>, vector<64x1024xbf16>, vector<8x1024xf32> -> vector<8x1024xf32>
    %20 = arith.addf %16, %19 : vector<8x1024xf32>
    %cst_21 = arith.constant dense<0.000000e+00> : vector<8x64xf32>
    %21 = tpu.matmul %3, %5, %cst_21 {dimension_numbers = #tpu.dot_dimension_numbers<[1], [0], [0], [1], [0, 0, 1, 1], [], []>} : vector<8x8xbf16>, vector<8x64xbf16>, vector<8x64xf32> -> vector<8x64xf32>
    %22 = arith.truncf %21 : vector<8x64xf32> to vector<8x64xbf16>
    %c3 = arith.constant 3 : index
    %c0_22 = arith.constant 0 : index
    %c0_23 = arith.constant 0 : index
    %23 = vector.load %arg4[%c3, %c0_22, %c0_23] : memref<4x64x1024xbf16, #tpu.memory_space<vmem>>, vector<1x64x1024xbf16>
    %24 = vector.shape_cast %23 : vector<1x64x1024xbf16> to vector<64x1024xbf16>
    %cst_24 = arith.constant dense<0.000000e+00> : vector<8x1024xf32>
    %25 = tpu.matmul %22, %24, %cst_24 {dimension_numbers = #tpu.dot_dimension_numbers<[1], [0], [0], [1], [0, 0, 1, 1], [], []>} : vector<8x64xbf16>, vector<64x1024xbf16>, vector<8x1024xf32> -> vector<8x1024xf32>
    %26 = arith.addf %20, %25 : vector<8x1024xf32>
    %27 = vector.extract_strided_slice %26 {offsets = [0, 0], sizes = [8, 256], strides = [1, 1]} : vector<8x1024xf32> to vector<8x256xf32>
    %28 = vector.extract_strided_slice %26 {offsets = [0, 256], sizes = [8, 256], strides = [1, 1]} : vector<8x1024xf32> to vector<8x256xf32>
    %29 = arith.maximumf %27, %28 : vector<8x256xf32>
    %30 = vector.extract_strided_slice %26 {offsets = [0, 512], sizes = [8, 256], strides = [1, 1]} : vector<8x1024xf32> to vector<8x256xf32>
    %31 = vector.extract_strided_slice %26 {offsets = [0, 768], sizes = [8, 256], strides = [1, 1]} : vector<8x1024xf32> to vector<8x256xf32>
    %32 = arith.maximumf %30, %31 : vector<8x256xf32>
    %33 = arith.maximumf %29, %32 : vector<8x256xf32>
    %c0_25 = arith.constant 0 : index
    %c0_26 = arith.constant 0 : index
    %34 = vector.load %arg7[%c0_25, %c0_26] : memref<6x256xf32, #tpu.memory_space<vmem>>, vector<6x256xf32>
    %35 = vector.extract_strided_slice %34 {offsets = [0, 0], sizes = [1, 256], strides = [1, 1]} : vector<6x256xf32> to vector<1x256xf32>
    %36 = vector.broadcast %35 : vector<1x256xf32> to vector<8x256xf32>
    %37 = arith.mulf %33, %36 : vector<8x256xf32>
    %38 = vector.extract_strided_slice %34 {offsets = [1, 0], sizes = [1, 256], strides = [1, 1]} : vector<6x256xf32> to vector<1x256xf32>
    %39 = vector.broadcast %38 : vector<1x256xf32> to vector<8x256xf32>
    %40 = arith.addf %37, %39 : vector<8x256xf32>
    %cst_27 = arith.constant 0.000000e+00 : f32
    %41 = vector.broadcast %cst_27 : f32 to vector<8x256xf32>
    %42 = arith.maximumf %40, %41 : vector<8x256xf32>
    %43 = arith.truncf %42 : vector<8x256xf32> to vector<8x256xbf16>
    %cst_28 = arith.constant dense<0.000000e+00> : vector<8x256xf32>
    %44 = tpu.matmul %1, %43, %cst_28 {dimension_numbers = #tpu.dot_dimension_numbers<[1], [0], [0], [1], [0, 0, 1, 1], [], []>} : vector<8x8xbf16>, vector<8x256xbf16>, vector<8x256xf32> -> vector<8x256xf32>
    %45 = arith.truncf %44 : vector<8x256xf32> to vector<8x256xbf16>
    %c0_29 = arith.constant 0 : index
    %c0_30 = arith.constant 0 : index
    %c0_31 = arith.constant 0 : index
    %46 = vector.load %arg5[%c0_29, %c0_30, %c0_31] : memref<3x256x256xbf16, #tpu.memory_space<vmem>>, vector<1x256x256xbf16>
    %47 = vector.shape_cast %46 : vector<1x256x256xbf16> to vector<256x256xbf16>
    %cst_32 = arith.constant dense<0.000000e+00> : vector<8x256xf32>
    %48 = tpu.matmul %45, %47, %cst_32 {dimension_numbers = #tpu.dot_dimension_numbers<[1], [0], [0], [1], [0, 0, 1, 1], [], []>} : vector<8x256xbf16>, vector<256x256xbf16>, vector<8x256xf32> -> vector<8x256xf32>
    %c1_33 = arith.constant 1 : index
    %c0_34 = arith.constant 0 : index
    %c0_35 = arith.constant 0 : index
    %49 = vector.load %arg5[%c1_33, %c0_34, %c0_35] : memref<3x256x256xbf16, #tpu.memory_space<vmem>>, vector<1x256x256xbf16>
    %50 = vector.shape_cast %49 : vector<1x256x256xbf16> to vector<256x256xbf16>
    %cst_36 = arith.constant dense<0.000000e+00> : vector<8x256xf32>
    %51 = tpu.matmul %43, %50, %cst_36 {dimension_numbers = #tpu.dot_dimension_numbers<[1], [0], [0], [1], [0, 0, 1, 1], [], []>} : vector<8x256xbf16>, vector<256x256xbf16>, vector<8x256xf32> -> vector<8x256xf32>
    %52 = arith.addf %48, %51 : vector<8x256xf32>
    %cst_37 = arith.constant dense<0.000000e+00> : vector<8x256xf32>
    %53 = tpu.matmul %3, %43, %cst_37 {dimension_numbers = #tpu.dot_dimension_numbers<[1], [0], [0], [1], [0, 0, 1, 1], [], []>} : vector<8x8xbf16>, vector<8x256xbf16>, vector<8x256xf32> -> vector<8x256xf32>
    %54 = arith.truncf %53 : vector<8x256xf32> to vector<8x256xbf16>
    %c2_38 = arith.constant 2 : index
    %c0_39 = arith.constant 0 : index
    %c0_40 = arith.constant 0 : index
    %55 = vector.load %arg5[%c2_38, %c0_39, %c0_40] : memref<3x256x256xbf16, #tpu.memory_space<vmem>>, vector<1x256x256xbf16>
    %56 = vector.shape_cast %55 : vector<1x256x256xbf16> to vector<256x256xbf16>
    %cst_41 = arith.constant dense<0.000000e+00> : vector<8x256xf32>
    %57 = tpu.matmul %54, %56, %cst_41 {dimension_numbers = #tpu.dot_dimension_numbers<[1], [0], [0], [1], [0, 0, 1, 1], [], []>} : vector<8x256xbf16>, vector<256x256xbf16>, vector<8x256xf32> -> vector<8x256xf32>
    %58 = arith.addf %52, %57 : vector<8x256xf32>
    %59 = vector.extract_strided_slice %34 {offsets = [2, 0], sizes = [1, 256], strides = [1, 1]} : vector<6x256xf32> to vector<1x256xf32>
    %60 = vector.broadcast %59 : vector<1x256xf32> to vector<8x256xf32>
    %61 = arith.mulf %58, %60 : vector<8x256xf32>
    %62 = vector.extract_strided_slice %34 {offsets = [3, 0], sizes = [1, 256], strides = [1, 1]} : vector<6x256xf32> to vector<1x256xf32>
    %63 = vector.broadcast %62 : vector<1x256xf32> to vector<8x256xf32>
    %64 = arith.addf %61, %63 : vector<8x256xf32>
    %cst_42 = arith.constant 0.000000e+00 : f32
    %65 = vector.broadcast %cst_42 : f32 to vector<8x256xf32>
    %66 = arith.maximumf %64, %65 : vector<8x256xf32>
    %67 = arith.truncf %66 : vector<8x256xf32> to vector<8x256xbf16>
    %cst_43 = arith.constant dense<0.000000e+00> : vector<8x256xf32>
    %68 = tpu.matmul %1, %67, %cst_43 {dimension_numbers = #tpu.dot_dimension_numbers<[1], [0], [0], [1], [0, 0, 1, 1], [], []>} : vector<8x8xbf16>, vector<8x256xbf16>, vector<8x256xf32> -> vector<8x256xf32>
    %69 = arith.truncf %68 : vector<8x256xf32> to vector<8x256xbf16>
    %c0_44 = arith.constant 0 : index
    %c0_45 = arith.constant 0 : index
    %c0_46 = arith.constant 0 : index
    %70 = vector.load %arg6[%c0_44, %c0_45, %c0_46] : memref<3x256x256xbf16, #tpu.memory_space<vmem>>, vector<1x256x256xbf16>
    %71 = vector.shape_cast %70 : vector<1x256x256xbf16> to vector<256x256xbf16>
    %cst_47 = arith.constant dense<0.000000e+00> : vector<8x256xf32>
    %72 = tpu.matmul %69, %71, %cst_47 {dimension_numbers = #tpu.dot_dimension_numbers<[1], [0], [0], [1], [0, 0, 1, 1], [], []>} : vector<8x256xbf16>, vector<256x256xbf16>, vector<8x256xf32> -> vector<8x256xf32>
    %c1_48 = arith.constant 1 : index
    %c0_49 = arith.constant 0 : index
    %c0_50 = arith.constant 0 : index
    %73 = vector.load %arg6[%c1_48, %c0_49, %c0_50] : memref<3x256x256xbf16, #tpu.memory_space<vmem>>, vector<1x256x256xbf16>
    %74 = vector.shape_cast %73 : vector<1x256x256xbf16> to vector<256x256xbf16>
    %cst_51 = arith.constant dense<0.000000e+00> : vector<8x256xf32>
    %75 = tpu.matmul %67, %74, %cst_51 {dimension_numbers = #tpu.dot_dimension_numbers<[1], [0], [0], [1], [0, 0, 1, 1], [], []>} : vector<8x256xbf16>, vector<256x256xbf16>, vector<8x256xf32> -> vector<8x256xf32>
    %76 = arith.addf %72, %75 : vector<8x256xf32>
    %cst_52 = arith.constant dense<0.000000e+00> : vector<8x256xf32>
    %77 = tpu.matmul %3, %67, %cst_52 {dimension_numbers = #tpu.dot_dimension_numbers<[1], [0], [0], [1], [0, 0, 1, 1], [], []>} : vector<8x8xbf16>, vector<8x256xbf16>, vector<8x256xf32> -> vector<8x256xf32>
    %78 = arith.truncf %77 : vector<8x256xf32> to vector<8x256xbf16>
    %c2_53 = arith.constant 2 : index
    %c0_54 = arith.constant 0 : index
    %c0_55 = arith.constant 0 : index
    %79 = vector.load %arg6[%c2_53, %c0_54, %c0_55] : memref<3x256x256xbf16, #tpu.memory_space<vmem>>, vector<1x256x256xbf16>
    %80 = vector.shape_cast %79 : vector<1x256x256xbf16> to vector<256x256xbf16>
    %cst_56 = arith.constant dense<0.000000e+00> : vector<8x256xf32>
    %81 = tpu.matmul %78, %80, %cst_56 {dimension_numbers = #tpu.dot_dimension_numbers<[1], [0], [0], [1], [0, 0, 1, 1], [], []>} : vector<8x256xbf16>, vector<256x256xbf16>, vector<8x256xf32> -> vector<8x256xf32>
    %82 = arith.addf %76, %81 : vector<8x256xf32>
    %83 = vector.extract_strided_slice %34 {offsets = [4, 0], sizes = [1, 256], strides = [1, 1]} : vector<6x256xf32> to vector<1x256xf32>
    %84 = vector.broadcast %83 : vector<1x256xf32> to vector<8x256xf32>
    %85 = arith.mulf %82, %84 : vector<8x256xf32>
    %86 = vector.extract_strided_slice %34 {offsets = [5, 0], sizes = [1, 256], strides = [1, 1]} : vector<6x256xf32> to vector<1x256xf32>
    %87 = vector.broadcast %86 : vector<1x256xf32> to vector<8x256xf32>
    %88 = arith.addf %85, %87 : vector<8x256xf32>
    %89 = arith.addf %88, %42 : vector<8x256xf32>
    %cst_57 = arith.constant 0.000000e+00 : f32
    %90 = vector.broadcast %cst_57 : f32 to vector<8x256xf32>
    %91 = arith.maximumf %89, %90 : vector<8x256xf32>
    %92 = arith.addf %42, %91 : vector<8x256xf32>
    %c0_58 = arith.constant 0 : index
    %c0_59 = arith.constant 0 : index
    %c0_60 = arith.constant 0 : index
    %93 = vector.load %arg8[%c0_58, %c0_59, %c0_60] : memref<1x8x256xf32, #tpu.memory_space<vmem>>, vector<1x8x256xf32>
    %94 = vector.shape_cast %93 : vector<1x8x256xf32> to vector<8x256xf32>
    %95 = vector.shape_cast %92 : vector<8x256xf32> to vector<1x8x256xf32>
    tpu.vector_store %arg8[%c0_58, %c0_59, %c0_60], %95 {strides = array<i32>} : memref<1x8x256xf32, #tpu.memory_space<vmem>>, vector<1x8x256xf32>,
    return
  }
  func.func @transform_0(%arg0: i32) -> (i32, i32, i32) {
    %c0_i32 = arith.constant 0 : i32
    %c0_i32_0 = arith.constant 0 : i32
    %c0_i32_1 = arith.constant 0 : i32
    return %arg0, %c0_i32, %c0_i32_0 : i32, i32, i32
  }
  func.func @transform_1(%arg0: i32) -> (i32, i32, i32) {
    %c0_i32 = arith.constant 0 : i32
    %c0_i32_0 = arith.constant 0 : i32
    %c0_i32_1 = arith.constant 0 : i32
    return %arg0, %c0_i32, %c0_i32_0 : i32, i32, i32
  }
  func.func @transform_2(%arg0: i32) -> (i32, i32, i32) {
    %c0_i32 = arith.constant 0 : i32
    %c0_i32_0 = arith.constant 0 : i32
    %c0_i32_1 = arith.constant 0 : i32
    %c0_i32_2 = arith.constant 0 : i32
    return %c0_i32, %c0_i32_0, %c0_i32_1 : i32, i32, i32
  }
  func.func @transform_3(%arg0: i32) -> (i32, i32, i32) {
    %c0_i32 = arith.constant 0 : i32
    %c0_i32_0 = arith.constant 0 : i32
    %c0_i32_1 = arith.constant 0 : i32
    %c0_i32_2 = arith.constant 0 : i32
    return %c0_i32, %c0_i32_0, %c0_i32_1 : i32, i32, i32
  }
  func.func @transform_4(%arg0: i32) -> (i32, i32, i32) {
    %c0_i32 = arith.constant 0 : i32
    %c0_i32_0 = arith.constant 0 : i32
    %c0_i32_1 = arith.constant 0 : i32
    %c0_i32_2 = arith.constant 0 : i32
    return %c0_i32, %c0_i32_0, %c0_i32_1 : i32, i32, i32
  }
  func.func @transform_5(%arg0: i32) -> (i32, i32, i32) {
    %c0_i32 = arith.constant 0 : i32
    %c0_i32_0 = arith.constant 0 : i32
    %c0_i32_1 = arith.constant 0 : i32
    %c0_i32_2 = arith.constant 0 : i32
    return %c0_i32, %c0_i32_0, %c0_i32_1 : i32, i32, i32
  }
  func.func @transform_6(%arg0: i32) -> (i32, i32) {
    %c0_i32 = arith.constant 0 : i32
    %c0_i32_0 = arith.constant 0 : i32
    %c0_i32_1 = arith.constant 0 : i32
    return %c0_i32, %c0_i32_0 : i32, i32
  }
  func.func @transform_7(%arg0: i32) -> (i32, i32, i32) {
    %c0_i32 = arith.constant 0 : i32
    %c0_i32_0 = arith.constant 0 : i32
    %c0_i32_1 = arith.constant 0 : i32
    return %arg0, %c0_i32, %c0_i32_0 : i32, i32, i32
  }
}

</mosaic_0001>

<llo_original>
// kernel: tile.33
$region0: #{tile.33}
  #allocation0 [shape = 's32[1]{0}', space=sflag, size = 0x4, scoped, tag = 'scoped memory for tile.33']
  %s0 = inlined_call_operand.vmem [shape: f32[32], index: 0, kind: input, shape index: {}]
  %s1 = inlined_call_operand.vmem [shape: f32[8,32], index: 1, kind: output, shape index: {}]
  // Predicated region
  $region2: #{tile.33} parent=0 // pred_check
    _
  $region3: #{tile.33} parent=0 // pred_check_branch
    %3 = sbr.rel (0) target = $region5
  $region4: #{tile.33} parent=0 // pred_region
    _
  $region5: #{tile.33} parent=0 // pred_fallthru
    _
  %v4 = vld [vmem:[%s0] ss:$0 sm:$0xff]
  %5 = vst [vmem:[%s1] sm:$0xff] %v4

// kernel: tile.54
$region0: #{tile.54}
  %s0 = inlined_call_operand.vmem [shape: f32[8,32], index: 0, kind: input, shape index: {}]
  %s1 = inlined_call_operand.vmem [shape: f32[1,256], index: 1, kind: output, shape index: {}]
  $region1: #{tile.54} parent=0
    #allocation0 [shape = 'u8[8192]{0}', space=vmem, size = 0x2000, scoped, tag = 'scoped mem for output reshape']
    %s2 = smov 3
    %v3 = vld [vmem:[%s0] ss:$4 sm:%s2]
    %vm4 = vcmask 261120
    %5 = vst.msk [vmem:[#allocation0] ss:$8 sm:$0x3] %vm4, %v3
    %s6 = scalar_lea.vmem %s0, 3
    %s7 = smov 3
    %v8 = vld [vmem:[%s6] ss:$4 sm:%s7]
    %9 = vrot.lane.b32.xlu0 %v8, 96
    %v10 = vpop.permute.xlu0 %9
    %vm11 = vcmask 1048320
    %12 = vst.msk [vmem:[#allocation0] ss:$8 sm:$0x3] %vm11, %v10
    %s13 = scalar_lea.vmem %s0, 2
    %s14 = smov 3
    %v15 = vld [vmem:[%s13] ss:$4 sm:%s14]
    %16 = vrot.lane.b32.xlu0 %v15, 64
    %v17 = vpop.permute.xlu0 %16
    %vm18 = vcmask 785920
    %19 = vst.msk [vmem:[#allocation0] ss:$8 sm:$0x3] %vm18, %v17
    %s20 = scalar_lea.vmem %s0, 1
    %s21 = smov 3
    %v22 = vld [vmem:[%s20] ss:$4 sm:%s21]
    %23 = vrot.lane.b32.xlu0 %v22, 32
    %v24 = vpop.permute.xlu0 %23
    %vm25 = vcmask 523520
    %26 = vst.msk [vmem:[#allocation0] ss:$8 sm:$0x3] %vm25, %v24
    %s28 = sshll.u32 1, 1
    %s29 = ssub.s32 %s28, 1
    %v31 = vld [vmem:[#allocation0] sm:%s29]
    %s32 = sshll.u32 1, 1
    %s33 = ssub.s32 %s32, 1
    %34 = vst [vmem:[%s1] sm:%s33] %v31
    %s35 = scalar_lea.vmem [#allocation0], 8
    %v36 = vld [vmem:[%s35] sm:%s29]
    %s37 = sshll.u32 1, 1
    %s38 = ssub.s32 %s37, 1
    %s39 = scalar_lea.vmem %s1, 1
    %40 = vst [vmem:[%s39] sm:%s38] %v36

// kernel: layer_block_forward.1
$region0: #{layer_block_forward.1}
  #allocation0 [shape = 'u32[]', space=smem, size = 0x4, offset = 0x4, fixed_abs, tag = 'smem constant byte address 0x4 - core index']
  #allocation1 [shape = 'u32[144,128]{1,0:T(1,128)}', space=vmem, size = 0x12000, scoped, tag = 'internal scratch']
  %s0 = inlined_call_operand.vmem [shape: bf16[2,8,64], index: 0, kind: input, shape index: {}]
  %s1 = inlined_call_operand.vmem [shape: bf16[2,8,64], index: 1, kind: input, shape index: {}]
  %s2 = inlined_call_operand.vmem [shape: bf16[2,8,8], index: 2, kind: input, shape index: {}]
  %s3 = inlined_call_operand.vmem [shape: bf16[4,64,1024], index: 3, kind: input, shape index: {}]
  %s4 = inlined_call_operand.vmem [shape: bf16[3,256,256], index: 4, kind: input, shape index: {}]
  %s5 = inlined_call_operand.vmem [shape: bf16[3,256,256], index: 5, kind: input, shape index: {}]
  %s6 = inlined_call_operand.vmem [shape: f32[6,256], index: 6, kind: input, shape index: {}]
  %s7 = inlined_call_operand.vmem [shape: f32[2,8,256], index: 7, kind: output, shape index: {}]
  %s8 = sld [smem:[#allocation0]]
  $region61: #{layer_block_forward.1} parent=0
    _
  %s10 = ssub.s32 1, %s8
  %s11 = scalar_select 0, %s10, %s8
  loop: start=0, step=1, limit=4
  $region2: #{layer_block_forward.1} parent=0 // loop_pre_header
    _
  $region3: #{layer_block_forward.1} parent=0 // loop_header
    %s13 = sphi 0, %s17
    %p14 = scmp.ge.s32.totalorder %s13, 4
    %s23 = sphi 0, %s25
    %s26 = sphi 0, %s23
    %s27 = sphi 0, %s26
    %s43 = sphi 0, %s27
    %s49 = sphi 0, %s51
    %s52 = sphi 0, %s49
    %s53 = sphi 0, %s52
    %s69 = sphi 0, %s53
    %s73 = sphi 0, %s73
    %s75 = sphi 0, %s73
    %s76 = sphi 0, %s75
    %s90 = sphi 0, %s76
    %s94 = sphi 0, %s94
    %s96 = sphi 0, %s94
    %s97 = sphi 0, %s96
    %s111 = sphi 0, %s97
    %s115 = sphi 0, %s115
    %s117 = sphi 0, %s115
    %s118 = sphi 0, %s117
    %s132 = sphi 0, %s118
    %s136 = sphi 0, %s136
    %s138 = sphi 0, %s136
    %s139 = sphi 0, %s138
    %s153 = sphi 0, %s139
    %s157 = sphi 0, %s157
    %s159 = sphi 0, %s157
    %s160 = sphi 0, %s159
    %s174 = sphi 0, %s160
    %s180 = sphi 0, %s182
    %s183 = sphi 0, %s180
    %s184 = sphi 0, %s183
    %s200 = sphi 0, %s184
  $region4: #{layer_block_forward.1} parent=0 // loop_header_branch
    %16 = sbr.rel (%p14) target = $region8
  $region5: #{layer_block_forward.1} parent=0 // loop_body
    %s18 = ssub.s32 %s13, 1
    %s19 = ssub.s32 %s13, 2
    %s20 = sadd.s32 %s13, 1
    %s21 = ssub.s32 %s13, %s20
    %p22 = scmp.eq.s32.totalorder %s21, 0
    %s24 = sadd.s32 %s23, 1
    %s25 = scalar_select %p22, %s23, %s24
    %p28 = pneg %p22
    %p29 = scmp.eq.s32.totalorder %s13, 1
    %p30 = por %p28, %p29
    %p31 = scmp.ne.s32.totalorder %s23, %s26
    %p32 = scmp.eq.s32.totalorder %s13, 0
    %p33 = por %p31, %p32
    %p34 = scmp.ne.s32.totalorder %s23, %s26
    %p35 = scmp.eq.s32.totalorder %s18, 1
    %p36 = por %p34, %p35
    %p37 = scmp.ne.s32.totalorder %s26, %s27
    %p38 = scmp.eq.s32.totalorder %s18, 0
    %p39 = por %p37, %p38
    %p40 = scmp.ne.s32.totalorder %s26, %s27
    %p41 = scmp.eq.s32.totalorder %s19, 1
    %p42 = por %p40, %p41
    %p44 = scmp.ne.s32.totalorder %s27, %s43
    %p45 = scmp.eq.s32.totalorder %s19, 0
    %p46 = por %p44, %p45
    %s47 = ssub.s32 %s13, %s20
    %p48 = scmp.eq.s32.totalorder %s47, 0
    %s50 = sadd.s32 %s49, 1
    %s51 = scalar_select %p48, %s49, %s50
    %p54 = pneg %p48
    %p55 = scmp.eq.s32.totalorder %s13, 1
    %p56 = por %p54, %p55
    %p57 = scmp.ne.s32.totalorder %s49, %s52
    %p58 = scmp.eq.s32.totalorder %s13, 0
    %p59 = por %p57, %p58
    %p60 = scmp.ne.s32.totalorder %s49, %s52
    %p61 = scmp.eq.s32.totalorder %s18, 1
    %p62 = por %p60, %p61
    %p63 = scmp.ne.s32.totalorder %s52, %s53
    %p64 = scmp.eq.s32.totalorder %s18, 0
    %p65 = por %p63, %p64
    %p66 = scmp.ne.s32.totalorder %s52, %s53
    %p67 = scmp.eq.s32.totalorder %s19, 1
    %p68 = por %p66, %p67
    %p70 = scmp.ne.s32.totalorder %s53, %s69
    %p71 = scmp.eq.s32.totalorder %s19, 0
    %p72 = por %p70, %p71
    %s74 = sadd.s32 %s73, 1
    %p77 = scmp.eq.s32.totalorder %s13, 1
    %p78 = scmp.ne.s32.totalorder %s73, %s75
    %p79 = scmp.eq.s32.totalorder %s13, 0
    %p80 = por %p78, %p79
    %p81 = scmp.ne.s32.totalorder %s73, %s75
    %p82 = scmp.eq.s32.totalorder %s18, 1
    %p83 = por %p81, %p82
    %p84 = scmp.ne.s32.totalorder %s75, %s76
    %p85 = scmp.eq.s32.totalorder %s18, 0
    %p86 = por %p84, %p85
    %p87 = scmp.ne.s32.totalorder %s75, %s76
    %p88 = scmp.eq.s32.totalorder %s19, 1
    %p89 = por %p87, %p88
    %p91 = scmp.ne.s32.totalorder %s76, %s90
    %p92 = scmp.eq.s32.totalorder %s19, 0
    %p93 = por %p91, %p92
    %s95 = sadd.s32 %s94, 1
    %p98 = scmp.eq.s32.totalorder %s13, 1
    %p99 = scmp.ne.s32.totalorder %s94, %s96
    %p100 = scmp.eq.s32.totalorder %s13, 0
    %p101 = por %p99, %p100
    %p102 = scmp.ne.s32.totalorder %s94, %s96
    %p103 = scmp.eq.s32.totalorder %s18, 1
    %p104 = por %p102, %p103
    %p105 = scmp.ne.s32.totalorder %s96, %s97
    %p106 = scmp.eq.s32.totalorder %s18, 0
    %p107 = por %p105, %p106
    %p108 = scmp.ne.s32.totalorder %s96, %s97
    %p109 = scmp.eq.s32.totalorder %s19, 1
    %p110 = por %p108, %p109
    %p112 = scmp.ne.s32.totalorder %s97, %s111
    %p113 = scmp.eq.s32.totalorder %s19, 0
    %p114 = por %p112, %p113
    %s116 = sadd.s32 %s115, 1
    %p119 = scmp.eq.s32.totalorder %s13, 1
    %p120 = scmp.ne.s32.totalorder %s115, %s117
    %p121 = scmp.eq.s32.totalorder %s13, 0
    %p122 = por %p120, %p121
    %p123 = scmp.ne.s32.totalorder %s115, %s117
    %p124 = scmp.eq.s32.totalorder %s18, 1
    %p125 = por %p123, %p124
    %p126 = scmp.ne.s32.totalorder %s117, %s118
    %p127 = scmp.eq.s32.totalorder %s18, 0
    %p128 = por %p126, %p127
    %p129 = scmp.ne.s32.totalorder %s117, %s118
    %p130 = scmp.eq.s32.totalorder %s19, 1
    %p131 = por %p129, %p130
    %p133 = scmp.ne.s32.totalorder %s118, %s132
    %p134 = scmp.eq.s32.totalorder %s19, 0
    %p135 = por %p133, %p134
    %s137 = sadd.s32 %s136, 1
    %p140 = scmp.eq.s32.totalorder %s13, 1
    %p141 = scmp.ne.s32.totalorder %s136, %s138
    %p142 = scmp.eq.s32.totalorder %s13, 0
    %p143 = por %p141, %p142
    %p144 = scmp.ne.s32.totalorder %s136, %s138
    %p145 = scmp.eq.s32.totalorder %s18, 1
    %p146 = por %p144, %p145
    %p147 = scmp.ne.s32.totalorder %s138, %s139
    %p148 = scmp.eq.s32.totalorder %s18, 0
    %p149 = por %p147, %p148
    %p150 = scmp.ne.s32.totalorder %s138, %s139
    %p151 = scmp.eq.s32.totalorder %s19, 1
    %p152 = por %p150, %p151
    %p154 = scmp.ne.s32.totalorder %s139, %s153
    %p155 = scmp.eq.s32.totalorder %s19, 0
    %p156 = por %p154, %p155
    %s158 = sadd.s32 %s157, 1
    %p161 = scmp.eq.s32.totalorder %s13, 1
    %p162 = scmp.ne.s32.totalorder %s157, %s159
    %p163 = scmp.eq.s32.totalorder %s13, 0
    %p164 = por %p162, %p163
    %p165 = scmp.ne.s32.totalorder %s157, %s159
    %p166 = scmp.eq.s32.totalorder %s18, 1
    %p167 = por %p165, %p166
    %p168 = scmp.ne.s32.totalorder %s159, %s160
    %p169 = scmp.eq.s32.totalorder %s18, 0
    %p170 = por %p168, %p169
    %p171 = scmp.ne.s32.totalorder %s159, %s160
    %p172 = scmp.eq.s32.totalorder %s19, 1
    %p173 = por %p171, %p172
    %p175 = scmp.ne.s32.totalorder %s160, %s174
    %p176 = scmp.eq.s32.totalorder %s19, 0
    %p177 = por %p175, %p176
    %s178 = ssub.s32 %s13, %s20
    %p179 = scmp.eq.s32.totalorder %s178, 0
    %s181 = sadd.s32 %s180, 1
    %s182 = scalar_select %p179, %s180, %s181
    %p185 = pneg %p179
    %p186 = scmp.eq.s32.totalorder %s13, 1
    %p187 = por %p185, %p186
    %p188 = scmp.ne.s32.totalorder %s180, %s183
    %p189 = scmp.eq.s32.totalorder %s13, 0
    %p190 = por %p188, %p189
    %p191 = scmp.ne.s32.totalorder %s180, %s183
    %p192 = scmp.eq.s32.totalorder %s18, 1
    %p193 = por %p191, %p192
    %p194 = scmp.ne.s32.totalorder %s183, %s184
    %p195 = scmp.eq.s32.totalorder %s18, 0
    %p196 = por %p194, %p195
    %p197 = scmp.ne.s32.totalorder %s183, %s184
    %p198 = scmp.eq.s32.totalorder %s19, 1
    %p199 = por %p197, %p198
    %p201 = scmp.ne.s32.totalorder %s184, %s200
    %p202 = scmp.eq.s32.totalorder %s19, 0
    %p203 = por %p201, %p202
    %p204 = scmp.le.s32.totalorder 1, %s13
    %p205 = scmp.lt.s32.totalorder %s13, 3
    %p206 = pnand %p204, %p205
    %p207 = pneg %p206
    // Predicated region
    $region9: #{layer_block_forward.1} parent=5 // pred_check
      _
    $region10: #{layer_block_forward.1} parent=5 // pred_check_branch
      %209 = sbr.rel (%p206) target = $region12
    $region11: #{layer_block_forward.1} parent=5 // pred_region
      %s210 = ssub.s32 %s13, 1
      // Predicated region
      $region13: #{layer_block_forward.1} parent=11 // pred_check
        %p211 = pneg %p86
      $region14: #{layer_block_forward.1} parent=11 // pred_check_branch
        %213 = sbr.rel (%p211) target = $region16
      $region15: #{layer_block_forward.1} parent=11 // pred_region
        _
      $region16: #{layer_block_forward.1} parent=11 // pred_fallthru
        _
      // Predicated region
      $region17: #{layer_block_forward.1} parent=11 // pred_check
        %p214 = pneg %p107
      $region18: #{layer_block_forward.1} parent=11 // pred_check_branch
        %216 = sbr.rel (%p214) target = $region20
      $region19: #{layer_block_forward.1} parent=11 // pred_region
        _
      $region20: #{layer_block_forward.1} parent=11 // pred_fallthru
        _
      // Predicated region
      $region21: #{layer_block_forward.1} parent=11 // pred_check
        %p217 = pneg %p128
      $region22: #{layer_block_forward.1} parent=11 // pred_check_branch
        %219 = sbr.rel (%p217) target = $region24
      $region23: #{layer_block_forward.1} parent=11 // pred_region
        _
      $region24: #{layer_block_forward.1} parent=11 // pred_fallthru
        _
      // Predicated region
      $region25: #{layer_block_forward.1} parent=11 // pred_check
        %p220 = pneg %p149
      $region26: #{layer_block_forward.1} parent=11 // pred_check_branch
        %222 = sbr.rel (%p220) target = $region28
      $region27: #{layer_block_forward.1} parent=11 // pred_region
        _
      $region28: #{layer_block_forward.1} parent=11 // pred_fallthru
        _
      // Predicated region
      $region29: #{layer_block_forward.1} parent=11 // pred_check
        %p223 = pneg %p170
      $region30: #{layer_block_forward.1} parent=11 // pred_check_branch
        %225 = sbr.rel (%p223) target = $region32
      $region31: #{layer_block_forward.1} parent=11 // pred_region
        _
      $region32: #{layer_block_forward.1} parent=11 // pred_fallthru
        _
    $region12: #{layer_block_forward.1} parent=5 // pred_fallthru
      _
    %p226 = scmp.lt.s32.totalorder %s13, 2
    // Predicated region
    $region33: #{layer_block_forward.1} parent=5 // pred_check
      %p227 = pneg %p226
    $region34: #{layer_block_forward.1} parent=5 // pred_check_branch
      %229 = sbr.rel (%p227) target = $region36
    $region35: #{layer_block_forward.1} parent=5 // pred_region
      // Predicated region
      $region37: #{layer_block_forward.1} parent=35 // pred_check
        %p230 = pneg %p33
      $region38: #{layer_block_forward.1} parent=35 // pred_check_branch
        %232 = sbr.rel (%p230) target = $region40
      $region39: #{layer_block_forward.1} parent=35 // pred_region
        %p233 = scmp.lt.s32.totalorder %s13, 1
        %s234 = scalar_select %p233, %s13, 1
        %s235 = smul.addr %s234, 4
        %s236 = scalar_lea.vmem %s0, %s235
      $region40: #{layer_block_forward.1} parent=35 // pred_fallthru
        _
      // Predicated region
      $region41: #{layer_block_forward.1} parent=35 // pred_check
        %p237 = pneg %p59
      $region42: #{layer_block_forward.1} parent=35 // pred_check_branch
        %239 = sbr.rel (%p237) target = $region44
      $region43: #{layer_block_forward.1} parent=35 // pred_region
        %p240 = scmp.lt.s32.totalorder %s13, 1
        %s241 = scalar_select %p240, %s13, 1
        %s242 = smul.addr %s241, 4
        %s243 = scalar_lea.vmem %s1, %s242
      $region44: #{layer_block_forward.1} parent=35 // pred_fallthru
        _
    $region36: #{layer_block_forward.1} parent=5 // pred_fallthru
      _
    %p244 = scmp.le.s32.totalorder 1, %s13
    %p245 = scmp.lt.s32.totalorder %s13, 3
    %p246 = pnand %p244, %p245
    %p247 = pneg %p246
    // Predicated region
    $region45: #{layer_block_forward.1} parent=5 // pred_check
      _
    $region46: #{layer_block_forward.1} parent=5 // pred_check_branch
      %249 = sbr.rel (%p246) target = $region48
    $region47: #{layer_block_forward.1} parent=5 // pred_region
      %s250 = ssub.s32 %s13, 1
      %p251 = scmp.lt.s32.totalorder %s18, 1
      %s252 = scalar_select %p251, %s18, 1
      %s253 = smul.addr %s252, 4
      %s254 = scalar_lea.vmem %s0, %s253
      %p255 = pneg %p39
      %p256 = pneg %p36
      %p257 = scmp.lt.s32.totalorder %s18, 1
      %s258 = scalar_select %p257, %s18, 1
      %s259 = smul.addr %s258, 4
      %s260 = scalar_lea.vmem %s1, %s259
      %p261 = pneg %p65
      %p262 = pneg %p62
      %p263 = pneg %p86
      %p264 = pneg %p83
      %p265 = pneg %p107
      %p266 = pneg %p104
      %p267 = pneg %p128
      %p268 = pneg %p125
      %p269 = pneg %p149
      %p270 = pneg %p146
      %p271 = pneg %p170
      %p272 = pneg %p167
      %p273 = pneg %p196
      %p274 = pneg %p193
      %p275 = scmp.lt.s32.totalorder %s18, 1
      %s276 = scalar_select %p275, %s18, 1
      %s277 = smul.addr %s276, 2
      %s278 = smul.addr %s277, 8
      %s279 = scalar_lea.vmem %s7, %s278
      %p280 = scmp.lt.s32.totalorder %s18, 1
      %s281 = scalar_select %p280, %s18, 1
      %s282 = smul.addr %s281, 4
      %s283 = scalar_lea.vmem %s0, %s282
      %p284 = scmp.lt.s32.totalorder %s18, 1
      %s285 = scalar_select %p284, %s18, 1
      %s286 = smul.addr %s285, 4
      %s287 = scalar_lea.vmem %s1, %s286
      %p288 = scmp.lt.s32.totalorder %s18, 1
      %s289 = scalar_select %p288, %s18, 1
      %s290 = smul.addr %s289, 2
      %s291 = smul.addr %s290, 8
      %s292 = scalar_lea.vmem %s7, %s291
      %v294 = vld [vmem:[%s2] sm:$0xf]
      %s295 = scalar_lea.vmem %s2, 4
      %v296 = vld [vmem:[%s295] sm:$0xf]
      %v297 = vld [vmem:[%s283] sm:$0xf]
      %v298 = vld [vmem:[%s287] sm:$0xf]
      %vm299 = vcmask 64512
      %v301 = vsel %vm299, %v294, 0
      %vm303 = vcmask 1043456
      %v305 = vsel %vm303, %v298, 0
      %307 = vmatprep.subr.bf16.mxu0 0
      %308 = vmatpush1.bf16.msra.mxu0 0
      %309 = vmatprep.subr.bf16.mxu0 0
      %310 = vmatpush1.bf16.msra.mxu0 0
      %311 = vmatprep.subr.bf16.mxu0 0
      %312 = vmatpush1.bf16.msra.mxu0 0
      %313 = vmatprep.subr.bf16.mxu0 0
      %314 = vmatpush1.bf16.msra.mxu0 0
      %315 = vmatprep.subr.bf16.mxu0 0
      %316 = vmatpush1.bf16.msra.mxu0 0
      %317 = vmatprep.subr.bf16.mxu0 0
      %318 = vmatpush1.bf16.msra.mxu0 0
      %319 = vmatprep.subr.bf16.mxu0 0
      %320 = vmatpush1.bf16.msra.mxu0 0
      %321 = vmatprep.subr.bf16.mxu0 0
      %322 = vmatpush1.bf16.msra.mxu0 %v305
      %323 = vmatprep.subr.bf16.mxu0 0
      %324 = vmatpush2.bf16.msra.mxu0 0
      %325 = vmatprep.subr.bf16.mxu0 0
      %326 = vmatpush2.bf16.msra.mxu0 0
      %327 = vmatprep.subr.bf16.mxu0 0
      %328 = vmatpush2.bf16.msra.mxu0 0
      %329 = vmatprep.subr.bf16.mxu0 0
      %330 = vmatpush2.bf16.msra.mxu0 0
      %331 = vmatprep.subr.bf16.mxu0 0
      %332 = vmatpush2.bf16.msra.mxu0 0
      %333 = vmatprep.subr.bf16.mxu0 0
      %334 = vmatpush2.bf16.msra.mxu0 0
      %335 = vmatprep.subr.bf16.mxu0 0
      %336 = vmatpush2.bf16.msra.mxu0 0
      %337 = vmatprep.subr.bf16.mxu0 0
      %338 = vmatpush2.bf16.msra.mxu0 0
      %339 = vmatprep.mubr.bf16.mxu0 0
      %340 = vmatmul.mubr.bf16.gmra.mxu0 %v301
      %v341 = vpop.f32.mrf.mxu0
      %v342 = vadd.f32 0.0, %v341
      %v343 = vpop.f32.mrf.mxu0
      %v344 = vpop.f32.mrf.mxu0
      %v345 = vpop.f32.mrf.mxu0
      %346 = vdwg.mxu0
      %v347 = vpack.c.bf16 %v342, %v342
      %v348 = vld [vmem:[%s3] sm:$0xff]
      %v349 = vld [vmem:[%s3 + $0x8] sm:$0xff]
      %v350 = vld [vmem:[%s3 + $0x10] sm:$0xff]
      %v351 = vld [vmem:[%s3 + $0x18] sm:$0xff]
      %v352 = vld [vmem:[%s3 + $0x20] sm:$0xff]
      %v353 = vld [vmem:[%s3 + $0x28] sm:$0xff]
      %v354 = vld [vmem:[%s3 + $0x30] sm:$0xff]
      %v355 = vld [vmem:[%s3 + $0x38] sm:$0xff]
      %v356 = vld [vmem:[%s3 + $0x40] sm:$0xff]
      %v357 = vld [vmem:[%s3 + $0x48] sm:$0xff]
      %v358 = vld [vmem:[%s3 + $0x50] sm:$0xff]
      %v359 = vld [vmem:[%s3 + $0x58] sm:$0xff]
      %v360 = vld [vmem:[%s3 + $0x60] sm:$0xff]
      %v361 = vld [vmem:[%s3 + $0x68] sm:$0xff]
      %v362 = vld [vmem:[%s3 + $0x70] sm:$0xff]
      %v363 = vld [vmem:[%s3 + $0x78] sm:$0xff]
      %v364 = vld [vmem:[%s3 + $0x80] sm:$0xff]
      %v365 = vld [vmem:[%s3 + $0x88] sm:$0xff]
      %v366 = vld [vmem:[%s3 + $0x90] sm:$0xff]
      %v367 = vld [vmem:[%s3 + $0x98] sm:$0xff]
      %v368 = vld [vmem:[%s3 + $0xa0] sm:$0xff]
      %v369 = vld [vmem:[%s3 + $0xa8] sm:$0xff]
      %v370 = vld [vmem:[%s3 + $0xb0] sm:$0xff]
      %v371 = vld [vmem:[%s3 + $0xb8] sm:$0xff]
      %v372 = vld [vmem:[%s3 + $0xc0] sm:$0xff]
      %v373 = vld [vmem:[%s3 + $0xc8] sm:$0xff]
      %v374 = vld [vmem:[%s3 + $0xd0] sm:$0xff]
      %v375 = vld [vmem:[%s3 + $0xd8] sm:$0xff]
      %v376 = vld [vmem:[%s3 + $0xe0] sm:$0xff]
      %v377 = vld [vmem:[%s3 + $0xe8] sm:$0xff]
      %v378 = vld [vmem:[%s3 + $0xf0] sm:$0xff]
      %v379 = vld [vmem:[%s3 + $0xf8] sm:$0xff]
      %s380 = scalar_lea.vmem %s3, 256
      %v381 = vld [vmem:[%s380] sm:$0xff]
      %v382 = vld [vmem:[%s380 + $0x8] sm:$0xff]
      %v383 = vld [vmem:[%s380 + $0x10] sm:$0xff]
      %v384 = vld [vmem:[%s380 + $0x18] sm:$0xff]
      %v385 = vld [vmem:[%s380 + $0x20] sm:$0xff]
      %v386 = vld [vmem:[%s380 + $0x28] sm:$0xff]
      %v387 = vld [vmem:[%s380 + $0x30] sm:$0xff]
      %v388 = vld [vmem:[%s380 + $0x38] sm:$0xff]
      %v389 = vld [vmem:[%s380 + $0x40] sm:$0xff]
      %v390 = vld [vmem:[%s380 + $0x48] sm:$0xff]
      %v391 = vld [vmem:[%s380 + $0x50] sm:$0xff]
      %v392 = vld [vmem:[%s380 + $0x58] sm:$0xff]
      %v393 = vld [vmem:[%s380 + $0x60] sm:$0xff]
      %v394 = vld [vmem:[%s380 + $0x68] sm:$0xff]
      %v395 = vld [vmem:[%s380 + $0x70] sm:$0xff]
      %v396 = vld [vmem:[%s380 + $0x78] sm:$0xff]
      %v397 = vld [vmem:[%s380 + $0x80] sm:$0xff]
      %v398 = vld [vmem:[%s380 + $0x88] sm:$0xff]
      %v399 = vld [vmem:[%s380 + $0x90] sm:$0xff]
      %v400 = vld [vmem:[%s380 + $0x98] sm:$0xff]
      %v401 = vld [vmem:[%s380 + $0xa0] sm:$0xff]
      %v402 = vld [vmem:[%s380 + $0xa8] sm:$0xff]
      %v403 = vld [vmem:[%s380 + $0xb0] sm:$0xff]
      %v404 = vld [vmem:[%s380 + $0xb8] sm:$0xff]
      %v405 = vld [vmem:[%s380 + $0xc0] sm:$0xff]
      %v406 = vld [vmem:[%s380 + $0xc8] sm:$0xff]
      %v407 = vld [vmem:[%s380 + $0xd0] sm:$0xff]
      %v408 = vld [vmem:[%s380 + $0xd8] sm:$0xff]
      %v409 = vld [vmem:[%s380 + $0xe0] sm:$0xff]
      %v410 = vld [vmem:[%s380 + $0xe8] sm:$0xff]
      %v411 = vld [vmem:[%s380 + $0xf0] sm:$0xff]
      %v412 = vld [vmem:[%s380 + $0xf8] sm:$0xff]
      %v445 = vunpack.c.l.b16 %v381
      %v446 = vunpack.c.h.b16 %v381
      %v447 = vunpack.c.l.b16 %v382
      %v448 = vunpack.c.h.b16 %v382
      %v449 = vunpack.c.l.b16 %v383
      %v450 = vunpack.c.h.b16 %v383
      %v451 = vunpack.c.l.b16 %v384
      %v452 = vunpack.c.h.b16 %v384
      %v453 = vunpack.c.l.b16 %v385
      %v454 = vunpack.c.h.b16 %v385
      %v455 = vunpack.c.l.b16 %v386
      %v456 = vunpack.c.h.b16 %v386
      %v457 = vunpack.c.l.b16 %v387
      %v458 = vunpack.c.h.b16 %v387
      %v459 = vunpack.c.l.b16 %v388
      %v460 = vunpack.c.h.b16 %v388
      %v461 = vunpack.c.l.b16 %v389
      %v462 = vunpack.c.h.b16 %v389
      %v463 = vunpack.c.l.b16 %v390
      %v464 = vunpack.c.h.b16 %v390
      %v465 = vunpack.c.l.b16 %v391
      %v466 = vunpack.c.h.b16 %v391
      %v467 = vunpack.c.l.b16 %v392
      %v468 = vunpack.c.h.b16 %v392
      %v469 = vunpack.c.l.b16 %v393
      %v470 = vunpack.c.h.b16 %v393
      %v471 = vunpack.c.l.b16 %v394
      %v472 = vunpack.c.h.b16 %v394
      %v473 = vunpack.c.l.b16 %v395
      %v474 = vunpack.c.h.b16 %v395
      %v475 = vunpack.c.l.b16 %v396
      %v476 = vunpack.c.h.b16 %v396
      %v477 = vunpack.c.l.b16 %v397
      %v478 = vunpack.c.h.b16 %v397
      %v479 = vunpack.c.l.b16 %v398
      %v480 = vunpack.c.h.b16 %v398
      %v481 = vunpack.c.l.b16 %v399
      %v482 = vunpack.c.h.b16 %v399
      %v483 = vunpack.c.l.b16 %v400
      %v484 = vunpack.c.h.b16 %v400
      %v485 = vunpack.c.l.b16 %v401
      %v486 = vunpack.c.h.b16 %v401
      %v487 = vunpack.c.l.b16 %v402
      %v488 = vunpack.c.h.b16 %v402
      %v489 = vunpack.c.l.b16 %v403
      %v490 = vunpack.c.h.b16 %v403
      %v491 = vunpack.c.l.b16 %v404
      %v492 = vunpack.c.h.b16 %v404
      %v493 = vunpack.c.l.b16 %v405
      %v494 = vunpack.c.h.b16 %v405
      %v495 = vunpack.c.l.b16 %v406
      %v496 = vunpack.c.h.b16 %v406
      %v497 = vunpack.c.l.b16 %v407
      %v498 = vunpack.c.h.b16 %v407
      %v499 = vunpack.c.l.b16 %v408
      %v500 = vunpack.c.h.b16 %v408
      %v501 = vunpack.c.l.b16 %v409
      %v502 = vunpack.c.h.b16 %v409
      %v503 = vunpack.c.l.b16 %v410
      %v504 = vunpack.c.h.b16 %v410
      %v505 = vunpack.c.l.b16 %v411
      %v506 = vunpack.c.h.b16 %v411
      %v507 = vunpack.c.l.b16 %v412
      %v508 = vunpack.c.h.b16 %v412
      %v509 = vpack.c.b16 %v453, %v445
      %v510 = vpack.c.b16 %v454, %v446
      %v511 = vpack.c.b16 %v455, %v447
      %v512 = vpack.c.b16 %v456, %v448
      %v513 = vpack.c.b16 %v457, %v449
      %v514 = vpack.c.b16 %v458, %v450
      %v515 = vpack.c.b16 %v459, %v451
      %v516 = vpack.c.b16 %v460, %v452
      %v517 = vpack.c.b16 %v469, %v461
      %v518 = vpack.c.b16 %v470, %v462
      %v519 = vpack.c.b16 %v471, %v463
      %v520 = vpack.c.b16 %v472, %v464
      %v521 = vpack.c.b16 %v473, %v465
      %v522 = vpack.c.b16 %v474, %v466
      %v523 = vpack.c.b16 %v475, %v467
      %v524 = vpack.c.b16 %v476, %v468
      %v525 = vpack.c.b16 %v485, %v477
      %v526 = vpack.c.b16 %v486, %v478
      %v527 = vpack.c.b16 %v487, %v479
      %v528 = vpack.c.b16 %v488, %v480
      %v529 = vpack.c.b16 %v489, %v481
      %v530 = vpack.c.b16 %v490, %v482
      %v531 = vpack.c.b16 %v491, %v483
      %v532 = vpack.c.b16 %v492, %v484
      %v533 = vpack.c.b16 %v501, %v493
      %v534 = vpack.c.b16 %v502, %v494
      %v535 = vpack.c.b16 %v503, %v495
      %v536 = vpack.c.b16 %v504, %v496
      %v537 = vpack.c.b16 %v505, %v497
      %v538 = vpack.c.b16 %v506, %v498
      %v539 = vpack.c.b16 %v507, %v499
      %v540 = vpack.c.b16 %v508, %v500
      %vm573 = vcmask 523264
      %v575 = vsel %vm573, %v297, 0
      %577 = vmatprep.subr.bf16.mxu0 0
      %578 = vmatpush1.bf16.msra.mxu0 0
      %579 = vmatprep.subr.bf16.mxu0 0
      %580 = vmatpush1.bf16.msra.mxu0 0
      %581 = vmatprep.subr.bf16.mxu0 0
      %582 = vmatpush1.bf16.msra.mxu0 0
      %583 = vmatprep.subr.bf16.mxu0 0
      %584 = vmatpush1.bf16.msra.mxu0 0
      %585 = vmatprep.subr.bf16.mxu0 %v534
      %586 = vmatpush1.bf16.msra.mxu0 %v533
      %587 = vmatprep.subr.bf16.mxu0 %v526
      %588 = vmatpush1.bf16.msra.mxu0 %v525
      %589 = vmatprep.subr.bf16.mxu0 %v518
      %590 = vmatpush1.bf16.msra.mxu0 %v517
      %591 = vmatprep.subr.bf16.mxu0 %v510
      %592 = vmatpush1.bf16.msra.mxu0 %v509
      %593 = vmatprep.subr.bf16.mxu0 0
      %594 = vmatpush2.bf16.msra.mxu0 0
      %595 = vmatprep.subr.bf16.mxu0 0
      %596 = vmatpush2.bf16.msra.mxu0 0
      %597 = vmatprep.subr.bf16.mxu0 0
      %598 = vmatpush2.bf16.msra.mxu0 0
      %599 = vmatprep.subr.bf16.mxu0 0
      %600 = vmatpush2.bf16.msra.mxu0 0
      %601 = vmatprep.subr.bf16.mxu0 0
      %602 = vmatpush2.bf16.msra.mxu0 0
      %603 = vmatprep.subr.bf16.mxu0 0
      %604 = vmatpush2.bf16.msra.mxu0 0
      %605 = vmatprep.subr.bf16.mxu0 0
      %606 = vmatpush2.bf16.msra.mxu0 0
      %607 = vmatprep.subr.bf16.mxu0 0
      %608 = vmatpush2.bf16.msra.mxu0 0
      %609 = vmatprep.mubr.bf16.mxu0 0
      %610 = vmatmul.mubr.bf16.gmra.mxu0 %v575
      %v611 = vpop.f32.mrf.mxu0
      %v612 = vadd.f32 0.0, %v611
      %v613 = vpop.f32.mrf.mxu0
      %v614 = vadd.f32 0.0, %v613
      %v615 = vpop.f32.mrf.mxu0
      %v616 = vpop.f32.mrf.mxu0
      %617 = vdwg.mxu0
      %618 = vmatprep.subr.bf16.mxu0 0
      %619 = vmatpush1.bf16.msra.mxu0 0
      %620 = vmatprep.subr.bf16.mxu0 0
      %621 = vmatpush1.bf16.msra.mxu0 0
      %622 = vmatprep.subr.bf16.mxu0 0
      %623 = vmatpush1.bf16.msra.mxu0 0
      %624 = vmatprep.subr.bf16.mxu0 0
      %625 = vmatpush1.bf16.msra.mxu0 0
      %626 = vmatprep.subr.bf16.mxu0 %v536
      %627 = vmatpush1.bf16.msra.mxu0 %v535
      %628 = vmatprep.subr.bf16.mxu0 %v528
      %629 = vmatpush1.bf16.msra.mxu0 %v527
      %630 = vmatprep.subr.bf16.mxu0 %v520
      %631 = vmatpush1.bf16.msra.mxu0 %v519
      %632 = vmatprep.subr.bf16.mxu0 %v512
      %633 = vmatpush1.bf16.msra.mxu0 %v511
      %634 = vmatprep.subr.bf16.mxu0 0
      %635 = vmatpush2.bf16.msra.mxu0 0
      %636 = vmatprep.subr.bf16.mxu0 0
      %637 = vmatpush2.bf16.msra.mxu0 0
      %638 = vmatprep.subr.bf16.mxu0 0
      %639 = vmatpush2.bf16.msra.mxu0 0
      %640 = vmatprep.subr.bf16.mxu0 0
      %641 = vmatpush2.bf16.msra.mxu0 0
      %642 = vmatprep.subr.bf16.mxu0 0
      %643 = vmatpush2.bf16.msra.mxu0 0
      %644 = vmatprep.subr.bf16.mxu0 0
      %645 = vmatpush2.bf16.msra.mxu0 0
      %646 = vmatprep.subr.bf16.mxu0 0
      %647 = vmatpush2.bf16.msra.mxu0 0
      %648 = vmatprep.subr.bf16.mxu0 0
      %649 = vmatpush2.bf16.msra.mxu0 0
      %650 = vmatprep.mubr.bf16.mxu0 0
      %651 = vmatmul.mubr.bf16.gmra.mxu0 %v575
      %v652 = vpop.f32.mrf.mxu0
      %v653 = vadd.f32 0.0, %v652
      %v654 = vpop.f32.mrf.mxu0
      %v655 = vadd.f32 0.0, %v654
      %v656 = vpop.f32.mrf.mxu0
      %v657 = vpop.f32.mrf.mxu0
      %658 = vdwg.mxu0
      %659 = vmatprep.subr.bf16.mxu0 0
      %660 = vmatpush1.bf16.msra.mxu0 0
      %661 = vmatprep.subr.bf16.mxu0 0
      %662 = vmatpush1.bf16.msra.mxu0 0
      %663 = vmatprep.subr.bf16.mxu0 0
      %664 = vmatpush1.bf16.msra.mxu0 0
      %665 = vmatprep.subr.bf16.mxu0 0
      %666 = vmatpush1.bf16.msra.mxu0 0
      %667 = vmatprep.subr.bf16.mxu0 %v538
      %668 = vmatpush1.bf16.msra.mxu0 %v537
      %669 = vmatprep.subr.bf16.mxu0 %v530
      %670 = vmatpush1.bf16.msra.mxu0 %v529
      %671 = vmatprep.subr.bf16.mxu0 %v522
      %672 = vmatpush1.bf16.msra.mxu0 %v521
      %673 = vmatprep.subr.bf16.mxu0 %v514
      %674 = vmatpush1.bf16.msra.mxu0 %v513
      %675 = vmatprep.subr.bf16.mxu0 0
      %676 = vmatpush2.bf16.msra.mxu0 0
      %677 = vmatprep.subr.bf16.mxu0 0
      %678 = vmatpush2.bf16.msra.mxu0 0
      %679 = vmatprep.subr.bf16.mxu0 0
      %680 = vmatpush2.bf16.msra.mxu0 0
      %681 = vmatprep.subr.bf16.mxu0 0
      %682 = vmatpush2.bf16.msra.mxu0 0
      %683 = vmatprep.subr.bf16.mxu0 0
      %684 = vmatpush2.bf16.msra.mxu0 0
      %685 = vmatprep.subr.bf16.mxu0 0
      %686 = vmatpush2.bf16.msra.mxu0 0
      %687 = vmatprep.subr.bf16.mxu0 0
      %688 = vmatpush2.bf16.msra.mxu0 0
      %689 = vmatprep.subr.bf16.mxu0 0
      %690 = vmatpush2.bf16.msra.mxu0 0
      %691 = vmatprep.mubr.bf16.mxu0 0
      %692 = vmatmul.mubr.bf16.gmra.mxu0 %v575
      %v693 = vpop.f32.mrf.mxu0
      %v694 = vadd.f32 0.0, %v693
      %v695 = vpop.f32.mrf.mxu0
      %v696 = vadd.f32 0.0, %v695
      %v697 = vpop.f32.mrf.mxu0
      %v698 = vpop.f32.mrf.mxu0
      %699 = vdwg.mxu0
      %700 = vmatprep.subr.bf16.mxu0 0
      %701 = vmatpush1.bf16.msra.mxu0 0
      %702 = vmatprep.subr.bf16.mxu0 0
      %703 = vmatpush1.bf16.msra.mxu0 0
      %704 = vmatprep.subr.bf16.mxu0 0
      %705 = vmatpush1.bf16.msra.mxu0 0
      %706 = vmatprep.subr.bf16.mxu0 0
      %707 = vmatpush1.bf16.msra.mxu0 0
      %708 = vmatprep.subr.bf16.mxu0 %v540
      %709 = vmatpush1.bf16.msra.mxu0 %v539
      %710 = vmatprep.subr.bf16.mxu0 %v532
      %711 = vmatpush1.bf16.msra.mxu0 %v531
      %712 = vmatprep.subr.bf16.mxu0 %v524
      %713 = vmatpush1.bf16.msra.mxu0 %v523
      %714 = vmatprep.subr.bf16.mxu0 %v516
      %715 = vmatpush1.bf16.msra.mxu0 %v515
      %716 = vmatprep.subr.bf16.mxu0 0
      %717 = vmatpush2.bf16.msra.mxu0 0
      %718 = vmatprep.subr.bf16.mxu0 0
      %719 = vmatpush2.bf16.msra.mxu0 0
      %720 = vmatprep.subr.bf16.mxu0 0
      %721 = vmatpush2.bf16.msra.mxu0 0
      %722 = vmatprep.subr.bf16.mxu0 0
      %723 = vmatpush2.bf16.msra.mxu0 0
      %724 = vmatprep.subr.bf16.mxu0 0
      %725 = vmatpush2.bf16.msra.mxu0 0
      %726 = vmatprep.subr.bf16.mxu0 0
      %727 = vmatpush2.bf16.msra.mxu0 0
      %728 = vmatprep.subr.bf16.mxu0 0
      %729 = vmatpush2.bf16.msra.mxu0 0
      %730 = vmatprep.subr.bf16.mxu0 0
      %731 = vmatpush2.bf16.msra.mxu0 0
      %732 = vmatprep.mubr.bf16.mxu0 0
      %733 = vmatmul.mubr.bf16.gmra.mxu0 %v575
      %v734 = vpop.f32.mrf.mxu0
      %v735 = vadd.f32 0.0, %v734
      %v736 = vpop.f32.mrf.mxu0
      %v737 = vadd.f32 0.0, %v736
      %v738 = vpop.f32.mrf.mxu0
      %v739 = vpop.f32.mrf.mxu0
      %740 = vdwg.mxu0
      %v773 = vunpack.c.l.b16 %v348
      %v774 = vunpack.c.h.b16 %v348
      %v775 = vunpack.c.l.b16 %v349
      %v776 = vunpack.c.h.b16 %v349
      %v777 = vunpack.c.l.b16 %v350
      %v778 = vunpack.c.h.b16 %v350
      %v779 = vunpack.c.l.b16 %v351
      %v780 = vunpack.c.h.b16 %v351
      %v781 = vunpack.c.l.b16 %v352
      %v782 = vunpack.c.h.b16 %v352
      %v783 = vunpack.c.l.b16 %v353
      %v784 = vunpack.c.h.b16 %v353
      %v785 = vunpack.c.l.b16 %v354
      %v786 = vunpack.c.h.b16 %v354
      %v787 = vunpack.c.l.b16 %v355
      %v788 = vunpack.c.h.b16 %v355
      %v789 = vunpack.c.l.b16 %v356
      %v790 = vunpack.c.h.b16 %v356
      %v791 = vunpack.c.l.b16 %v357
      %v792 = vunpack.c.h.b16 %v357
      %v793 = vunpack.c.l.b16 %v358
      %v794 = vunpack.c.h.b16 %v358
      %v795 = vunpack.c.l.b16 %v359
      %v796 = vunpack.c.h.b16 %v359
      %v797 = vunpack.c.l.b16 %v360
      %v798 = vunpack.c.h.b16 %v360
      %v799 = vunpack.c.l.b16 %v361
      %v800 = vunpack.c.h.b16 %v361
      %v801 = vunpack.c.l.b16 %v362
      %v802 = vunpack.c.h.b16 %v362
      %v803 = vunpack.c.l.b16 %v363
      %v804 = vunpack.c.h.b16 %v363
      %v805 = vunpack.c.l.b16 %v364
      %v806 = vunpack.c.h.b16 %v364
      %v807 = vunpack.c.l.b16 %v365
      %v808 = vunpack.c.h.b16 %v365
      %v809 = vunpack.c.l.b16 %v366
      %v810 = vunpack.c.h.b16 %v366
      %v811 = vunpack.c.l.b16 %v367
      %v812 = vunpack.c.h.b16 %v367
      %v813 = vunpack.c.l.b16 %v368
      %v814 = vunpack.c.h.b16 %v368
      %v815 = vunpack.c.l.b16 %v369
      %v816 = vunpack.c.h.b16 %v369
      %v817 = vunpack.c.l.b16 %v370
      %v818 = vunpack.c.h.b16 %v370
      %v819 = vunpack.c.l.b16 %v371
      %v820 = vunpack.c.h.b16 %v371
      %v821 = vunpack.c.l.b16 %v372
      %v822 = vunpack.c.h.b16 %v372
      %v823 = vunpack.c.l.b16 %v373
      %v824 = vunpack.c.h.b16 %v373
      %v825 = vunpack.c.l.b16 %v374
      %v826 = vunpack.c.h.b16 %v374
      %v827 = vunpack.c.l.b16 %v375
      %v828 = vunpack.c.h.b16 %v375
      %v829 = vunpack.c.l.b16 %v376
      %v830 = vunpack.c.h.b16 %v376
      %v831 = vunpack.c.l.b16 %v377
      %v832 = vunpack.c.h.b16 %v377
      %v833 = vunpack.c.l.b16 %v378
      %v834 = vunpack.c.h.b16 %v378
      %v835 = vunpack.c.l.b16 %v379
      %v836 = vunpack.c.h.b16 %v379
      %v837 = vpack.c.b16 %v781, %v773
      %v838 = vpack.c.b16 %v782, %v774
      %v839 = vpack.c.b16 %v783, %v775
      %v840 = vpack.c.b16 %v784, %v776
      %v841 = vpack.c.b16 %v785, %v777
      %v842 = vpack.c.b16 %v786, %v778
      %v843 = vpack.c.b16 %v787, %v779
      %v844 = vpack.c.b16 %v788, %v780
      %v845 = vpack.c.b16 %v797, %v789
      %v846 = vpack.c.b16 %v798, %v790
      %v847 = vpack.c.b16 %v799, %v791
      %v848 = vpack.c.b16 %v800, %v792
      %v849 = vpack.c.b16 %v801, %v793
      %v850 = vpack.c.b16 %v802, %v794
      %v851 = vpack.c.b16 %v803, %v795
      %v852 = vpack.c.b16 %v804, %v796
      %v853 = vpack.c.b16 %v813, %v805
      %v854 = vpack.c.b16 %v814, %v806
      %v855 = vpack.c.b16 %v815, %v807
      %v856 = vpack.c.b16 %v816, %v808
      %v857 = vpack.c.b16 %v817, %v809
      %v858 = vpack.c.b16 %v818, %v810
      %v859 = vpack.c.b16 %v819, %v811
      %v860 = vpack.c.b16 %v820, %v812
      %v861 = vpack.c.b16 %v829, %v821
      %v862 = vpack.c.b16 %v830, %v822
      %v863 = vpack.c.b16 %v831, %v823
      %v864 = vpack.c.b16 %v832, %v824
      %v865 = vpack.c.b16 %v833, %v825
      %v866 = vpack.c.b16 %v834, %v826
      %v867 = vpack.c.b16 %v835, %v827
      %v868 = vpack.c.b16 %v836, %v828
      %v902 = vsel %vm573, %v347, 0
      %904 = vmatprep.subr.bf16.mxu0 0
      %905 = vmatpush1.bf16.msra.mxu0 0
      %906 = vmatprep.subr.bf16.mxu0 0
      %907 = vmatpush1.bf16.msra.mxu0 0
      %908 = vmatprep.subr.bf16.mxu0 0
      %909 = vmatpush1.bf16.msra.mxu0 0
      %910 = vmatprep.subr.bf16.mxu0 0
      %911 = vmatpush1.bf16.msra.mxu0 0
      %912 = vmatprep.subr.bf16.mxu0 %v862
      %913 = vmatpush1.bf16.msra.mxu0 %v861
      %914 = vmatprep.subr.bf16.mxu0 %v854
      %915 = vmatpush1.bf16.msra.mxu0 %v853
      %916 = vmatprep.subr.bf16.mxu0 %v846
      %917 = vmatpush1.bf16.msra.mxu0 %v845
      %918 = vmatprep.subr.bf16.mxu0 %v838
      %919 = vmatpush1.bf16.msra.mxu0 %v837
      %920 = vmatprep.subr.bf16.mxu0 0
      %921 = vmatpush2.bf16.msra.mxu0 0
      %922 = vmatprep.subr.bf16.mxu0 0
      %923 = vmatpush2.bf16.msra.mxu0 0
      %924 = vmatprep.subr.bf16.mxu0 0
      %925 = vmatpush2.bf16.msra.mxu0 0
      %926 = vmatprep.subr.bf16.mxu0 0
      %927 = vmatpush2.bf16.msra.mxu0 0
      %928 = vmatprep.subr.bf16.mxu0 0
      %929 = vmatpush2.bf16.msra.mxu0 0
      %930 = vmatprep.subr.bf16.mxu0 0
      %931 = vmatpush2.bf16.msra.mxu0 0
      %932 = vmatprep.subr.bf16.mxu0 0
      %933 = vmatpush2.bf16.msra.mxu0 0
      %934 = vmatprep.subr.bf16.mxu0 0
      %935 = vmatpush2.bf16.msra.mxu0 0
      %936 = vmatprep.mubr.bf16.mxu0 0
      %937 = vmatmul.mubr.bf16.gmra.mxu0 %v902
      %v938 = vpop.f32.mrf.mxu0
      %v939 = vadd.f32 %v612, %v938
      %v940 = vpop.f32.mrf.mxu0
      %v941 = vadd.f32 %v614, %v940
      %v942 = vpop.f32.mrf.mxu0
      %v943 = vpop.f32.mrf.mxu0
      %944 = vdwg.mxu0
      %945 = vmatprep.subr.bf16.mxu0 0
      %946 = vmatpush1.bf16.msra.mxu0 0
      %947 = vmatprep.subr.bf16.mxu0 0
      %948 = vmatpush1.bf16.msra.mxu0 0
      %949 = vmatprep.subr.bf16.mxu0 0
      %950 = vmatpush1.bf16.msra.mxu0 0
      %951 = vmatprep.subr.bf16.mxu0 0
      %952 = vmatpush1.bf16.msra.mxu0 0
      %953 = vmatprep.subr.bf16.mxu0 %v864
      %954 = vmatpush1.bf16.msra.mxu0 %v863
      %955 = vmatprep.subr.bf16.mxu0 %v856
      %956 = vmatpush1.bf16.msra.mxu0 %v855
      %957 = vmatprep.subr.bf16.mxu0 %v848
      %958 = vmatpush1.bf16.msra.mxu0 %v847
      %959 = vmatprep.subr.bf16.mxu0 %v840
      %960 = vmatpush1.bf16.msra.mxu0 %v839
      %961 = vmatprep.subr.bf16.mxu0 0
      %962 = vmatpush2.bf16.msra.mxu0 0
      %963 = vmatprep.subr.bf16.mxu0 0
      %964 = vmatpush2.bf16.msra.mxu0 0
      %965 = vmatprep.subr.bf16.mxu0 0
      %966 = vmatpush2.bf16.msra.mxu0 0
      %967 = vmatprep.subr.bf16.mxu0 0
      %968 = vmatpush2.bf16.msra.mxu0 0
      %969 = vmatprep.subr.bf16.mxu0 0
      %970 = vmatpush2.bf16.msra.mxu0 0
      %971 = vmatprep.subr.bf16.mxu0 0
      %972 = vmatpush2.bf16.msra.mxu0 0
      %973 = vmatprep.subr.bf16.mxu0 0
      %974 = vmatpush2.bf16.msra.mxu0 0
      %975 = vmatprep.subr.bf16.mxu0 0
      %976 = vmatpush2.bf16.msra.mxu0 0
      %977 = vmatprep.mubr.bf16.mxu0 0
      %978 = vmatmul.mubr.bf16.gmra.mxu0 %v902
      %v979 = vpop.f32.mrf.mxu0
      %v980 = vadd.f32 %v653, %v979
      %v981 = vpop.f32.mrf.mxu0
      %v982 = vadd.f32 %v655, %v981
      %v983 = vpop.f32.mrf.mxu0
      %v984 = vpop.f32.mrf.mxu0
      %985 = vdwg.mxu0
      %986 = vmatprep.subr.bf16.mxu0 0
      %987 = vmatpush1.bf16.msra.mxu0 0
      %988 = vmatprep.subr.bf16.mxu0 0
      %989 = vmatpush1.bf16.msra.mxu0 0
      %990 = vmatprep.subr.bf16.mxu0 0
      %991 = vmatpush1.bf16.msra.mxu0 0
      %992 = vmatprep.subr.bf16.mxu0 0
      %993 = vmatpush1.bf16.msra.mxu0 0
      %994 = vmatprep.subr.bf16.mxu0 %v866
      %995 = vmatpush1.bf16.msra.mxu0 %v865
      %996 = vmatprep.subr.bf16.mxu0 %v858
      %997 = vmatpush1.bf16.msra.mxu0 %v857
      %998 = vmatprep.subr.bf16.mxu0 %v850
      %999 = vmatpush1.bf16.msra.mxu0 %v849
      %1000 = vmatprep.subr.bf16.mxu0 %v842
      %1001 = vmatpush1.bf16.msra.mxu0 %v841
      %1002 = vmatprep.subr.bf16.mxu0 0
      %1003 = vmatpush2.bf16.msra.mxu0 0
      %1004 = vmatprep.subr.bf16.mxu0 0
      %1005 = vmatpush2.bf16.msra.mxu0 0
      %1006 = vmatprep.subr.bf16.mxu0 0
      %1007 = vmatpush2.bf16.msra.mxu0 0
      %1008 = vmatprep.subr.bf16.mxu0 0
      %1009 = vmatpush2.bf16.msra.mxu0 0
      %1010 = vmatprep.subr.bf16.mxu0 0
      %1011 = vmatpush2.bf16.msra.mxu0 0
      %1012 = vmatprep.subr.bf16.mxu0 0
      %1013 = vmatpush2.bf16.msra.mxu0 0
      %1014 = vmatprep.subr.bf16.mxu0 0
      %1015 = vmatpush2.bf16.msra.mxu0 0
      %1016 = vmatprep.subr.bf16.mxu0 0
      %1017 = vmatpush2.bf16.msra.mxu0 0
      %1018 = vmatprep.mubr.bf16.mxu0 0
      %1019 = vmatmul.mubr.bf16.gmra.mxu0 %v902
      %v1020 = vpop.f32.mrf.mxu0
      %v1021 = vadd.f32 %v694, %v1020
      %v1022 = vpop.f32.mrf.mxu0
      %v1023 = vadd.f32 %v696, %v1022
      %v1024 = vpop.f32.mrf.mxu0
      %v1025 = vpop.f32.mrf.mxu0
      %1026 = vdwg.mxu0
      %1027 = vmatprep.subr.bf16.mxu0 0
      %1028 = vmatpush1.bf16.msra.mxu0 0
      %1029 = vmatprep.subr.bf16.mxu0 0
      %1030 = vmatpush1.bf16.msra.mxu0 0
      %1031 = vmatprep.subr.bf16.mxu0 0
      %1032 = vmatpush1.bf16.msra.mxu0 0
      %1033 = vmatprep.subr.bf16.mxu0 0
      %1034 = vmatpush1.bf16.msra.mxu0 0
      %1035 = vmatprep.subr.bf16.mxu0 %v868
      %1036 = vmatpush1.bf16.msra.mxu0 %v867
      %1037 = vmatprep.subr.bf16.mxu0 %v860
      %1038 = vmatpush1.bf16.msra.mxu0 %v859
      %1039 = vmatprep.subr.bf16.mxu0 %v852
      %1040 = vmatpush1.bf16.msra.mxu0 %v851
      %1041 = vmatprep.subr.bf16.mxu0 %v844
      %1042 = vmatpush1.bf16.msra.mxu0 %v843
      %1043 = vmatprep.subr.bf16.mxu0 0
      %1044 = vmatpush2.bf16.msra.mxu0 0
      %1045 = vmatprep.subr.bf16.mxu0 0
      %1046 = vmatpush2.bf16.msra.mxu0 0
      %1047 = vmatprep.subr.bf16.mxu0 0
      %1048 = vmatpush2.bf16.msra.mxu0 0
      %1049 = vmatprep.subr.bf16.mxu0 0
      %1050 = vmatpush2.bf16.msra.mxu0 0
      %1051 = vmatprep.subr.bf16.mxu0 0
      %1052 = vmatpush2.bf16.msra.mxu0 0
      %1053 = vmatprep.subr.bf16.mxu0 0
      %1054 = vmatpush2.bf16.msra.mxu0 0
      %1055 = vmatprep.subr.bf16.mxu0 0
      %1056 = vmatpush2.bf16.msra.mxu0 0
      %1057 = vmatprep.subr.bf16.mxu0 0
      %1058 = vmatpush2.bf16.msra.mxu0 0
      %1059 = vmatprep.mubr.bf16.mxu0 0
      %1060 = vmatmul.mubr.bf16.gmra.mxu0 %v902
      %v1061 = vpop.f32.mrf.mxu0
      %v1062 = vadd.f32 %v735, %v1061
      %v1063 = vpop.f32.mrf.mxu0
      %v1064 = vadd.f32 %v737, %v1063
      %v1065 = vpop.f32.mrf.mxu0
      %v1066 = vpop.f32.mrf.mxu0
      %1067 = vdwg.mxu0
      %s1068 = scalar_lea.vmem %s3, 512
      %v1069 = vld [vmem:[%s1068] sm:$0xff]
      %v1070 = vld [vmem:[%s1068 + $0x8] sm:$0xff]
      %v1071 = vld [vmem:[%s1068 + $0x10] sm:$0xff]
      %v1072 = vld [vmem:[%s1068 + $0x18] sm:$0xff]
      %v1073 = vld [vmem:[%s1068 + $0x20] sm:$0xff]
      %v1074 = vld [vmem:[%s1068 + $0x28] sm:$0xff]
      %v1075 = vld [vmem:[%s1068 + $0x30] sm:$0xff]
      %v1076 = vld [vmem:[%s1068 + $0x38] sm:$0xff]
      %v1077 = vld [vmem:[%s1068 + $0x40] sm:$0xff]
      %v1078 = vld [vmem:[%s1068 + $0x48] sm:$0xff]
      %v1079 = vld [vmem:[%s1068 + $0x50] sm:$0xff]
      %v1080 = vld [vmem:[%s1068 + $0x58] sm:$0xff]
      %v1081 = vld [vmem:[%s1068 + $0x60] sm:$0xff]
      %v1082 = vld [vmem:[%s1068 + $0x68] sm:$0xff]
      %v1083 = vld [vmem:[%s1068 + $0x70] sm:$0xff]
      %v1084 = vld [vmem:[%s1068 + $0x78] sm:$0xff]
      %v1085 = vld [vmem:[%s1068 + $0x80] sm:$0xff]
      %v1086 = vld [vmem:[%s1068 + $0x88] sm:$0xff]
      %v1087 = vld [vmem:[%s1068 + $0x90] sm:$0xff]
      %v1088 = vld [vmem:[%s1068 + $0x98] sm:$0xff]
      %v1089 = vld [vmem:[%s1068 + $0xa0] sm:$0xff]
      %v1090 = vld [vmem:[%s1068 + $0xa8] sm:$0xff]
      %v1091 = vld [vmem:[%s1068 + $0xb0] sm:$0xff]
      %v1092 = vld [vmem:[%s1068 + $0xb8] sm:$0xff]
      %v1093 = vld [vmem:[%s1068 + $0xc0] sm:$0xff]
      %v1094 = vld [vmem:[%s1068 + $0xc8] sm:$0xff]
      %v1095 = vld [vmem:[%s1068 + $0xd0] sm:$0xff]
      %v1096 = vld [vmem:[%s1068 + $0xd8] sm:$0xff]
      %v1097 = vld [vmem:[%s1068 + $0xe0] sm:$0xff]
      %v1098 = vld [vmem:[%s1068 + $0xe8] sm:$0xff]
      %v1099 = vld [vmem:[%s1068 + $0xf0] sm:$0xff]
      %v1100 = vld [vmem:[%s1068 + $0xf8] sm:$0xff]
      %v1133 = vunpack.c.l.b16 %v1069
      %v1134 = vunpack.c.h.b16 %v1069
      %v1135 = vunpack.c.l.b16 %v1070
      %v1136 = vunpack.c.h.b16 %v1070
      %v1137 = vunpack.c.l.b16 %v1071
      %v1138 = vunpack.c.h.b16 %v1071
      %v1139 = vunpack.c.l.b16 %v1072
      %v1140 = vunpack.c.h.b16 %v1072
      %v1141 = vunpack.c.l.b16 %v1073
      %v1142 = vunpack.c.h.b16 %v1073
      %v1143 = vunpack.c.l.b16 %v1074
      %v1144 = vunpack.c.h.b16 %v1074
      %v1145 = vunpack.c.l.b16 %v1075
      %v1146 = vunpack.c.h.b16 %v1075
      %v1147 = vunpack.c.l.b16 %v1076
      %v1148 = vunpack.c.h.b16 %v1076
      %v1149 = vunpack.c.l.b16 %v1077
      %v1150 = vunpack.c.h.b16 %v1077
      %v1151 = vunpack.c.l.b16 %v1078
      %v1152 = vunpack.c.h.b16 %v1078
      %v1153 = vunpack.c.l.b16 %v1079
      %v1154 = vunpack.c.h.b16 %v1079
      %v1155 = vunpack.c.l.b16 %v1080
      %v1156 = vunpack.c.h.b16 %v1080
      %v1157 = vunpack.c.l.b16 %v1081
      %v1158 = vunpack.c.h.b16 %v1081
      %v1159 = vunpack.c.l.b16 %v1082
      %v1160 = vunpack.c.h.b16 %v1082
      %v1161 = vunpack.c.l.b16 %v1083
      %v1162 = vunpack.c.h.b16 %v1083
      %v1163 = vunpack.c.l.b16 %v1084
      %v1164 = vunpack.c.h.b16 %v1084
      %v1165 = vunpack.c.l.b16 %v1085
      %v1166 = vunpack.c.h.b16 %v1085
      %v1167 = vunpack.c.l.b16 %v1086
      %v1168 = vunpack.c.h.b16 %v1086
      %v1169 = vunpack.c.l.b16 %v1087
      %v1170 = vunpack.c.h.b16 %v1087
      %v1171 = vunpack.c.l.b16 %v1088
      %v1172 = vunpack.c.h.b16 %v1088
      %v1173 = vunpack.c.l.b16 %v1089
      %v1174 = vunpack.c.h.b16 %v1089
      %v1175 = vunpack.c.l.b16 %v1090
      %v1176 = vunpack.c.h.b16 %v1090
      %v1177 = vunpack.c.l.b16 %v1091
      %v1178 = vunpack.c.h.b16 %v1091
      %v1179 = vunpack.c.l.b16 %v1092
      %v1180 = vunpack.c.h.b16 %v1092
      %v1181 = vunpack.c.l.b16 %v1093
      %v1182 = vunpack.c.h.b16 %v1093
      %v1183 = vunpack.c.l.b16 %v1094
      %v1184 = vunpack.c.h.b16 %v1094
      %v1185 = vunpack.c.l.b16 %v1095
      %v1186 = vunpack.c.h.b16 %v1095
      %v1187 = vunpack.c.l.b16 %v1096
      %v1188 = vunpack.c.h.b16 %v1096
      %v1189 = vunpack.c.l.b16 %v1097
      %v1190 = vunpack.c.h.b16 %v1097
      %v1191 = vunpack.c.l.b16 %v1098
      %v1192 = vunpack.c.h.b16 %v1098
      %v1193 = vunpack.c.l.b16 %v1099
      %v1194 = vunpack.c.h.b16 %v1099
      %v1195 = vunpack.c.l.b16 %v1100
      %v1196 = vunpack.c.h.b16 %v1100
      %v1197 = vpack.c.b16 %v1141, %v1133
      %v1198 = vpack.c.b16 %v1142, %v1134
      %v1199 = vpack.c.b16 %v1143, %v1135
      %v1200 = vpack.c.b16 %v1144, %v1136
      %v1201 = vpack.c.b16 %v1145, %v1137
      %v1202 = vpack.c.b16 %v1146, %v1138
      %v1203 = vpack.c.b16 %v1147, %v1139
      %v1204 = vpack.c.b16 %v1148, %v1140
      %v1205 = vpack.c.b16 %v1157, %v1149
      %v1206 = vpack.c.b16 %v1158, %v1150
      %v1207 = vpack.c.b16 %v1159, %v1151
      %v1208 = vpack.c.b16 %v1160, %v1152
      %v1209 = vpack.c.b16 %v1161, %v1153
      %v1210 = vpack.c.b16 %v1162, %v1154
      %v1211 = vpack.c.b16 %v1163, %v1155
      %v1212 = vpack.c.b16 %v1164, %v1156
      %v1213 = vpack.c.b16 %v1173, %v1165
      %v1214 = vpack.c.b16 %v1174, %v1166
      %v1215 = vpack.c.b16 %v1175, %v1167
      %v1216 = vpack.c.b16 %v1176, %v1168
      %v1217 = vpack.c.b16 %v1177, %v1169
      %v1218 = vpack.c.b16 %v1178, %v1170
      %v1219 = vpack.c.b16 %v1179, %v1171
      %v1220 = vpack.c.b16 %v1180, %v1172
      %v1221 = vpack.c.b16 %v1189, %v1181
      %v1222 = vpack.c.b16 %v1190, %v1182
      %v1223 = vpack.c.b16 %v1191, %v1183
      %v1224 = vpack.c.b16 %v1192, %v1184
      %v1225 = vpack.c.b16 %v1193, %v1185
      %v1226 = vpack.c.b16 %v1194, %v1186
      %v1227 = vpack.c.b16 %v1195, %v1187
      %v1228 = vpack.c.b16 %v1196, %v1188
      %v1261 = vsel %vm573, %v298, 0
      %1263 = vmatprep.subr.bf16.mxu0 0
      %1264 = vmatpush1.bf16.msra.mxu0 0
      %1265 = vmatprep.subr.bf16.mxu0 0
      %1266 = vmatpush1.bf16.msra.mxu0 0
      %1267 = vmatprep.subr.bf16.mxu0 0
      %1268 = vmatpush1.bf16.msra.mxu0 0
      %1269 = vmatprep.subr.bf16.mxu0 0
      %1270 = vmatpush1.bf16.msra.mxu0 0
      %1271 = vmatprep.subr.bf16.mxu0 %v1222
      %1272 = vmatpush1.bf16.msra.mxu0 %v1221
      %1273 = vmatprep.subr.bf16.mxu0 %v1214
      %1274 = vmatpush1.bf16.msra.mxu0 %v1213
      %1275 = vmatprep.subr.bf16.mxu0 %v1206
      %1276 = vmatpush1.bf16.msra.mxu0 %v1205
      %1277 = vmatprep.subr.bf16.mxu0 %v1198
      %1278 = vmatpush1.bf16.msra.mxu0 %v1197
      %1279 = vmatprep.subr.bf16.mxu0 0
      %1280 = vmatpush2.bf16.msra.mxu0 0
      %1281 = vmatprep.subr.bf16.mxu0 0
      %1282 = vmatpush2.bf16.msra.mxu0 0
      %1283 = vmatprep.subr.bf16.mxu0 0
      %1284 = vmatpush2.bf16.msra.mxu0 0
      %1285 = vmatprep.subr.bf16.mxu0 0
      %1286 = vmatpush2.bf16.msra.mxu0 0
      %1287 = vmatprep.subr.bf16.mxu0 0
      %1288 = vmatpush2.bf16.msra.mxu0 0
      %1289 = vmatprep.subr.bf16.mxu0 0
      %1290 = vmatpush2.bf16.msra.mxu0 0
      %1291 = vmatprep.subr.bf16.mxu0 0
      %1292 = vmatpush2.bf16.msra.mxu0 0
      %1293 = vmatprep.subr.bf16.mxu0 0
      %1294 = vmatpush2.bf16.msra.mxu0 0
      %1295 = vmatprep.mubr.bf16.mxu0 0
      %1296 = vmatmul.mubr.bf16.gmra.mxu0 %v1261
      %v1297 = vpop.f32.mrf.mxu0
      %v1298 = vadd.f32 0.0, %v1297
      %v1299 = vpop.f32.mrf.mxu0
      %v1300 = vadd.f32 0.0, %v1299
      %v1301 = vpop.f32.mrf.mxu0
      %v1302 = vpop.f32.mrf.mxu0
      %1303 = vdwg.mxu0
      %1304 = vmatprep.subr.bf16.mxu0 0
      %1305 = vmatpush1.bf16.msra.mxu0 0
      %1306 = vmatprep.subr.bf16.mxu0 0
      %1307 = vmatpush1.bf16.msra.mxu0 0
      %1308 = vmatprep.subr.bf16.mxu0 0
      %1309 = vmatpush1.bf16.msra.mxu0 0
      %1310 = vmatprep.subr.bf16.mxu0 0
      %1311 = vmatpush1.bf16.msra.mxu0 0
      %1312 = vmatprep.subr.bf16.mxu0 %v1224
      %1313 = vmatpush1.bf16.msra.mxu0 %v1223
      %1314 = vmatprep.subr.bf16.mxu0 %v1216
      %1315 = vmatpush1.bf16.msra.mxu0 %v1215
      %1316 = vmatprep.subr.bf16.mxu0 %v1208
      %1317 = vmatpush1.bf16.msra.mxu0 %v1207
      %1318 = vmatprep.subr.bf16.mxu0 %v1200
      %1319 = vmatpush1.bf16.msra.mxu0 %v1199
      %1320 = vmatprep.subr.bf16.mxu0 0
      %1321 = vmatpush2.bf16.msra.mxu0 0
      %1322 = vmatprep.subr.bf16.mxu0 0
      %1323 = vmatpush2.bf16.msra.mxu0 0
      %1324 = vmatprep.subr.bf16.mxu0 0
      %1325 = vmatpush2.bf16.msra.mxu0 0
      %1326 = vmatprep.subr.bf16.mxu0 0
      %1327 = vmatpush2.bf16.msra.mxu0 0
      %1328 = vmatprep.subr.bf16.mxu0 0
      %1329 = vmatpush2.bf16.msra.mxu0 0
      %1330 = vmatprep.subr.bf16.mxu0 0
      %1331 = vmatpush2.bf16.msra.mxu0 0
      %1332 = vmatprep.subr.bf16.mxu0 0
      %1333 = vmatpush2.bf16.msra.mxu0 0
      %1334 = vmatprep.subr.bf16.mxu0 0
      %1335 = vmatpush2.bf16.msra.mxu0 0
      %1336 = vmatprep.mubr.bf16.mxu0 0
      %1337 = vmatmul.mubr.bf16.gmra.mxu0 %v1261
      %v1338 = vpop.f32.mrf.mxu0
      %v1339 = vadd.f32 0.0, %v1338
      %v1340 = vpop.f32.mrf.mxu0
      %v1341 = vadd.f32 0.0, %v1340
      %v1342 = vpop.f32.mrf.mxu0
      %v1343 = vpop.f32.mrf.mxu0
      %1344 = vdwg.mxu0
      %1345 = vmatprep.subr.bf16.mxu0 0
      %1346 = vmatpush1.bf16.msra.mxu0 0
      %1347 = vmatprep.subr.bf16.mxu0 0
      %1348 = vmatpush1.bf16.msra.mxu0 0
      %1349 = vmatprep.subr.bf16.mxu0 0
      %1350 = vmatpush1.bf16.msra.mxu0 0
      %1351 = vmatprep.subr.bf16.mxu0 0
      %1352 = vmatpush1.bf16.msra.mxu0 0
      %1353 = vmatprep.subr.bf16.mxu0 %v1226
      %1354 = vmatpush1.bf16.msra.mxu0 %v1225
      %1355 = vmatprep.subr.bf16.mxu0 %v1218
      %1356 = vmatpush1.bf16.msra.mxu0 %v1217
      %1357 = vmatprep.subr.bf16.mxu0 %v1210
      %1358 = vmatpush1.bf16.msra.mxu0 %v1209
      %1359 = vmatprep.subr.bf16.mxu0 %v1202
      %1360 = vmatpush1.bf16.msra.mxu0 %v1201
      %1361 = vmatprep.subr.bf16.mxu0 0
      %1362 = vmatpush2.bf16.msra.mxu0 0
      %1363 = vmatprep.subr.bf16.mxu0 0
      %1364 = vmatpush2.bf16.msra.mxu0 0
      %1365 = vmatprep.subr.bf16.mxu0 0
      %1366 = vmatpush2.bf16.msra.mxu0 0
      %1367 = vmatprep.subr.bf16.mxu0 0
      %1368 = vmatpush2.bf16.msra.mxu0 0
      %1369 = vmatprep.subr.bf16.mxu0 0
      %1370 = vmatpush2.bf16.msra.mxu0 0
      %1371 = vmatprep.subr.bf16.mxu0 0
      %1372 = vmatpush2.bf16.msra.mxu0 0
      %1373 = vmatprep.subr.bf16.mxu0 0
      %1374 = vmatpush2.bf16.msra.mxu0 0
      %1375 = vmatprep.subr.bf16.mxu0 0
      %1376 = vmatpush2.bf16.msra.mxu0 0
      %1377 = vmatprep.mubr.bf16.mxu0 0
      %1378 = vmatmul.mubr.bf16.gmra.mxu0 %v1261
      %v1379 = vpop.f32.mrf.mxu0
      %v1380 = vadd.f32 0.0, %v1379
      %v1381 = vpop.f32.mrf.mxu0
      %v1382 = vadd.f32 0.0, %v1381
      %v1383 = vpop.f32.mrf.mxu0
      %v1384 = vpop.f32.mrf.mxu0
      %1385 = vdwg.mxu0
      %1386 = vmatprep.subr.bf16.mxu0 0
      %1387 = vmatpush1.bf16.msra.mxu0 0
      %1388 = vmatprep.subr.bf16.mxu0 0
      %1389 = vmatpush1.bf16.msra.mxu0 0
      %1390 = vmatprep.subr.bf16.mxu0 0
      %1391 = vmatpush1.bf16.msra.mxu0 0
      %1392 = vmatprep.subr.bf16.mxu0 0
      %1393 = vmatpush1.bf16.msra.mxu0 0
      %1394 = vmatprep.subr.bf16.mxu0 %v1228
      %1395 = vmatpush1.bf16.msra.mxu0 %v1227
      %1396 = vmatprep.subr.bf16.mxu0 %v1220
      %1397 = vmatpush1.bf16.msra.mxu0 %v1219
      %1398 = vmatprep.subr.bf16.mxu0 %v1212
      %1399 = vmatpush1.bf16.msra.mxu0 %v1211
      %1400 = vmatprep.subr.bf16.mxu0 %v1204
      %1401 = vmatpush1.bf16.msra.mxu0 %v1203
      %1402 = vmatprep.subr.bf16.mxu0 0
      %1403 = vmatpush2.bf16.msra.mxu0 0
      %1404 = vmatprep.subr.bf16.mxu0 0
      %1405 = vmatpush2.bf16.msra.mxu0 0
      %1406 = vmatprep.subr.bf16.mxu0 0
      %1407 = vmatpush2.bf16.msra.mxu0 0
      %1408 = vmatprep.subr.bf16.mxu0 0
      %1409 = vmatpush2.bf16.msra.mxu0 0
      %1410 = vmatprep.subr.bf16.mxu0 0
      %1411 = vmatpush2.bf16.msra.mxu0 0
      %1412 = vmatprep.subr.bf16.mxu0 0
      %1413 = vmatpush2.bf16.msra.mxu0 0
      %1414 = vmatprep.subr.bf16.mxu0 0
      %1415 = vmatpush2.bf16.msra.mxu0 0
      %1416 = vmatprep.subr.bf16.mxu0 0
      %1417 = vmatpush2.bf16.msra.mxu0 0
      %1418 = vmatprep.mubr.bf16.mxu0 0
      %1419 = vmatmul.mubr.bf16.gmra.mxu0 %v1261
      %v1420 = vpop.f32.mrf.mxu0
      %v1421 = vadd.f32 0.0, %v1420
      %v1422 = vpop.f32.mrf.mxu0
      %v1423 = vadd.f32 0.0, %v1422
      %v1424 = vpop.f32.mrf.mxu0
      %v1425 = vpop.f32.mrf.mxu0
      %1426 = vdwg.mxu0
      %v1427 = vadd.f32 %v939, %v1298
      %v1428 = vadd.f32 %v941, %v1300
      %v1429 = vadd.f32 %v980, %v1339
      %v1430 = vadd.f32 %v982, %v1341
      %v1431 = vadd.f32 %v1021, %v1380
      %v1432 = vadd.f32 %v1023, %v1382
      %v1433 = vadd.f32 %v1062, %v1421
      %v1434 = vadd.f32 %v1064, %v1423
      %v1436 = vsel %vm299, %v296, 0
      %v1438 = vsel %vm303, %v297, 0
      %1440 = vmatprep.subr.bf16.mxu0 0
      %1441 = vmatpush1.bf16.msra.mxu0 0
      %1442 = vmatprep.subr.bf16.mxu0 0
      %1443 = vmatpush1.bf16.msra.mxu0 0
      %1444 = vmatprep.subr.bf16.mxu0 0
      %1445 = vmatpush1.bf16.msra.mxu0 0
      %1446 = vmatprep.subr.bf16.mxu0 0
      %1447 = vmatpush1.bf16.msra.mxu0 0
      %1448 = vmatprep.subr.bf16.mxu0 0
      %1449 = vmatpush1.bf16.msra.mxu0 0
      %1450 = vmatprep.subr.bf16.mxu0 0
      %1451 = vmatpush1.bf16.msra.mxu0 0
      %1452 = vmatprep.subr.bf16.mxu0 0
      %1453 = vmatpush1.bf16.msra.mxu0 0
      %1454 = vmatprep.subr.bf16.mxu0 0
      %1455 = vmatpush1.bf16.msra.mxu0 %v1438
      %1456 = vmatprep.subr.bf16.mxu0 0
      %1457 = vmatpush2.bf16.msra.mxu0 0
      %1458 = vmatprep.subr.bf16.mxu0 0
      %1459 = vmatpush2.bf16.msra.mxu0 0
      %1460 = vmatprep.subr.bf16.mxu0 0
      %1461 = vmatpush2.bf16.msra.mxu0 0
      %1462 = vmatprep.subr.bf16.mxu0 0
      %1463 = vmatpush2.bf16.msra.mxu0 0
      %1464 = vmatprep.subr.bf16.mxu0 0
      %1465 = vmatpush2.bf16.msra.mxu0 0
      %1466 = vmatprep.subr.bf16.mxu0 0
      %1467 = vmatpush2.bf16.msra.mxu0 0
      %1468 = vmatprep.subr.bf16.mxu0 0
      %1469 = vmatpush2.bf16.msra.mxu0 0
      %1470 = vmatprep.subr.bf16.mxu0 0
      %1471 = vmatpush2.bf16.msra.mxu0 0
      %1472 = vmatprep.mubr.bf16.mxu0 0
      %1473 = vmatmul.mubr.bf16.gmra.mxu0 %v1436
      %v1474 = vpop.f32.mrf.mxu0
      %v1475 = vadd.f32 0.0, %v1474
      %v1476 = vpop.f32.mrf.mxu0
      %v1477 = vpop.f32.mrf.mxu0
      %v1478 = vpop.f32.mrf.mxu0
      %1479 = vdwg.mxu0
      %v1480 = vpack.c.bf16 %v1475, %v1475
      %s1481 = scalar_lea.vmem %s3, 768
      %v1482 = vld [vmem:[%s1481] sm:$0xff]
      %v1483 = vld [vmem:[%s1481 + $0x8] sm:$0xff]
      %v1484 = vld [vmem:[%s1481 + $0x10] sm:$0xff]
      %v1485 = vld [vmem:[%s1481 + $0x18] sm:$0xff]
      %v1486 = vld [vmem:[%s1481 + $0x20] sm:$0xff]
      %v1487 = vld [vmem:[%s1481 + $0x28] sm:$0xff]
      %v1488 = vld [vmem:[%s1481 + $0x30] sm:$0xff]
      %v1489 = vld [vmem:[%s1481 + $0x38] sm:$0xff]
      %v1490 = vld [vmem:[%s1481 + $0x40] sm:$0xff]
      %v1491 = vld [vmem:[%s1481 + $0x48] sm:$0xff]
      %v1492 = vld [vmem:[%s1481 + $0x50] sm:$0xff]
      %v1493 = vld [vmem:[%s1481 + $0x58] sm:$0xff]
      %v1494 = vld [vmem:[%s1481 + $0x60] sm:$0xff]
      %v1495 = vld [vmem:[%s1481 + $0x68] sm:$0xff]
      %v1496 = vld [vmem:[%s1481 + $0x70] sm:$0xff]
      %v1497 = vld [vmem:[%s1481 + $0x78] sm:$0xff]
      %v1498 = vld [vmem:[%s1481 + $0x80] sm:$0xff]
      %v1499 = vld [vmem:[%s1481 + $0x88] sm:$0xff]
      %v1500 = vld [vmem:[%s1481 + $0x90] sm:$0xff]
      %v1501 = vld [vmem:[%s1481 + $0x98] sm:$0xff]
      %v1502 = vld [vmem:[%s1481 + $0xa0] sm:$0xff]
      %v1503 = vld [vmem:[%s1481 + $0xa8] sm:$0xff]
      %v1504 = vld [vmem:[%s1481 + $0xb0] sm:$0xff]
      %v1505 = vld [vmem:[%s1481 + $0xb8] sm:$0xff]
      %v1506 = vld [vmem:[%s1481 + $0xc0] sm:$0xff]
      %v1507 = vld [vmem:[%s1481 + $0xc8] sm:$0xff]
      %v1508 = vld [vmem:[%s1481 + $0xd0] sm:$0xff]
      %v1509 = vld [vmem:[%s1481 + $0xd8] sm:$0xff]
      %v1510 = vld [vmem:[%s1481 + $0xe0] sm:$0xff]
      %v1511 = vld [vmem:[%s1481 + $0xe8] sm:$0xff]
      %v1512 = vld [vmem:[%s1481 + $0xf0] sm:$0xff]
      %v1513 = vld [vmem:[%s1481 + $0xf8] sm:$0xff]
      %v1546 = vunpack.c.l.b16 %v1482
      %v1547 = vunpack.c.h.b16 %v1482
      %v1548 = vunpack.c.l.b16 %v1483
      %v1549 = vunpack.c.h.b16 %v1483
      %v1550 = vunpack.c.l.b16 %v1484
      %v1551 = vunpack.c.h.b16 %v1484
      %v1552 = vunpack.c.l.b16 %v1485
      %v1553 = vunpack.c.h.b16 %v1485
      %v1554 = vunpack.c.l.b16 %v1486
      %v1555 = vunpack.c.h.b16 %v1486
      %v1556 = vunpack.c.l.b16 %v1487
      %v1557 = vunpack.c.h.b16 %v1487
      %v1558 = vunpack.c.l.b16 %v1488
      %v1559 = vunpack.c.h.b16 %v1488
      %v1560 = vunpack.c.l.b16 %v1489
      %v1561 = vunpack.c.h.b16 %v1489
      %v1562 = vunpack.c.l.b16 %v1490
      %v1563 = vunpack.c.h.b16 %v1490
      %v1564 = vunpack.c.l.b16 %v1491
      %v1565 = vunpack.c.h.b16 %v1491
      %v1566 = vunpack.c.l.b16 %v1492
      %v1567 = vunpack.c.h.b16 %v1492
      %v1568 = vunpack.c.l.b16 %v1493
      %v1569 = vunpack.c.h.b16 %v1493
      %v1570 = vunpack.c.l.b16 %v1494
      %v1571 = vunpack.c.h.b16 %v1494
      %v1572 = vunpack.c.l.b16 %v1495
      %v1573 = vunpack.c.h.b16 %v1495
      %v1574 = vunpack.c.l.b16 %v1496
      %v1575 = vunpack.c.h.b16 %v1496
      %v1576 = vunpack.c.l.b16 %v1497
      %v1577 = vunpack.c.h.b16 %v1497
      %v1578 = vunpack.c.l.b16 %v1498
      %v1579 = vunpack.c.h.b16 %v1498
      %v1580 = vunpack.c.l.b16 %v1499
      %v1581 = vunpack.c.h.b16 %v1499
      %v1582 = vunpack.c.l.b16 %v1500
      %v1583 = vunpack.c.h.b16 %v1500
      %v1584 = vunpack.c.l.b16 %v1501
      %v1585 = vunpack.c.h.b16 %v1501
      %v1586 = vunpack.c.l.b16 %v1502
      %v1587 = vunpack.c.h.b16 %v1502
      %v1588 = vunpack.c.l.b16 %v1503
      %v1589 = vunpack.c.h.b16 %v1503
      %v1590 = vunpack.c.l.b16 %v1504
      %v1591 = vunpack.c.h.b16 %v1504
      %v1592 = vunpack.c.l.b16 %v1505
      %v1593 = vunpack.c.h.b16 %v1505
      %v1594 = vunpack.c.l.b16 %v1506
      %v1595 = vunpack.c.h.b16 %v1506
      %v1596 = vunpack.c.l.b16 %v1507
      %v1597 = vunpack.c.h.b16 %v1507
      %v1598 = vunpack.c.l.b16 %v1508
      %v1599 = vunpack.c.h.b16 %v1508
      %v1600 = vunpack.c.l.b16 %v1509
      %v1601 = vunpack.c.h.b16 %v1509
      %v1602 = vunpack.c.l.b16 %v1510
      %v1603 = vunpack.c.h.b16 %v1510
      %v1604 = vunpack.c.l.b16 %v1511
      %v1605 = vunpack.c.h.b16 %v1511
      %v1606 = vunpack.c.l.b16 %v1512
      %v1607 = vunpack.c.h.b16 %v1512
      %v1608 = vunpack.c.l.b16 %v1513
      %v1609 = vunpack.c.h.b16 %v1513
      %v1610 = vpack.c.b16 %v1554, %v1546
      %v1611 = vpack.c.b16 %v1555, %v1547
      %v1612 = vpack.c.b16 %v1556, %v1548
      %v1613 = vpack.c.b16 %v1557, %v1549
      %v1614 = vpack.c.b16 %v1558, %v1550
      %v1615 = vpack.c.b16 %v1559, %v1551
      %v1616 = vpack.c.b16 %v1560, %v1552
      %v1617 = vpack.c.b16 %v1561, %v1553
      %v1618 = vpack.c.b16 %v1570, %v1562
      %v1619 = vpack.c.b16 %v1571, %v1563
      %v1620 = vpack.c.b16 %v1572, %v1564
      %v1621 = vpack.c.b16 %v1573, %v1565
      %v1622 = vpack.c.b16 %v1574, %v1566
      %v1623 = vpack.c.b16 %v1575, %v1567
      %v1624 = vpack.c.b16 %v1576, %v1568
      %v1625 = vpack.c.b16 %v1577, %v1569
      %v1626 = vpack.c.b16 %v1586, %v1578
      %v1627 = vpack.c.b16 %v1587, %v1579
      %v1628 = vpack.c.b16 %v1588, %v1580
      %v1629 = vpack.c.b16 %v1589, %v1581
      %v1630 = vpack.c.b16 %v1590, %v1582
      %v1631 = vpack.c.b16 %v1591, %v1583
      %v1632 = vpack.c.b16 %v1592, %v1584
      %v1633 = vpack.c.b16 %v1593, %v1585
      %v1634 = vpack.c.b16 %v1602, %v1594
      %v1635 = vpack.c.b16 %v1603, %v1595
      %v1636 = vpack.c.b16 %v1604, %v1596
      %v1637 = vpack.c.b16 %v1605, %v1597
      %v1638 = vpack.c.b16 %v1606, %v1598
      %v1639 = vpack.c.b16 %v1607, %v1599
      %v1640 = vpack.c.b16 %v1608, %v1600
      %v1641 = vpack.c.b16 %v1609, %v1601
      %v1675 = vsel %vm573, %v1480, 0
      %1677 = vmatprep.subr.bf16.mxu0 0
      %1678 = vmatpush1.bf16.msra.mxu0 0
      %1679 = vmatprep.subr.bf16.mxu0 0
      %1680 = vmatpush1.bf16.msra.mxu0 0
      %1681 = vmatprep.subr.bf16.mxu0 0
      %1682 = vmatpush1.bf16.msra.mxu0 0
      %1683 = vmatprep.subr.bf16.mxu0 0
      %1684 = vmatpush1.bf16.msra.mxu0 0
      %1685 = vmatprep.subr.bf16.mxu0 %v1635
      %1686 = vmatpush1.bf16.msra.mxu0 %v1634
      %1687 = vmatprep.subr.bf16.mxu0 %v1627
      %1688 = vmatpush1.bf16.msra.mxu0 %v1626
      %1689 = vmatprep.subr.bf16.mxu0 %v1619
      %1690 = vmatpush1.bf16.msra.mxu0 %v1618
      %1691 = vmatprep.subr.bf16.mxu0 %v1611
      %1692 = vmatpush1.bf16.msra.mxu0 %v1610
      %1693 = vmatprep.subr.bf16.mxu0 0
      %1694 = vmatpush2.bf16.msra.mxu0 0
      %1695 = vmatprep.subr.bf16.mxu0 0
      %1696 = vmatpush2.bf16.msra.mxu0 0
      %1697 = vmatprep.subr.bf16.mxu0 0
      %1698 = vmatpush2.bf16.msra.mxu0 0
      %1699 = vmatprep.subr.bf16.mxu0 0
      %1700 = vmatpush2.bf16.msra.mxu0 0
      %1701 = vmatprep.subr.bf16.mxu0 0
      %1702 = vmatpush2.bf16.msra.mxu0 0
      %1703 = vmatprep.subr.bf16.mxu0 0
      %1704 = vmatpush2.bf16.msra.mxu0 0
      %1705 = vmatprep.subr.bf16.mxu0 0
      %1706 = vmatpush2.bf16.msra.mxu0 0
      %1707 = vmatprep.subr.bf16.mxu0 0
      %1708 = vmatpush2.bf16.msra.mxu0 0
      %1709 = vmatprep.mubr.bf16.mxu0 0
      %1710 = vmatmul.mubr.bf16.gmra.mxu0 %v1675
      %v1711 = vpop.f32.mrf.mxu0
      %v1712 = vadd.f32 0.0, %v1711
      %v1713 = vpop.f32.mrf.mxu0
      %v1714 = vadd.f32 0.0, %v1713
      %v1715 = vpop.f32.mrf.mxu0
      %v1716 = vpop.f32.mrf.mxu0
      %1717 = vdwg.mxu0
      %1718 = vmatprep.subr.bf16.mxu0 0
      %1719 = vmatpush1.bf16.msra.mxu0 0
      %1720 = vmatprep.subr.bf16.mxu0 0
      %1721 = vmatpush1.bf16.msra.mxu0 0
      %1722 = vmatprep.subr.bf16.mxu0 0
      %1723 = vmatpush1.bf16.msra.mxu0 0
      %1724 = vmatprep.subr.bf16.mxu0 0
      %1725 = vmatpush1.bf16.msra.mxu0 0
      %1726 = vmatprep.subr.bf16.mxu0 %v1637
      %1727 = vmatpush1.bf16.msra.mxu0 %v1636
      %1728 = vmatprep.subr.bf16.mxu0 %v1629
      %1729 = vmatpush1.bf16.msra.mxu0 %v1628
      %1730 = vmatprep.subr.bf16.mxu0 %v1621
      %1731 = vmatpush1.bf16.msra.mxu0 %v1620
      %1732 = vmatprep.subr.bf16.mxu0 %v1613
      %1733 = vmatpush1.bf16.msra.mxu0 %v1612
      %1734 = vmatprep.subr.bf16.mxu0 0
      %1735 = vmatpush2.bf16.msra.mxu0 0
      %1736 = vmatprep.subr.bf16.mxu0 0
      %1737 = vmatpush2.bf16.msra.mxu0 0
      %1738 = vmatprep.subr.bf16.mxu0 0
      %1739 = vmatpush2.bf16.msra.mxu0 0
      %1740 = vmatprep.subr.bf16.mxu0 0
      %1741 = vmatpush2.bf16.msra.mxu0 0
      %1742 = vmatprep.subr.bf16.mxu0 0
      %1743 = vmatpush2.bf16.msra.mxu0 0
      %1744 = vmatprep.subr.bf16.mxu0 0
      %1745 = vmatpush2.bf16.msra.mxu0 0
      %1746 = vmatprep.subr.bf16.mxu0 0
      %1747 = vmatpush2.bf16.msra.mxu0 0
      %1748 = vmatprep.subr.bf16.mxu0 0
      %1749 = vmatpush2.bf16.msra.mxu0 0
      %1750 = vmatprep.mubr.bf16.mxu0 0
      %1751 = vmatmul.mubr.bf16.gmra.mxu0 %v1675
      %v1752 = vpop.f32.mrf.mxu0
      %v1753 = vadd.f32 0.0, %v1752
      %v1754 = vpop.f32.mrf.mxu0
      %v1755 = vadd.f32 0.0, %v1754
      %v1756 = vpop.f32.mrf.mxu0
      %v1757 = vpop.f32.mrf.mxu0
      %1758 = vdwg.mxu0
      %1759 = vmatprep.subr.bf16.mxu0 0
      %1760 = vmatpush1.bf16.msra.mxu0 0
      %1761 = vmatprep.subr.bf16.mxu0 0
      %1762 = vmatpush1.bf16.msra.mxu0 0
      %1763 = vmatprep.subr.bf16.mxu0 0
      %1764 = vmatpush1.bf16.msra.mxu0 0
      %1765 = vmatprep.subr.bf16.mxu0 0
      %1766 = vmatpush1.bf16.msra.mxu0 0
      %1767 = vmatprep.subr.bf16.mxu0 %v1639
      %1768 = vmatpush1.bf16.msra.mxu0 %v1638
      %1769 = vmatprep.subr.bf16.mxu0 %v1631
      %1770 = vmatpush1.bf16.msra.mxu0 %v1630
      %1771 = vmatprep.subr.bf16.mxu0 %v1623
      %1772 = vmatpush1.bf16.msra.mxu0 %v1622
      %1773 = vmatprep.subr.bf16.mxu0 %v1615
      %1774 = vmatpush1.bf16.msra.mxu0 %v1614
      %1775 = vmatprep.subr.bf16.mxu0 0
      %1776 = vmatpush2.bf16.msra.mxu0 0
      %1777 = vmatprep.subr.bf16.mxu0 0
      %1778 = vmatpush2.bf16.msra.mxu0 0
      %1779 = vmatprep.subr.bf16.mxu0 0
      %1780 = vmatpush2.bf16.msra.mxu0 0
      %1781 = vmatprep.subr.bf16.mxu0 0
      %1782 = vmatpush2.bf16.msra.mxu0 0
      %1783 = vmatprep.subr.bf16.mxu0 0
      %1784 = vmatpush2.bf16.msra.mxu0 0
      %1785 = vmatprep.subr.bf16.mxu0 0
      %1786 = vmatpush2.bf16.msra.mxu0 0
      %1787 = vmatprep.subr.bf16.mxu0 0
      %1788 = vmatpush2.bf16.msra.mxu0 0
      %1789 = vmatprep.subr.bf16.mxu0 0
      %1790 = vmatpush2.bf16.msra.mxu0 0
      %1791 = vmatprep.mubr.bf16.mxu0 0
      %1792 = vmatmul.mubr.bf16.gmra.mxu0 %v1675
      %v1793 = vpop.f32.mrf.mxu0
      %v1794 = vadd.f32 0.0, %v1793
      %v1795 = vpop.f32.mrf.mxu0
      %v1796 = vadd.f32 0.0, %v1795
      %v1797 = vpop.f32.mrf.mxu0
      %v1798 = vpop.f32.mrf.mxu0
      %1799 = vdwg.mxu0
      %1800 = vmatprep.subr.bf16.mxu0 0
      %1801 = vmatpush1.bf16.msra.mxu0 0
      %1802 = vmatprep.subr.bf16.mxu0 0
      %1803 = vmatpush1.bf16.msra.mxu0 0
      %1804 = vmatprep.subr.bf16.mxu0 0
      %1805 = vmatpush1.bf16.msra.mxu0 0
      %1806 = vmatprep.subr.bf16.mxu0 0
      %1807 = vmatpush1.bf16.msra.mxu0 0
      %1808 = vmatprep.subr.bf16.mxu0 %v1641
      %1809 = vmatpush1.bf16.msra.mxu0 %v1640
      %1810 = vmatprep.subr.bf16.mxu0 %v1633
      %1811 = vmatpush1.bf16.msra.mxu0 %v1632
      %1812 = vmatprep.subr.bf16.mxu0 %v1625
      %1813 = vmatpush1.bf16.msra.mxu0 %v1624
      %1814 = vmatprep.subr.bf16.mxu0 %v1617
      %1815 = vmatpush1.bf16.msra.mxu0 %v1616
      %1816 = vmatprep.subr.bf16.mxu0 0
      %1817 = vmatpush2.bf16.msra.mxu0 0
      %1818 = vmatprep.subr.bf16.mxu0 0
      %1819 = vmatpush2.bf16.msra.mxu0 0
      %1820 = vmatprep.subr.bf16.mxu0 0
      %1821 = vmatpush2.bf16.msra.mxu0 0
      %1822 = vmatprep.subr.bf16.mxu0 0
      %1823 = vmatpush2.bf16.msra.mxu0 0
      %1824 = vmatprep.subr.bf16.mxu0 0
      %1825 = vmatpush2.bf16.msra.mxu0 0
      %1826 = vmatprep.subr.bf16.mxu0 0
      %1827 = vmatpush2.bf16.msra.mxu0 0
      %1828 = vmatprep.subr.bf16.mxu0 0
      %1829 = vmatpush2.bf16.msra.mxu0 0
      %1830 = vmatprep.subr.bf16.mxu0 0
      %1831 = vmatpush2.bf16.msra.mxu0 0
      %1832 = vmatprep.mubr.bf16.mxu0 0
      %1833 = vmatmul.mubr.bf16.gmra.mxu0 %v1675
      %v1834 = vpop.f32.mrf.mxu0
      %v1835 = vadd.f32 0.0, %v1834
      %v1836 = vpop.f32.mrf.mxu0
      %v1837 = vadd.f32 0.0, %v1836
      %v1838 = vpop.f32.mrf.mxu0
      %v1839 = vpop.f32.mrf.mxu0
      %1840 = vdwg.mxu0
      %v1841 = vadd.f32 %v1427, %v1712
      %v1842 = vadd.f32 %v1428, %v1714
      %v1843 = vadd.f32 %v1429, %v1753
      %v1844 = vadd.f32 %v1430, %v1755
      %v1845 = vadd.f32 %v1431, %v1794
      %v1846 = vadd.f32 %v1432, %v1796
      %v1847 = vadd.f32 %v1433, %v1835
      %v1848 = vadd.f32 %v1434, %v1837
      %v1849 = vmax.f32 %v1841, %v1843
      %v1850 = vmax.f32 %v1842, %v1844
      %v1851 = vmax.f32 %v1845, %v1847
      %v1852 = vmax.f32 %v1846, %v1848
      %v1853 = vmax.f32 %v1849, %v1851
      %v1854 = vmax.f32 %v1850, %v1852
      %v1855 = vld [vmem:[%s6] sm:$0x3f]
      %v1856 = vld [vmem:[%s6 + $0x8] sm:$0x3f]
      %v1857 = vlaneseq
      %v1858 = vshrl.u32 %v1857, 7
      %v1859 = vsub.s32 0, %v1858
      %v1860 = vrot.slane %v1855, %v1859
      %v1861 = vlaneseq
      %v1862 = vshrl.u32 %v1861, 7
      %v1863 = vsub.s32 0, %v1862
      %v1864 = vrot.slane %v1856, %v1863
      %v1865 = vmul.f32 %v1853, %v1860
      %v1866 = vmul.f32 %v1854, %v1864
      %v1867 = vlaneseq
      %v1868 = vshrl.u32 %v1867, 7
      %v1869 = vsub.s32 1, %v1868
      %v1870 = vrot.slane %v1855, %v1869
      %v1871 = vlaneseq
      %v1872 = vshrl.u32 %v1871, 7
      %v1873 = vsub.s32 1, %v1872
      %v1874 = vrot.slane %v1856, %v1873
      %v1875 = vadd.f32 %v1865, %v1870
      %v1876 = vadd.f32 %v1866, %v1874
      %v1877 = vmax.f32 %v1875, 0.0
      %v1878 = vmax.f32 %v1876, 0.0
      %v1879 = vpack.c.bf16 %v1877, %v1877
      %v1880 = vpack.c.bf16 %v1878, %v1878
      %v1882 = vsel %vm303, %v1879, 0
      %v1885 = vsel %vm303, %v1880, 0
      %1887 = vmatprep.subr.bf16.mxu0 0
      %1888 = vmatpush1.bf16.msra.mxu0 0
      %1889 = vmatprep.subr.bf16.mxu0 0
      %1890 = vmatpush1.bf16.msra.mxu0 0
      %1891 = vmatprep.subr.bf16.mxu0 0
      %1892 = vmatpush1.bf16.msra.mxu0 0
      %1893 = vmatprep.subr.bf16.mxu0 0
      %1894 = vmatpush1.bf16.msra.mxu0 0
      %1895 = vmatprep.subr.bf16.mxu0 0
      %1896 = vmatpush1.bf16.msra.mxu0 0
      %1897 = vmatprep.subr.bf16.mxu0 0
      %1898 = vmatpush1.bf16.msra.mxu0 0
      %1899 = vmatprep.subr.bf16.mxu0 0
      %1900 = vmatpush1.bf16.msra.mxu0 0
      %1901 = vmatprep.subr.bf16.mxu0 %v1885
      %1902 = vmatpush1.bf16.msra.mxu0 %v1882
      %1903 = vmatprep.subr.bf16.mxu0 0
      %1904 = vmatpush2.bf16.msra.mxu0 0
      %1905 = vmatprep.subr.bf16.mxu0 0
      %1906 = vmatpush2.bf16.msra.mxu0 0
      %1907 = vmatprep.subr.bf16.mxu0 0
      %1908 = vmatpush2.bf16.msra.mxu0 0
      %1909 = vmatprep.subr.bf16.mxu0 0
      %1910 = vmatpush2.bf16.msra.mxu0 0
      %1911 = vmatprep.subr.bf16.mxu0 0
      %1912 = vmatpush2.bf16.msra.mxu0 0
      %1913 = vmatprep.subr.bf16.mxu0 0
      %1914 = vmatpush2.bf16.msra.mxu0 0
      %1915 = vmatprep.subr.bf16.mxu0 0
      %1916 = vmatpush2.bf16.msra.mxu0 0
      %1917 = vmatprep.subr.bf16.mxu0 0
      %1918 = vmatpush2.bf16.msra.mxu0 0
      %1919 = vmatprep.mubr.bf16.mxu0 0
      %1920 = vmatmul.mubr.bf16.gmra.mxu0 %v301
      %v1921 = vpop.f32.mrf.mxu0
      %v1922 = vadd.f32 0.0, %v1921
      %v1923 = vpop.f32.mrf.mxu0
      %v1924 = vadd.f32 0.0, %v1923
      %v1925 = vpop.f32.mrf.mxu0
      %v1926 = vpop.f32.mrf.mxu0
      %1927 = vdwg.mxu0
      %v1928 = vpack.c.bf16 %v1922, %v1922
      %v1929 = vpack.c.bf16 %v1924, %v1924
      %v1930 = vld [vmem:[%s4] sm:$0xff]
      %v1931 = vld [vmem:[%s4 + $0x8] sm:$0xff]
      %v1932 = vld [vmem:[%s4 + $0x10] sm:$0xff]
      %v1933 = vld [vmem:[%s4 + $0x18] sm:$0xff]
      %v1934 = vld [vmem:[%s4 + $0x20] sm:$0xff]
      %v1935 = vld [vmem:[%s4 + $0x28] sm:$0xff]
      %v1936 = vld [vmem:[%s4 + $0x30] sm:$0xff]
      %v1937 = vld [vmem:[%s4 + $0x38] sm:$0xff]
      %v1938 = vld [vmem:[%s4 + $0x40] sm:$0xff]
      %v1939 = vld [vmem:[%s4 + $0x48] sm:$0xff]
      %v1940 = vld [vmem:[%s4 + $0x50] sm:$0xff]
      %v1941 = vld [vmem:[%s4 + $0x58] sm:$0xff]
      %v1942 = vld [vmem:[%s4 + $0x60] sm:$0xff]
      %v1943 = vld [vmem:[%s4 + $0x68] sm:$0xff]
      %v1944 = vld [vmem:[%s4 + $0x70] sm:$0xff]
      %v1945 = vld [vmem:[%s4 + $0x78] sm:$0xff]
      %v1946 = vld [vmem:[%s4 + $0x80] sm:$0xff]
      %v1947 = vld [vmem:[%s4 + $0x88] sm:$0xff]
      %v1948 = vld [vmem:[%s4 + $0x90] sm:$0xff]
      %v1949 = vld [vmem:[%s4 + $0x98] sm:$0xff]
      %v1950 = vld [vmem:[%s4 + $0xa0] sm:$0xff]
      %v1951 = vld [vmem:[%s4 + $0xa8] sm:$0xff]
      %v1952 = vld [vmem:[%s4 + $0xb0] sm:$0xff]
      %v1953 = vld [vmem:[%s4 + $0xb8] sm:$0xff]
      %v1954 = vld [vmem:[%s4 + $0xc0] sm:$0xff]
      %v1955 = vld [vmem:[%s4 + $0xc8] sm:$0xff]
      %v1956 = vld [vmem:[%s4 + $0xd0] sm:$0xff]
      %v1957 = vld [vmem:[%s4 + $0xd8] sm:$0xff]
      %v1958 = vld [vmem:[%s4 + $0xe0] sm:$0xff]
      %v1959 = vld [vmem:[%s4 + $0xe8] sm:$0xff]
      %v1960 = vld [vmem:[%s4 + $0xf0] sm:$0xff]
      %v1961 = vld [vmem:[%s4 + $0xf8] sm:$0xff]
      %s1962 = scalar_lea.vmem %s4, 256
      %v1963 = vld [vmem:[%s1962] sm:$0xff]
      %v1964 = vld [vmem:[%s1962 + $0x8] sm:$0xff]
      %v1965 = vld [vmem:[%s1962 + $0x10] sm:$0xff]
      %v1966 = vld [vmem:[%s1962 + $0x18] sm:$0xff]
      %v1967 = vld [vmem:[%s1962 + $0x20] sm:$0xff]
      %v1968 = vld [vmem:[%s1962 + $0x28] sm:$0xff]
      %v1969 = vld [vmem:[%s1962 + $0x30] sm:$0xff]
      %v1970 = vld [vmem:[%s1962 + $0x38] sm:$0xff]
      %v1971 = vld [vmem:[%s1962 + $0x40] sm:$0xff]
      %v1972 = vld [vmem:[%s1962 + $0x48] sm:$0xff]
      %v1973 = vld [vmem:[%s1962 + $0x50] sm:$0xff]
      %v1974 = vld [vmem:[%s1962 + $0x58] sm:$0xff]
      %v1975 = vld [vmem:[%s1962 + $0x60] sm:$0xff]
      %v1976 = vld [vmem:[%s1962 + $0x68] sm:$0xff]
      %v1977 = vld [vmem:[%s1962 + $0x70] sm:$0xff]
      %v1978 = vld [vmem:[%s1962 + $0x78] sm:$0xff]
      %v1979 = vld [vmem:[%s1962 + $0x80] sm:$0xff]
      %v1980 = vld [vmem:[%s1962 + $0x88] sm:$0xff]
      %v1981 = vld [vmem:[%s1962 + $0x90] sm:$0xff]
      %v1982 = vld [vmem:[%s1962 + $0x98] sm:$0xff]
      %v1983 = vld [vmem:[%s1962 + $0xa0] sm:$0xff]
      %v1984 = vld [vmem:[%s1962 + $0xa8] sm:$0xff]
      %v1985 = vld [vmem:[%s1962 + $0xb0] sm:$0xff]
      %v1986 = vld [vmem:[%s1962 + $0xb8] sm:$0xff]
      %v1987 = vld [vmem:[%s1962 + $0xc0] sm:$0xff]
      %v1988 = vld [vmem:[%s1962 + $0xc8] sm:$0xff]
      %v1989 = vld [vmem:[%s1962 + $0xd0] sm:$0xff]
      %v1990 = vld [vmem:[%s1962 + $0xd8] sm:$0xff]
      %v1991 = vld [vmem:[%s1962 + $0xe0] sm:$0xff]
      %v1992 = vld [vmem:[%s1962 + $0xe8] sm:$0xff]
      %v1993 = vld [vmem:[%s1962 + $0xf0] sm:$0xff]
      %v1994 = vld [vmem:[%s1962 + $0xf8] sm:$0xff]
      %v2027 = vunpack.c.l.b16 %v1963
      %v2028 = vunpack.c.h.b16 %v1963
      %v2029 = vunpack.c.l.b16 %v1964
      %v2030 = vunpack.c.h.b16 %v1964
      %v2031 = vunpack.c.l.b16 %v1965
      %v2032 = vunpack.c.h.b16 %v1965
      %v2033 = vunpack.c.l.b16 %v1966
      %v2034 = vunpack.c.h.b16 %v1966
      %v2035 = vunpack.c.l.b16 %v1967
      %v2036 = vunpack.c.h.b16 %v1967
      %v2037 = vunpack.c.l.b16 %v1968
      %v2038 = vunpack.c.h.b16 %v1968
      %v2039 = vunpack.c.l.b16 %v1969
      %v2040 = vunpack.c.h.b16 %v1969
      %v2041 = vunpack.c.l.b16 %v1970
      %v2042 = vunpack.c.h.b16 %v1970
      %v2043 = vunpack.c.l.b16 %v1971
      %v2044 = vunpack.c.h.b16 %v1971
      %v2045 = vunpack.c.l.b16 %v1972
      %v2046 = vunpack.c.h.b16 %v1972
      %v2047 = vunpack.c.l.b16 %v1973
      %v2048 = vunpack.c.h.b16 %v1973
      %v2049 = vunpack.c.l.b16 %v1974
      %v2050 = vunpack.c.h.b16 %v1974
      %v2051 = vunpack.c.l.b16 %v1975
      %v2052 = vunpack.c.h.b16 %v1975
      %v2053 = vunpack.c.l.b16 %v1976
      %v2054 = vunpack.c.h.b16 %v1976
      %v2055 = vunpack.c.l.b16 %v1977
      %v2056 = vunpack.c.h.b16 %v1977
      %v2057 = vunpack.c.l.b16 %v1978
      %v2058 = vunpack.c.h.b16 %v1978
      %v2059 = vunpack.c.l.b16 %v1979
      %v2060 = vunpack.c.h.b16 %v1979
      %v2061 = vunpack.c.l.b16 %v1980
      %v2062 = vunpack.c.h.b16 %v1980
      %v2063 = vunpack.c.l.b16 %v1981
      %v2064 = vunpack.c.h.b16 %v1981
      %v2065 = vunpack.c.l.b16 %v1982
      %v2066 = vunpack.c.h.b16 %v1982
      %v2067 = vunpack.c.l.b16 %v1983
      %v2068 = vunpack.c.h.b16 %v1983
      %v2069 = vunpack.c.l.b16 %v1984
      %v2070 = vunpack.c.h.b16 %v1984
      %v2071 = vunpack.c.l.b16 %v1985
      %v2072 = vunpack.c.h.b16 %v1985
      %v2073 = vunpack.c.l.b16 %v1986
      %v2074 = vunpack.c.h.b16 %v1986
      %v2075 = vunpack.c.l.b16 %v1987
      %v2076 = vunpack.c.h.b16 %v1987
      %v2077 = vunpack.c.l.b16 %v1988
      %v2078 = vunpack.c.h.b16 %v1988
      %v2079 = vunpack.c.l.b16 %v1989
      %v2080 = vunpack.c.h.b16 %v1989
      %v2081 = vunpack.c.l.b16 %v1990
      %v2082 = vunpack.c.h.b16 %v1990
      %v2083 = vunpack.c.l.b16 %v1991
      %v2084 = vunpack.c.h.b16 %v1991
      %v2085 = vunpack.c.l.b16 %v1992
      %v2086 = vunpack.c.h.b16 %v1992
      %v2087 = vunpack.c.l.b16 %v1993
      %v2088 = vunpack.c.h.b16 %v1993
      %v2089 = vunpack.c.l.b16 %v1994
      %v2090 = vunpack.c.h.b16 %v1994
      %v2091 = vpack.c.b16 %v2029, %v2027
      %v2092 = vpack.c.b16 %v2030, %v2028
      %v2093 = vpack.c.b16 %v2033, %v2031
      %v2094 = vpack.c.b16 %v2034, %v2032
      %v2095 = vpack.c.b16 %v2037, %v2035
      %v2096 = vpack.c.b16 %v2038, %v2036
      %v2097 = vpack.c.b16 %v2041, %v2039
      %v2098 = vpack.c.b16 %v2042, %v2040
      %v2099 = vpack.c.b16 %v2045, %v2043
      %v2100 = vpack.c.b16 %v2046, %v2044
      %v2101 = vpack.c.b16 %v2049, %v2047
      %v2102 = vpack.c.b16 %v2050, %v2048
      %v2103 = vpack.c.b16 %v2053, %v2051
      %v2104 = vpack.c.b16 %v2054, %v2052
      %v2105 = vpack.c.b16 %v2057, %v2055
      %v2106 = vpack.c.b16 %v2058, %v2056
      %v2107 = vpack.c.b16 %v2061, %v2059
      %v2108 = vpack.c.b16 %v2062, %v2060
      %v2109 = vpack.c.b16 %v2065, %v2063
      %v2110 = vpack.c.b16 %v2066, %v2064
      %v2111 = vpack.c.b16 %v2069, %v2067
      %v2112 = vpack.c.b16 %v2070, %v2068
      %v2113 = vpack.c.b16 %v2073, %v2071
      %v2114 = vpack.c.b16 %v2074, %v2072
      %v2115 = vpack.c.b16 %v2077, %v2075
      %v2116 = vpack.c.b16 %v2078, %v2076
      %v2117 = vpack.c.b16 %v2081, %v2079
      %v2118 = vpack.c.b16 %v2082, %v2080
      %v2119 = vpack.c.b16 %v2085, %v2083
      %v2120 = vpack.c.b16 %v2086, %v2084
      %v2121 = vpack.c.b16 %v2089, %v2087
      %v2122 = vpack.c.b16 %v2090, %v2088
      %2155 = vmatprep.subr.bf16.mxu0 %v2106
      %2156 = vmatpush1.bf16.msra.mxu0 %v2105
      %2157 = vmatprep.subr.bf16.mxu0 %v2104
      %2158 = vmatpush1.bf16.msra.mxu0 %v2103
      %2159 = vmatprep.subr.bf16.mxu0 %v2102
      %2160 = vmatpush1.bf16.msra.mxu0 %v2101
      %2161 = vmatprep.subr.bf16.mxu0 %v2100
      %2162 = vmatpush1.bf16.msra.mxu0 %v2099
      %2163 = vmatprep.subr.bf16.mxu0 %v2098
      %2164 = vmatpush1.bf16.msra.mxu0 %v2097
      %2165 = vmatprep.subr.bf16.mxu0 %v2096
      %2166 = vmatpush1.bf16.msra.mxu0 %v2095
      %2167 = vmatprep.subr.bf16.mxu0 %v2094
      %2168 = vmatpush1.bf16.msra.mxu0 %v2093
      %2169 = vmatprep.subr.bf16.mxu0 %v2092
      %2170 = vmatpush1.bf16.msra.mxu0 %v2091
      %2171 = vmatprep.subr.bf16.mxu0 %v2122
      %2172 = vmatpush2.bf16.msra.mxu0 %v2121
      %2173 = vmatprep.subr.bf16.mxu0 %v2120
      %2174 = vmatpush2.bf16.msra.mxu0 %v2119
      %2175 = vmatprep.subr.bf16.mxu0 %v2118
      %2176 = vmatpush2.bf16.msra.mxu0 %v2117
      %2177 = vmatprep.subr.bf16.mxu0 %v2116
      %2178 = vmatpush2.bf16.msra.mxu0 %v2115
      %2179 = vmatprep.subr.bf16.mxu0 %v2114
      %2180 = vmatpush2.bf16.msra.mxu0 %v2113
      %2181 = vmatprep.subr.bf16.mxu0 %v2112
      %2182 = vmatpush2.bf16.msra.mxu0 %v2111
      %2183 = vmatprep.subr.bf16.mxu0 %v2110
      %2184 = vmatpush2.bf16.msra.mxu0 %v2109
      %2185 = vmatprep.subr.bf16.mxu0 %v2108
      %2186 = vmatpush2.bf16.msra.mxu0 %v2107
      %2187 = vmatprep.mubr.bf16.mxu0 %v1880
      %2188 = vmatmul.mubr.bf16.gmra.mxu0 %v1879
      %v2189 = vpop.f32.mrf.mxu0
      %v2190 = vadd.f32 0.0, %v2189
      %v2191 = vpop.f32.mrf.mxu0
      %v2192 = vadd.f32 0.0, %v2191
      %v2193 = vpop.f32.mrf.mxu0
      %v2194 = vpop.f32.mrf.mxu0
      %2195 = vdwg.mxu0
      %v2228 = vunpack.c.l.b16 %v1930
      %v2229 = vunpack.c.h.b16 %v1930
      %v2230 = vunpack.c.l.b16 %v1931
      %v2231 = vunpack.c.h.b16 %v1931
      %v2232 = vunpack.c.l.b16 %v1932
      %v2233 = vunpack.c.h.b16 %v1932
      %v2234 = vunpack.c.l.b16 %v1933
      %v2235 = vunpack.c.h.b16 %v1933
      %v2236 = vunpack.c.l.b16 %v1934
      %v2237 = vunpack.c.h.b16 %v1934
      %v2238 = vunpack.c.l.b16 %v1935
      %v2239 = vunpack.c.h.b16 %v1935
      %v2240 = vunpack.c.l.b16 %v1936
      %v2241 = vunpack.c.h.b16 %v1936
      %v2242 = vunpack.c.l.b16 %v1937
      %v2243 = vunpack.c.h.b16 %v1937
      %v2244 = vunpack.c.l.b16 %v1938
      %v2245 = vunpack.c.h.b16 %v1938
      %v2246 = vunpack.c.l.b16 %v1939
      %v2247 = vunpack.c.h.b16 %v1939
      %v2248 = vunpack.c.l.b16 %v1940
      %v2249 = vunpack.c.h.b16 %v1940
      %v2250 = vunpack.c.l.b16 %v1941
      %v2251 = vunpack.c.h.b16 %v1941
      %v2252 = vunpack.c.l.b16 %v1942
      %v2253 = vunpack.c.h.b16 %v1942
      %v2254 = vunpack.c.l.b16 %v1943
      %v2255 = vunpack.c.h.b16 %v1943
      %v2256 = vunpack.c.l.b16 %v1944
      %v2257 = vunpack.c.h.b16 %v1944
      %v2258 = vunpack.c.l.b16 %v1945
      %v2259 = vunpack.c.h.b16 %v1945
      %v2260 = vunpack.c.l.b16 %v1946
      %v2261 = vunpack.c.h.b16 %v1946
      %v2262 = vunpack.c.l.b16 %v1947
      %v2263 = vunpack.c.h.b16 %v1947
      %v2264 = vunpack.c.l.b16 %v1948
      %v2265 = vunpack.c.h.b16 %v1948
      %v2266 = vunpack.c.l.b16 %v1949
      %v2267 = vunpack.c.h.b16 %v1949
      %v2268 = vunpack.c.l.b16 %v1950
      %v2269 = vunpack.c.h.b16 %v1950
      %v2270 = vunpack.c.l.b16 %v1951
      %v2271 = vunpack.c.h.b16 %v1951
      %v2272 = vunpack.c.l.b16 %v1952
      %v2273 = vunpack.c.h.b16 %v1952
      %v2274 = vunpack.c.l.b16 %v1953
      %v2275 = vunpack.c.h.b16 %v1953
      %v2276 = vunpack.c.l.b16 %v1954
      %v2277 = vunpack.c.h.b16 %v1954
      %v2278 = vunpack.c.l.b16 %v1955
      %v2279 = vunpack.c.h.b16 %v1955
      %v2280 = vunpack.c.l.b16 %v1956
      %v2281 = vunpack.c.h.b16 %v1956
      %v2282 = vunpack.c.l.b16 %v1957
      %v2283 = vunpack.c.h.b16 %v1957
      %v2284 = vunpack.c.l.b16 %v1958
      %v2285 = vunpack.c.h.b16 %v1958
      %v2286 = vunpack.c.l.b16 %v1959
      %v2287 = vunpack.c.h.b16 %v1959
      %v2288 = vunpack.c.l.b16 %v1960
      %v2289 = vunpack.c.h.b16 %v1960
      %v2290 = vunpack.c.l.b16 %v1961
      %v2291 = vunpack.c.h.b16 %v1961
      %v2292 = vpack.c.b16 %v2230, %v2228
      %v2293 = vpack.c.b16 %v2231, %v2229
      %v2294 = vpack.c.b16 %v2234, %v2232
      %v2295 = vpack.c.b16 %v2235, %v2233
      %v2296 = vpack.c.b16 %v2238, %v2236
      %v2297 = vpack.c.b16 %v2239, %v2237
      %v2298 = vpack.c.b16 %v2242, %v2240
      %v2299 = vpack.c.b16 %v2243, %v2241
      %v2300 = vpack.c.b16 %v2246, %v2244
      %v2301 = vpack.c.b16 %v2247, %v2245
      %v2302 = vpack.c.b16 %v2250, %v2248
      %v2303 = vpack.c.b16 %v2251, %v2249
      %v2304 = vpack.c.b16 %v2254, %v2252
      %v2305 = vpack.c.b16 %v2255, %v2253
      %v2306 = vpack.c.b16 %v2258, %v2256
      %v2307 = vpack.c.b16 %v2259, %v2257
      %v2308 = vpack.c.b16 %v2262, %v2260
      %v2309 = vpack.c.b16 %v2263, %v2261
      %v2310 = vpack.c.b16 %v2266, %v2264
      %v2311 = vpack.c.b16 %v2267, %v2265
      %v2312 = vpack.c.b16 %v2270, %v2268
      %v2313 = vpack.c.b16 %v2271, %v2269
      %v2314 = vpack.c.b16 %v2274, %v2272
      %v2315 = vpack.c.b16 %v2275, %v2273
      %v2316 = vpack.c.b16 %v2278, %v2276
      %v2317 = vpack.c.b16 %v2279, %v2277
      %v2318 = vpack.c.b16 %v2282, %v2280
      %v2319 = vpack.c.b16 %v2283, %v2281
      %v2320 = vpack.c.b16 %v2286, %v2284
      %v2321 = vpack.c.b16 %v2287, %v2285
      %v2322 = vpack.c.b16 %v2290, %v2288
      %v2323 = vpack.c.b16 %v2291, %v2289
      %2356 = vmatprep.subr.bf16.mxu0 %v2307
      %2357 = vmatpush1.bf16.msra.mxu0 %v2306
      %2358 = vmatprep.subr.bf16.mxu0 %v2305
      %2359 = vmatpush1.bf16.msra.mxu0 %v2304
      %2360 = vmatprep.subr.bf16.mxu0 %v2303
      %2361 = vmatpush1.bf16.msra.mxu0 %v2302
      %2362 = vmatprep.subr.bf16.mxu0 %v2301
      %2363 = vmatpush1.bf16.msra.mxu0 %v2300
      %2364 = vmatprep.subr.bf16.mxu0 %v2299
      %2365 = vmatpush1.bf16.msra.mxu0 %v2298
      %2366 = vmatprep.subr.bf16.mxu0 %v2297
      %2367 = vmatpush1.bf16.msra.mxu0 %v2296
      %2368 = vmatprep.subr.bf16.mxu0 %v2295
      %2369 = vmatpush1.bf16.msra.mxu0 %v2294
      %2370 = vmatprep.subr.bf16.mxu0 %v2293
      %2371 = vmatpush1.bf16.msra.mxu0 %v2292
      %2372 = vmatprep.subr.bf16.mxu0 %v2323
      %2373 = vmatpush2.bf16.msra.mxu0 %v2322
      %2374 = vmatprep.subr.bf16.mxu0 %v2321
      %2375 = vmatpush2.bf16.msra.mxu0 %v2320
      %2376 = vmatprep.subr.bf16.mxu0 %v2319
      %2377 = vmatpush2.bf16.msra.mxu0 %v2318
      %2378 = vmatprep.subr.bf16.mxu0 %v2317
      %2379 = vmatpush2.bf16.msra.mxu0 %v2316
      %2380 = vmatprep.subr.bf16.mxu0 %v2315
      %2381 = vmatpush2.bf16.msra.mxu0 %v2314
      %2382 = vmatprep.subr.bf16.mxu0 %v2313
      %2383 = vmatpush2.bf16.msra.mxu0 %v2312
      %2384 = vmatprep.subr.bf16.mxu0 %v2311
      %2385 = vmatpush2.bf16.msra.mxu0 %v2310
      %2386 = vmatprep.subr.bf16.mxu0 %v2309
      %2387 = vmatpush2.bf16.msra.mxu0 %v2308
      %2388 = vmatprep.mubr.bf16.mxu0 %v1929
      %2389 = vmatmul.mubr.bf16.gmra.mxu0 %v1928
      %v2390 = vpop.f32.mrf.mxu0
      %v2391 = vadd.f32 %v2190, %v2390
      %v2392 = vpop.f32.mrf.mxu0
      %v2393 = vadd.f32 %v2192, %v2392
      %v2394 = vpop.f32.mrf.mxu0
      %v2395 = vpop.f32.mrf.mxu0
      %2396 = vdwg.mxu0
      %2397 = vmatprep.subr.bf16.mxu0 0
      %2398 = vmatpush1.bf16.msra.mxu0 0
      %2399 = vmatprep.subr.bf16.mxu0 0
      %2400 = vmatpush1.bf16.msra.mxu0 0
      %2401 = vmatprep.subr.bf16.mxu0 0
      %2402 = vmatpush1.bf16.msra.mxu0 0
      %2403 = vmatprep.subr.bf16.mxu0 0
      %2404 = vmatpush1.bf16.msra.mxu0 0
      %2405 = vmatprep.subr.bf16.mxu0 0
      %2406 = vmatpush1.bf16.msra.mxu0 0
      %2407 = vmatprep.subr.bf16.mxu0 0
      %2408 = vmatpush1.bf16.msra.mxu0 0
      %2409 = vmatprep.subr.bf16.mxu0 0
      %2410 = vmatpush1.bf16.msra.mxu0 0
      %2411 = vmatprep.subr.bf16.mxu0 %v1885
      %2412 = vmatpush1.bf16.msra.mxu0 %v1882
      %2413 = vmatprep.subr.bf16.mxu0 0
      %2414 = vmatpush2.bf16.msra.mxu0 0
      %2415 = vmatprep.subr.bf16.mxu0 0
      %2416 = vmatpush2.bf16.msra.mxu0 0
      %2417 = vmatprep.subr.bf16.mxu0 0
      %2418 = vmatpush2.bf16.msra.mxu0 0
      %2419 = vmatprep.subr.bf16.mxu0 0
      %2420 = vmatpush2.bf16.msra.mxu0 0
      %2421 = vmatprep.subr.bf16.mxu0 0
      %2422 = vmatpush2.bf16.msra.mxu0 0
      %2423 = vmatprep.subr.bf16.mxu0 0
      %2424 = vmatpush2.bf16.msra.mxu0 0
      %2425 = vmatprep.subr.bf16.mxu0 0
      %2426 = vmatpush2.bf16.msra.mxu0 0
      %2427 = vmatprep.subr.bf16.mxu0 0
      %2428 = vmatpush2.bf16.msra.mxu0 0
      %2429 = vmatprep.mubr.bf16.mxu0 0
      %2430 = vmatmul.mubr.bf16.gmra.mxu0 %v1436
      %v2431 = vpop.f32.mrf.mxu0
      %v2432 = vadd.f32 0.0, %v2431
      %v2433 = vpop.f32.mrf.mxu0
      %v2434 = vadd.f32 0.0, %v2433
      %v2435 = vpop.f32.mrf.mxu0
      %v2436 = vpop.f32.mrf.mxu0
      %2437 = vdwg.mxu0
      %v2438 = vpack.c.bf16 %v2432, %v2432
      %v2439 = vpack.c.bf16 %v2434, %v2434
      %s2440 = scalar_lea.vmem %s4, 512
      %v2441 = vld [vmem:[%s2440] sm:$0xff]
      %v2442 = vld [vmem:[%s2440 + $0x8] sm:$0xff]
      %v2443 = vld [vmem:[%s2440 + $0x10] sm:$0xff]
      %v2444 = vld [vmem:[%s2440 + $0x18] sm:$0xff]
      %v2445 = vld [vmem:[%s2440 + $0x20] sm:$0xff]
      %v2446 = vld [vmem:[%s2440 + $0x28] sm:$0xff]
      %v2447 = vld [vmem:[%s2440 + $0x30] sm:$0xff]
      %v2448 = vld [vmem:[%s2440 + $0x38] sm:$0xff]
      %v2449 = vld [vmem:[%s2440 + $0x40] sm:$0xff]
      %v2450 = vld [vmem:[%s2440 + $0x48] sm:$0xff]
      %v2451 = vld [vmem:[%s2440 + $0x50] sm:$0xff]
      %v2452 = vld [vmem:[%s2440 + $0x58] sm:$0xff]
      %v2453 = vld [vmem:[%s2440 + $0x60] sm:$0xff]
      %v2454 = vld [vmem:[%s2440 + $0x68] sm:$0xff]
      %v2455 = vld [vmem:[%s2440 + $0x70] sm:$0xff]
      %v2456 = vld [vmem:[%s2440 + $0x78] sm:$0xff]
      %v2457 = vld [vmem:[%s2440 + $0x80] sm:$0xff]
      %v2458 = vld [vmem:[%s2440 + $0x88] sm:$0xff]
      %v2459 = vld [vmem:[%s2440 + $0x90] sm:$0xff]
      %v2460 = vld [vmem:[%s2440 + $0x98] sm:$0xff]
      %v2461 = vld [vmem:[%s2440 + $0xa0] sm:$0xff]
      %v2462 = vld [vmem:[%s2440 + $0xa8] sm:$0xff]
      %v2463 = vld [vmem:[%s2440 + $0xb0] sm:$0xff]
      %v2464 = vld [vmem:[%s2440 + $0xb8] sm:$0xff]
      %v2465 = vld [vmem:[%s2440 + $0xc0] sm:$0xff]
      %v2466 = vld [vmem:[%s2440 + $0xc8] sm:$0xff]
      %v2467 = vld [vmem:[%s2440 + $0xd0] sm:$0xff]
      %v2468 = vld [vmem:[%s2440 + $0xd8] sm:$0xff]
      %v2469 = vld [vmem:[%s2440 + $0xe0] sm:$0xff]
      %v2470 = vld [vmem:[%s2440 + $0xe8] sm:$0xff]
      %v2471 = vld [vmem:[%s2440 + $0xf0] sm:$0xff]
      %v2472 = vld [vmem:[%s2440 + $0xf8] sm:$0xff]
      %v2505 = vunpack.c.l.b16 %v2441
      %v2506 = vunpack.c.h.b16 %v2441
      %v2507 = vunpack.c.l.b16 %v2442
      %v2508 = vunpack.c.h.b16 %v2442
      %v2509 = vunpack.c.l.b16 %v2443
      %v2510 = vunpack.c.h.b16 %v2443
      %v2511 = vunpack.c.l.b16 %v2444
      %v2512 = vunpack.c.h.b16 %v2444
      %v2513 = vunpack.c.l.b16 %v2445
      %v2514 = vunpack.c.h.b16 %v2445
      %v2515 = vunpack.c.l.b16 %v2446
      %v2516 = vunpack.c.h.b16 %v2446
      %v2517 = vunpack.c.l.b16 %v2447
      %v2518 = vunpack.c.h.b16 %v2447
      %v2519 = vunpack.c.l.b16 %v2448
      %v2520 = vunpack.c.h.b16 %v2448
      %v2521 = vunpack.c.l.b16 %v2449
      %v2522 = vunpack.c.h.b16 %v2449
      %v2523 = vunpack.c.l.b16 %v2450
      %v2524 = vunpack.c.h.b16 %v2450
      %v2525 = vunpack.c.l.b16 %v2451
      %v2526 = vunpack.c.h.b16 %v2451
      %v2527 = vunpack.c.l.b16 %v2452
      %v2528 = vunpack.c.h.b16 %v2452
      %v2529 = vunpack.c.l.b16 %v2453
      %v2530 = vunpack.c.h.b16 %v2453
      %v2531 = vunpack.c.l.b16 %v2454
      %v2532 = vunpack.c.h.b16 %v2454
      %v2533 = vunpack.c.l.b16 %v2455
      %v2534 = vunpack.c.h.b16 %v2455
      %v2535 = vunpack.c.l.b16 %v2456
      %v2536 = vunpack.c.h.b16 %v2456
      %v2537 = vunpack.c.l.b16 %v2457
      %v2538 = vunpack.c.h.b16 %v2457
      %v2539 = vunpack.c.l.b16 %v2458
      %v2540 = vunpack.c.h.b16 %v2458
      %v2541 = vunpack.c.l.b16 %v2459
      %v2542 = vunpack.c.h.b16 %v2459
      %v2543 = vunpack.c.l.b16 %v2460
      %v2544 = vunpack.c.h.b16 %v2460
      %v2545 = vunpack.c.l.b16 %v2461
      %v2546 = vunpack.c.h.b16 %v2461
      %v2547 = vunpack.c.l.b16 %v2462
      %v2548 = vunpack.c.h.b16 %v2462
      %v2549 = vunpack.c.l.b16 %v2463
      %v2550 = vunpack.c.h.b16 %v2463
      %v2551 = vunpack.c.l.b16 %v2464
      %v2552 = vunpack.c.h.b16 %v2464
      %v2553 = vunpack.c.l.b16 %v2465
      %v2554 = vunpack.c.h.b16 %v2465
      %v2555 = vunpack.c.l.b16 %v2466
      %v2556 = vunpack.c.h.b16 %v2466
      %v2557 = vunpack.c.l.b16 %v2467
      %v2558 = vunpack.c.h.b16 %v2467
      %v2559 = vunpack.c.l.b16 %v2468
      %v2560 = vunpack.c.h.b16 %v2468
      %v2561 = vunpack.c.l.b16 %v2469
      %v2562 = vunpack.c.h.b16 %v2469
      %v2563 = vunpack.c.l.b16 %v2470
      %v2564 = vunpack.c.h.b16 %v2470
      %v2565 = vunpack.c.l.b16 %v2471
      %v2566 = vunpack.c.h.b16 %v2471
      %v2567 = vunpack.c.l.b16 %v2472
      %v2568 = vunpack.c.h.b16 %v2472
      %v2569 = vpack.c.b16 %v2507, %v2505
      %v2570 = vpack.c.b16 %v2508, %v2506
      %v2571 = vpack.c.b16 %v2511, %v2509
      %v2572 = vpack.c.b16 %v2512, %v2510
      %v2573 = vpack.c.b16 %v2515, %v2513
      %v2574 = vpack.c.b16 %v2516, %v2514
      %v2575 = vpack.c.b16 %v2519, %v2517
      %v2576 = vpack.c.b16 %v2520, %v2518
      %v2577 = vpack.c.b16 %v2523, %v2521
      %v2578 = vpack.c.b16 %v2524, %v2522
      %v2579 = vpack.c.b16 %v2527, %v2525
      %v2580 = vpack.c.b16 %v2528, %v2526
      %v2581 = vpack.c.b16 %v2531, %v2529
      %v2582 = vpack.c.b16 %v2532, %v2530
      %v2583 = vpack.c.b16 %v2535, %v2533
      %v2584 = vpack.c.b16 %v2536, %v2534
      %v2585 = vpack.c.b16 %v2539, %v2537
      %v2586 = vpack.c.b16 %v2540, %v2538
      %v2587 = vpack.c.b16 %v2543, %v2541
      %v2588 = vpack.c.b16 %v2544, %v2542
      %v2589 = vpack.c.b16 %v2547, %v2545
      %v2590 = vpack.c.b16 %v2548, %v2546
      %v2591 = vpack.c.b16 %v2551, %v2549
      %v2592 = vpack.c.b16 %v2552, %v2550
      %v2593 = vpack.c.b16 %v2555, %v2553
      %v2594 = vpack.c.b16 %v2556, %v2554
      %v2595 = vpack.c.b16 %v2559, %v2557
      %v2596 = vpack.c.b16 %v2560, %v2558
      %v2597 = vpack.c.b16 %v2563, %v2561
      %v2598 = vpack.c.b16 %v2564, %v2562
      %v2599 = vpack.c.b16 %v2567, %v2565
      %v2600 = vpack.c.b16 %v2568, %v2566
      %2633 = vmatprep.subr.bf16.mxu0 %v2584
      %2634 = vmatpush1.bf16.msra.mxu0 %v2583
      %2635 = vmatprep.subr.bf16.mxu0 %v2582
      %2636 = vmatpush1.bf16.msra.mxu0 %v2581
      %2637 = vmatprep.subr.bf16.mxu0 %v2580
      %2638 = vmatpush1.bf16.msra.mxu0 %v2579
      %2639 = vmatprep.subr.bf16.mxu0 %v2578
      %2640 = vmatpush1.bf16.msra.mxu0 %v2577
      %2641 = vmatprep.subr.bf16.mxu0 %v2576
      %2642 = vmatpush1.bf16.msra.mxu0 %v2575
      %2643 = vmatprep.subr.bf16.mxu0 %v2574
      %2644 = vmatpush1.bf16.msra.mxu0 %v2573
      %2645 = vmatprep.subr.bf16.mxu0 %v2572
      %2646 = vmatpush1.bf16.msra.mxu0 %v2571
      %2647 = vmatprep.subr.bf16.mxu0 %v2570
      %2648 = vmatpush1.bf16.msra.mxu0 %v2569
      %2649 = vmatprep.subr.bf16.mxu0 %v2600
      %2650 = vmatpush2.bf16.msra.mxu0 %v2599
      %2651 = vmatprep.subr.bf16.mxu0 %v2598
      %2652 = vmatpush2.bf16.msra.mxu0 %v2597
      %2653 = vmatprep.subr.bf16.mxu0 %v2596
      %2654 = vmatpush2.bf16.msra.mxu0 %v2595
      %2655 = vmatprep.subr.bf16.mxu0 %v2594
      %2656 = vmatpush2.bf16.msra.mxu0 %v2593
      %2657 = vmatprep.subr.bf16.mxu0 %v2592
      %2658 = vmatpush2.bf16.msra.mxu0 %v2591
      %2659 = vmatprep.subr.bf16.mxu0 %v2590
      %2660 = vmatpush2.bf16.msra.mxu0 %v2589
      %2661 = vmatprep.subr.bf16.mxu0 %v2588
      %2662 = vmatpush2.bf16.msra.mxu0 %v2587
      %2663 = vmatprep.subr.bf16.mxu0 %v2586
      %2664 = vmatpush2.bf16.msra.mxu0 %v2585
      %2665 = vmatprep.mubr.bf16.mxu0 %v2439
      %2666 = vmatmul.mubr.bf16.gmra.mxu0 %v2438
      %v2667 = vpop.f32.mrf.mxu0
      %v2668 = vadd.f32 0.0, %v2667
      %v2669 = vpop.f32.mrf.mxu0
      %v2670 = vadd.f32 0.0, %v2669
      %v2671 = vpop.f32.mrf.mxu0
      %v2672 = vpop.f32.mrf.mxu0
      %2673 = vdwg.mxu0
      %v2674 = vadd.f32 %v2391, %v2668
      %v2675 = vadd.f32 %v2393, %v2670
      %v2676 = vlaneseq
      %v2677 = vshrl.u32 %v2676, 7
      %v2678 = vsub.s32 2, %v2677
      %v2679 = vrot.slane %v1855, %v2678
      %v2680 = vlaneseq
      %v2681 = vshrl.u32 %v2680, 7
      %v2682 = vsub.s32 2, %v2681
      %v2683 = vrot.slane %v1856, %v2682
      %v2684 = vmul.f32 %v2674, %v2679
      %v2685 = vmul.f32 %v2675, %v2683
      %v2686 = vlaneseq
      %v2687 = vshrl.u32 %v2686, 7
      %v2688 = vsub.s32 3, %v2687
      %v2689 = vrot.slane %v1855, %v2688
      %v2690 = vlaneseq
      %v2691 = vshrl.u32 %v2690, 7
      %v2692 = vsub.s32 3, %v2691
      %v2693 = vrot.slane %v1856, %v2692
      %v2694 = vadd.f32 %v2684, %v2689
      %v2695 = vadd.f32 %v2685, %v2693
      %v2696 = vmax.f32 %v2694, 0.0
      %v2697 = vmax.f32 %v2695, 0.0
      %v2698 = vpack.c.bf16 %v2696, %v2696
      %v2699 = vpack.c.bf16 %v2697, %v2697
      %v2701 = vsel %vm303, %v2698, 0
      %v2704 = vsel %vm303, %v2699, 0
      %2706 = vmatprep.subr.bf16.mxu0 0
      %2707 = vmatpush1.bf16.msra.mxu0 0
      %2708 = vmatprep.subr.bf16.mxu0 0
      %2709 = vmatpush1.bf16.msra.mxu0 0
      %2710 = vmatprep.subr.bf16.mxu0 0
      %2711 = vmatpush1.bf16.msra.mxu0 0
      %2712 = vmatprep.subr.bf16.mxu0 0
      %2713 = vmatpush1.bf16.msra.mxu0 0
      %2714 = vmatprep.subr.bf16.mxu0 0
      %2715 = vmatpush1.bf16.msra.mxu0 0
      %2716 = vmatprep.subr.bf16.mxu0 0
      %2717 = vmatpush1.bf16.msra.mxu0 0
      %2718 = vmatprep.subr.bf16.mxu0 0
      %2719 = vmatpush1.bf16.msra.mxu0 0
      %2720 = vmatprep.subr.bf16.mxu0 %v2704
      %2721 = vmatpush1.bf16.msra.mxu0 %v2701
      %2722 = vmatprep.subr.bf16.mxu0 0
      %2723 = vmatpush2.bf16.msra.mxu0 0
      %2724 = vmatprep.subr.bf16.mxu0 0
      %2725 = vmatpush2.bf16.msra.mxu0 0
      %2726 = vmatprep.subr.bf16.mxu0 0
      %2727 = vmatpush2.bf16.msra.mxu0 0
      %2728 = vmatprep.subr.bf16.mxu0 0
      %2729 = vmatpush2.bf16.msra.mxu0 0
      %2730 = vmatprep.subr.bf16.mxu0 0
      %2731 = vmatpush2.bf16.msra.mxu0 0
      %2732 = vmatprep.subr.bf16.mxu0 0
      %2733 = vmatpush2.bf16.msra.mxu0 0
      %2734 = vmatprep.subr.bf16.mxu0 0
      %2735 = vmatpush2.bf16.msra.mxu0 0
      %2736 = vmatprep.subr.bf16.mxu0 0
      %2737 = vmatpush2.bf16.msra.mxu0 0
      %2738 = vmatprep.mubr.bf16.mxu0 0
      %2739 = vmatmul.mubr.bf16.gmra.mxu0 %v301
      %v2740 = vpop.f32.mrf.mxu0
      %v2741 = vadd.f32 0.0, %v2740
      %v2742 = vpop.f32.mrf.mxu0
      %v2743 = vadd.f32 0.0, %v2742
      %v2744 = vpop.f32.mrf.mxu0
      %v2745 = vpop.f32.mrf.mxu0
      %2746 = vdwg.mxu0
      %v2747 = vpack.c.bf16 %v2741, %v2741
      %v2748 = vpack.c.bf16 %v2743, %v2743
      %v2749 = vld [vmem:[%s5] sm:$0xff]
      %v2750 = vld [vmem:[%s5 + $0x8] sm:$0xff]
      %v2751 = vld [vmem:[%s5 + $0x10] sm:$0xff]
      %v2752 = vld [vmem:[%s5 + $0x18] sm:$0xff]
      %v2753 = vld [vmem:[%s5 + $0x20] sm:$0xff]
      %v2754 = vld [vmem:[%s5 + $0x28] sm:$0xff]
      %v2755 = vld [vmem:[%s5 + $0x30] sm:$0xff]
      %v2756 = vld [vmem:[%s5 + $0x38] sm:$0xff]
      %v2757 = vld [vmem:[%s5 + $0x40] sm:$0xff]
      %v2758 = vld [vmem:[%s5 + $0x48] sm:$0xff]
      %v2759 = vld [vmem:[%s5 + $0x50] sm:$0xff]
      %v2760 = vld [vmem:[%s5 + $0x58] sm:$0xff]
      %v2761 = vld [vmem:[%s5 + $0x60] sm:$0xff]
      %v2762 = vld [vmem:[%s5 + $0x68] sm:$0xff]
      %v2763 = vld [vmem:[%s5 + $0x70] sm:$0xff]
      %v2764 = vld [vmem:[%s5 + $0x78] sm:$0xff]
      %v2765 = vld [vmem:[%s5 + $0x80] sm:$0xff]
      %v2766 = vld [vmem:[%s5 + $0x88] sm:$0xff]
      %v2767 = vld [vmem:[%s5 + $0x90] sm:$0xff]
      %v2768 = vld [vmem:[%s5 + $0x98] sm:$0xff]
      %v2769 = vld [vmem:[%s5 + $0xa0] sm:$0xff]
      %v2770 = vld [vmem:[%s5 + $0xa8] sm:$0xff]
      %v2771 = vld [vmem:[%s5 + $0xb0] sm:$0xff]
      %v2772 = vld [vmem:[%s5 + $0xb8] sm:$0xff]
      %v2773 = vld [vmem:[%s5 + $0xc0] sm:$0xff]
      %v2774 = vld [vmem:[%s5 + $0xc8] sm:$0xff]
      %v2775 = vld [vmem:[%s5 + $0xd0] sm:$0xff]
      %v2776 = vld [vmem:[%s5 + $0xd8] sm:$0xff]
      %v2777 = vld [vmem:[%s5 + $0xe0] sm:$0xff]
      %v2778 = vld [vmem:[%s5 + $0xe8] sm:$0xff]
      %v2779 = vld [vmem:[%s5 + $0xf0] sm:$0xff]
      %v2780 = vld [vmem:[%s5 + $0xf8] sm:$0xff]
      %s2781 = scalar_lea.vmem %s5, 256
      %v2782 = vld [vmem:[%s2781] sm:$0xff]
      %v2783 = vld [vmem:[%s2781 + $0x8] sm:$0xff]
      %v2784 = vld [vmem:[%s2781 + $0x10] sm:$0xff]
      %v2785 = vld [vmem:[%s2781 + $0x18] sm:$0xff]
      %v2786 = vld [vmem:[%s2781 + $0x20] sm:$0xff]
      %v2787 = vld [vmem:[%s2781 + $0x28] sm:$0xff]
      %v2788 = vld [vmem:[%s2781 + $0x30] sm:$0xff]
      %v2789 = vld [vmem:[%s2781 + $0x38] sm:$0xff]
      %v2790 = vld [vmem:[%s2781 + $0x40] sm:$0xff]
      %v2791 = vld [vmem:[%s2781 + $0x48] sm:$0xff]
      %v2792 = vld [vmem:[%s2781 + $0x50] sm:$0xff]
      %v2793 = vld [vmem:[%s2781 + $0x58] sm:$0xff]
      %v2794 = vld [vmem:[%s2781 + $0x60] sm:$0xff]
      %v2795 = vld [vmem:[%s2781 + $0x68] sm:$0xff]
      %v2796 = vld [vmem:[%s2781 + $0x70] sm:$0xff]
      %v2797 = vld [vmem:[%s2781 + $0x78] sm:$0xff]
      %v2798 = vld [vmem:[%s2781 + $0x80] sm:$0xff]
      %v2799 = vld [vmem:[%s2781 + $0x88] sm:$0xff]
      %v2800 = vld [vmem:[%s2781 + $0x90] sm:$0xff]
      %v2801 = vld [vmem:[%s2781 + $0x98] sm:$0xff]
      %v2802 = vld [vmem:[%s2781 + $0xa0] sm:$0xff]
      %v2803 = vld [vmem:[%s2781 + $0xa8] sm:$0xff]
      %v2804 = vld [vmem:[%s2781 + $0xb0] sm:$0xff]
      %v2805 = vld [vmem:[%s2781 + $0xb8] sm:$0xff]
      %v2806 = vld [vmem:[%s2781 + $0xc0] sm:$0xff]
      %v2807 = vld [vmem:[%s2781 + $0xc8] sm:$0xff]
      %v2808 = vld [vmem:[%s2781 + $0xd0] sm:$0xff]
      %v2809 = vld [vmem:[%s2781 + $0xd8] sm:$0xff]
      %v2810 = vld [vmem:[%s2781 + $0xe0] sm:$0xff]
      %v2811 = vld [vmem:[%s2781 + $0xe8] sm:$0xff]
      %v2812 = vld [vmem:[%s2781 + $0xf0] sm:$0xff]
      %v2813 = vld [vmem:[%s2781 + $0xf8] sm:$0xff]
      %v2846 = vunpack.c.l.b16 %v2782
      %v2847 = vunpack.c.h.b16 %v2782
      %v2848 = vunpack.c.l.b16 %v2783
      %v2849 = vunpack.c.h.b16 %v2783
      %v2850 = vunpack.c.l.b16 %v2784
      %v2851 = vunpack.c.h.b16 %v2784
      %v2852 = vunpack.c.l.b16 %v2785
      %v2853 = vunpack.c.h.b16 %v2785
      %v2854 = vunpack.c.l.b16 %v2786
      %v2855 = vunpack.c.h.b16 %v2786
      %v2856 = vunpack.c.l.b16 %v2787
      %v2857 = vunpack.c.h.b16 %v2787
      %v2858 = vunpack.c.l.b16 %v2788
      %v2859 = vunpack.c.h.b16 %v2788
      %v2860 = vunpack.c.l.b16 %v2789
      %v2861 = vunpack.c.h.b16 %v2789
      %v2862 = vunpack.c.l.b16 %v2790
      %v2863 = vunpack.c.h.b16 %v2790
      %v2864 = vunpack.c.l.b16 %v2791
      %v2865 = vunpack.c.h.b16 %v2791
      %v2866 = vunpack.c.l.b16 %v2792
      %v2867 = vunpack.c.h.b16 %v2792
      %v2868 = vunpack.c.l.b16 %v2793
      %v2869 = vunpack.c.h.b16 %v2793
      %v2870 = vunpack.c.l.b16 %v2794
      %v2871 = vunpack.c.h.b16 %v2794
      %v2872 = vunpack.c.l.b16 %v2795
      %v2873 = vunpack.c.h.b16 %v2795
      %v2874 = vunpack.c.l.b16 %v2796
      %v2875 = vunpack.c.h.b16 %v2796
      %v2876 = vunpack.c.l.b16 %v2797
      %v2877 = vunpack.c.h.b16 %v2797
      %v2878 = vunpack.c.l.b16 %v2798
      %v2879 = vunpack.c.h.b16 %v2798
      %v2880 = vunpack.c.l.b16 %v2799
      %v2881 = vunpack.c.h.b16 %v2799
      %v2882 = vunpack.c.l.b16 %v2800
      %v2883 = vunpack.c.h.b16 %v2800
      %v2884 = vunpack.c.l.b16 %v2801
      %v2885 = vunpack.c.h.b16 %v2801
      %v2886 = vunpack.c.l.b16 %v2802
      %v2887 = vunpack.c.h.b16 %v2802
      %v2888 = vunpack.c.l.b16 %v2803
      %v2889 = vunpack.c.h.b16 %v2803
      %v2890 = vunpack.c.l.b16 %v2804
      %v2891 = vunpack.c.h.b16 %v2804
      %v2892 = vunpack.c.l.b16 %v2805
      %v2893 = vunpack.c.h.b16 %v2805
      %v2894 = vunpack.c.l.b16 %v2806
      %v2895 = vunpack.c.h.b16 %v2806
      %v2896 = vunpack.c.l.b16 %v2807
      %v2897 = vunpack.c.h.b16 %v2807
      %v2898 = vunpack.c.l.b16 %v2808
      %v2899 = vunpack.c.h.b16 %v2808
      %v2900 = vunpack.c.l.b16 %v2809
      %v2901 = vunpack.c.h.b16 %v2809
      %v2902 = vunpack.c.l.b16 %v2810
      %v2903 = vunpack.c.h.b16 %v2810
      %v2904 = vunpack.c.l.b16 %v2811
      %v2905 = vunpack.c.h.b16 %v2811
      %v2906 = vunpack.c.l.b16 %v2812
      %v2907 = vunpack.c.h.b16 %v2812
      %v2908 = vunpack.c.l.b16 %v2813
      %v2909 = vunpack.c.h.b16 %v2813
      %v2910 = vpack.c.b16 %v2848, %v2846
      %v2911 = vpack.c.b16 %v2849, %v2847
      %v2912 = vpack.c.b16 %v2852, %v2850
      %v2913 = vpack.c.b16 %v2853, %v2851
      %v2914 = vpack.c.b16 %v2856, %v2854
      %v2915 = vpack.c.b16 %v2857, %v2855
      %v2916 = vpack.c.b16 %v2860, %v2858
      %v2917 = vpack.c.b16 %v2861, %v2859
      %v2918 = vpack.c.b16 %v2864, %v2862
      %v2919 = vpack.c.b16 %v2865, %v2863
      %v2920 = vpack.c.b16 %v2868, %v2866
      %v2921 = vpack.c.b16 %v2869, %v2867
      %v2922 = vpack.c.b16 %v2872, %v2870
      %v2923 = vpack.c.b16 %v2873, %v2871
      %v2924 = vpack.c.b16 %v2876, %v2874
      %v2925 = vpack.c.b16 %v2877, %v2875
      %v2926 = vpack.c.b16 %v2880, %v2878
      %v2927 = vpack.c.b16 %v2881, %v2879
      %v2928 = vpack.c.b16 %v2884, %v2882
      %v2929 = vpack.c.b16 %v2885, %v2883
      %v2930 = vpack.c.b16 %v2888, %v2886
      %v2931 = vpack.c.b16 %v2889, %v2887
      %v2932 = vpack.c.b16 %v2892, %v2890
      %v2933 = vpack.c.b16 %v2893, %v2891
      %v2934 = vpack.c.b16 %v2896, %v2894
      %v2935 = vpack.c.b16 %v2897, %v2895
      %v2936 = vpack.c.b16 %v2900, %v2898
      %v2937 = vpack.c.b16 %v2901, %v2899
      %v2938 = vpack.c.b16 %v2904, %v2902
      %v2939 = vpack.c.b16 %v2905, %v2903
      %v2940 = vpack.c.b16 %v2908, %v2906
      %v2941 = vpack.c.b16 %v2909, %v2907
      %2974 = vmatprep.subr.bf16.mxu0 %v2925
      %2975 = vmatpush1.bf16.msra.mxu0 %v2924
      %2976 = vmatprep.subr.bf16.mxu0 %v2923
      %2977 = vmatpush1.bf16.msra.mxu0 %v2922
      %2978 = vmatprep.subr.bf16.mxu0 %v2921
      %2979 = vmatpush1.bf16.msra.mxu0 %v2920
      %2980 = vmatprep.subr.bf16.mxu0 %v2919
      %2981 = vmatpush1.bf16.msra.mxu0 %v2918
      %2982 = vmatprep.subr.bf16.mxu0 %v2917
      %2983 = vmatpush1.bf16.msra.mxu0 %v2916
      %2984 = vmatprep.subr.bf16.mxu0 %v2915
      %2985 = vmatpush1.bf16.msra.mxu0 %v2914
      %2986 = vmatprep.subr.bf16.mxu0 %v2913
      %2987 = vmatpush1.bf16.msra.mxu0 %v2912
      %2988 = vmatprep.subr.bf16.mxu0 %v2911
      %2989 = vmatpush1.bf16.msra.mxu0 %v2910
      %2990 = vmatprep.subr.bf16.mxu0 %v2941
      %2991 = vmatpush2.bf16.msra.mxu0 %v2940
      %2992 = vmatprep.subr.bf16.mxu0 %v2939
      %2993 = vmatpush2.bf16.msra.mxu0 %v2938
      %2994 = vmatprep.subr.bf16.mxu0 %v2937
      %2995 = vmatpush2.bf16.msra.mxu0 %v2936
      %2996 = vmatprep.subr.bf16.mxu0 %v2935
      %2997 = vmatpush2.bf16.msra.mxu0 %v2934
      %2998 = vmatprep.subr.bf16.mxu0 %v2933
      %2999 = vmatpush2.bf16.msra.mxu0 %v2932
      %3000 = vmatprep.subr.bf16.mxu0 %v2931
      %3001 = vmatpush2.bf16.msra.mxu0 %v2930
      %3002 = vmatprep.subr.bf16.mxu0 %v2929
      %3003 = vmatpush2.bf16.msra.mxu0 %v2928
      %3004 = vmatprep.subr.bf16.mxu0 %v2927
      %3005 = vmatpush2.bf16.msra.mxu0 %v2926
      %3006 = vmatprep.mubr.bf16.mxu0 %v2699
      %3007 = vmatmul.mubr.bf16.gmra.mxu0 %v2698
      %v3008 = vpop.f32.mrf.mxu0
      %v3009 = vadd.f32 0.0, %v3008
      %v3010 = vpop.f32.mrf.mxu0
      %v3011 = vadd.f32 0.0, %v3010
      %v3012 = vpop.f32.mrf.mxu0
      %v3013 = vpop.f32.mrf.mxu0
      %3014 = vdwg.mxu0
      %v3047 = vunpack.c.l.b16 %v2749
      %v3048 = vunpack.c.h.b16 %v2749
      %v3049 = vunpack.c.l.b16 %v2750
      %v3050 = vunpack.c.h.b16 %v2750
      %v3051 = vunpack.c.l.b16 %v2751
      %v3052 = vunpack.c.h.b16 %v2751
      %v3053 = vunpack.c.l.b16 %v2752
      %v3054 = vunpack.c.h.b16 %v2752
      %v3055 = vunpack.c.l.b16 %v2753
      %v3056 = vunpack.c.h.b16 %v2753
      %v3057 = vunpack.c.l.b16 %v2754
      %v3058 = vunpack.c.h.b16 %v2754
      %v3059 = vunpack.c.l.b16 %v2755
      %v3060 = vunpack.c.h.b16 %v2755
      %v3061 = vunpack.c.l.b16 %v2756
      %v3062 = vunpack.c.h.b16 %v2756
      %v3063 = vunpack.c.l.b16 %v2757
      %v3064 = vunpack.c.h.b16 %v2757
      %v3065 = vunpack.c.l.b16 %v2758
      %v3066 = vunpack.c.h.b16 %v2758
      %v3067 = vunpack.c.l.b16 %v2759
      %v3068 = vunpack.c.h.b16 %v2759
      %v3069 = vunpack.c.l.b16 %v2760
      %v3070 = vunpack.c.h.b16 %v2760
      %v3071 = vunpack.c.l.b16 %v2761
      %v3072 = vunpack.c.h.b16 %v2761
      %v3073 = vunpack.c.l.b16 %v2762
      %v3074 = vunpack.c.h.b16 %v2762
      %v3075 = vunpack.c.l.b16 %v2763
      %v3076 = vunpack.c.h.b16 %v2763
      %v3077 = vunpack.c.l.b16 %v2764
      %v3078 = vunpack.c.h.b16 %v2764
      %v3079 = vunpack.c.l.b16 %v2765
      %v3080 = vunpack.c.h.b16 %v2765
      %v3081 = vunpack.c.l.b16 %v2766
      %v3082 = vunpack.c.h.b16 %v2766
      %v3083 = vunpack.c.l.b16 %v2767
      %v3084 = vunpack.c.h.b16 %v2767
      %v3085 = vunpack.c.l.b16 %v2768
      %v3086 = vunpack.c.h.b16 %v2768
      %v3087 = vunpack.c.l.b16 %v2769
      %v3088 = vunpack.c.h.b16 %v2769
      %v3089 = vunpack.c.l.b16 %v2770
      %v3090 = vunpack.c.h.b16 %v2770
      %v3091 = vunpack.c.l.b16 %v2771
      %v3092 = vunpack.c.h.b16 %v2771
      %v3093 = vunpack.c.l.b16 %v2772
      %v3094 = vunpack.c.h.b16 %v2772
      %v3095 = vunpack.c.l.b16 %v2773
      %v3096 = vunpack.c.h.b16 %v2773
      %v3097 = vunpack.c.l.b16 %v2774
      %v3098 = vunpack.c.h.b16 %v2774
      %v3099 = vunpack.c.l.b16 %v2775
      %v3100 = vunpack.c.h.b16 %v2775
      %v3101 = vunpack.c.l.b16 %v2776
      %v3102 = vunpack.c.h.b16 %v2776
      %v3103 = vunpack.c.l.b16 %v2777
      %v3104 = vunpack.c.h.b16 %v2777
      %v3105 = vunpack.c.l.b16 %v2778
      %v3106 = vunpack.c.h.b16 %v2778
      %v3107 = vunpack.c.l.b16 %v2779
      %v3108 = vunpack.c.h.b16 %v2779
      %v3109 = vunpack.c.l.b16 %v2780
      %v3110 = vunpack.c.h.b16 %v2780
      %v3111 = vpack.c.b16 %v3049, %v3047
      %v3112 = vpack.c.b16 %v3050, %v3048
      %v3113 = vpack.c.b16 %v3053, %v3051
      %v3114 = vpack.c.b16 %v3054, %v3052
      %v3115 = vpack.c.b16 %v3057, %v3055
      %v3116 = vpack.c.b16 %v3058, %v3056
      %v3117 = vpack.c.b16 %v3061, %v3059
      %v3118 = vpack.c.b16 %v3062, %v3060
      %v3119 = vpack.c.b16 %v3065, %v3063
      %v3120 = vpack.c.b16 %v3066, %v3064
      %v3121 = vpack.c.b16 %v3069, %v3067
      %v3122 = vpack.c.b16 %v3070, %v3068
      %v3123 = vpack.c.b16 %v3073, %v3071
      %v3124 = vpack.c.b16 %v3074, %v3072
      %v3125 = vpack.c.b16 %v3077, %v3075
      %v3126 = vpack.c.b16 %v3078, %v3076
      %v3127 = vpack.c.b16 %v3081, %v3079
      %v3128 = vpack.c.b16 %v3082, %v3080
      %v3129 = vpack.c.b16 %v3085, %v3083
      %v3130 = vpack.c.b16 %v3086, %v3084
      %v3131 = vpack.c.b16 %v3089, %v3087
      %v3132 = vpack.c.b16 %v3090, %v3088
      %v3133 = vpack.c.b16 %v3093, %v3091
      %v3134 = vpack.c.b16 %v3094, %v3092
      %v3135 = vpack.c.b16 %v3097, %v3095
      %v3136 = vpack.c.b16 %v3098, %v3096
      %v3137 = vpack.c.b16 %v3101, %v3099
      %v3138 = vpack.c.b16 %v3102, %v3100
      %v3139 = vpack.c.b16 %v3105, %v3103
      %v3140 = vpack.c.b16 %v3106, %v3104
      %v3141 = vpack.c.b16 %v3109, %v3107
      %v3142 = vpack.c.b16 %v3110, %v3108
      %3175 = vmatprep.subr.bf16.mxu0 %v3126
      %3176 = vmatpush1.bf16.msra.mxu0 %v3125
      %3177 = vmatprep.subr.bf16.mxu0 %v3124
      %3178 = vmatpush1.bf16.msra.mxu0 %v3123
      %3179 = vmatprep.subr.bf16.mxu0 %v3122
      %3180 = vmatpush1.bf16.msra.mxu0 %v3121
      %3181 = vmatprep.subr.bf16.mxu0 %v3120
      %3182 = vmatpush1.bf16.msra.mxu0 %v3119
      %3183 = vmatprep.subr.bf16.mxu0 %v3118
      %3184 = vmatpush1.bf16.msra.mxu0 %v3117
      %3185 = vmatprep.subr.bf16.mxu0 %v3116
      %3186 = vmatpush1.bf16.msra.mxu0 %v3115
      %3187 = vmatprep.subr.bf16.mxu0 %v3114
      %3188 = vmatpush1.bf16.msra.mxu0 %v3113
      %3189 = vmatprep.subr.bf16.mxu0 %v3112
      %3190 = vmatpush1.bf16.msra.mxu0 %v3111
      %3191 = vmatprep.subr.bf16.mxu0 %v3142
      %3192 = vmatpush2.bf16.msra.mxu0 %v3141
      %3193 = vmatprep.subr.bf16.mxu0 %v3140
      %3194 = vmatpush2.bf16.msra.mxu0 %v3139
      %3195 = vmatprep.subr.bf16.mxu0 %v3138
      %3196 = vmatpush2.bf16.msra.mxu0 %v3137
      %3197 = vmatprep.subr.bf16.mxu0 %v3136
      %3198 = vmatpush2.bf16.msra.mxu0 %v3135
      %3199 = vmatprep.subr.bf16.mxu0 %v3134
      %3200 = vmatpush2.bf16.msra.mxu0 %v3133
      %3201 = vmatprep.subr.bf16.mxu0 %v3132
      %3202 = vmatpush2.bf16.msra.mxu0 %v3131
      %3203 = vmatprep.subr.bf16.mxu0 %v3130
      %3204 = vmatpush2.bf16.msra.mxu0 %v3129
      %3205 = vmatprep.subr.bf16.mxu0 %v3128
      %3206 = vmatpush2.bf16.msra.mxu0 %v3127
      %3207 = vmatprep.mubr.bf16.mxu0 %v2748
      %3208 = vmatmul.mubr.bf16.gmra.mxu0 %v2747
      %v3209 = vpop.f32.mrf.mxu0
      %v3210 = vadd.f32 %v3009, %v3209
      %v3211 = vpop.f32.mrf.mxu0
      %v3212 = vadd.f32 %v3011, %v3211
      %v3213 = vpop.f32.mrf.mxu0
      %v3214 = vpop.f32.mrf.mxu0
      %3215 = vdwg.mxu0
      %3216 = vmatprep.subr.bf16.mxu0 0
      %3217 = vmatpush1.bf16.msra.mxu0 0
      %3218 = vmatprep.subr.bf16.mxu0 0
      %3219 = vmatpush1.bf16.msra.mxu0 0
      %3220 = vmatprep.subr.bf16.mxu0 0
      %3221 = vmatpush1.bf16.msra.mxu0 0
      %3222 = vmatprep.subr.bf16.mxu0 0
      %3223 = vmatpush1.bf16.msra.mxu0 0
      %3224 = vmatprep.subr.bf16.mxu0 0
      %3225 = vmatpush1.bf16.msra.mxu0 0
      %3226 = vmatprep.subr.bf16.mxu0 0
      %3227 = vmatpush1.bf16.msra.mxu0 0
      %3228 = vmatprep.subr.bf16.mxu0 0
      %3229 = vmatpush1.bf16.msra.mxu0 0
      %3230 = vmatprep.subr.bf16.mxu0 %v2704
      %3231 = vmatpush1.bf16.msra.mxu0 %v2701
      %3232 = vmatprep.subr.bf16.mxu0 0
      %3233 = vmatpush2.bf16.msra.mxu0 0
      %3234 = vmatprep.subr.bf16.mxu0 0
      %3235 = vmatpush2.bf16.msra.mxu0 0
      %3236 = vmatprep.subr.bf16.mxu0 0
      %3237 = vmatpush2.bf16.msra.mxu0 0
      %3238 = vmatprep.subr.bf16.mxu0 0
      %3239 = vmatpush2.bf16.msra.mxu0 0
      %3240 = vmatprep.subr.bf16.mxu0 0
      %3241 = vmatpush2.bf16.msra.mxu0 0
      %3242 = vmatprep.subr.bf16.mxu0 0
      %3243 = vmatpush2.bf16.msra.mxu0 0
      %3244 = vmatprep.subr.bf16.mxu0 0
      %3245 = vmatpush2.bf16.msra.mxu0 0
      %3246 = vmatprep.subr.bf16.mxu0 0
      %3247 = vmatpush2.bf16.msra.mxu0 0
      %3248 = vmatprep.mubr.bf16.mxu0 0
      %3249 = vmatmul.mubr.bf16.gmra.mxu0 %v1436
      %v3250 = vpop.f32.mrf.mxu0
      %v3251 = vadd.f32 0.0, %v3250
      %v3252 = vpop.f32.mrf.mxu0
      %v3253 = vadd.f32 0.0, %v3252
      %v3254 = vpop.f32.mrf.mxu0
      %v3255 = vpop.f32.mrf.mxu0
      %3256 = vdwg.mxu0
      %v3257 = vpack.c.bf16 %v3251, %v3251
      %v3258 = vpack.c.bf16 %v3253, %v3253
      %s3259 = scalar_lea.vmem %s5, 512
      %v3260 = vld [vmem:[%s3259] sm:$0xff]
      %v3261 = vld [vmem:[%s3259 + $0x8] sm:$0xff]
      %v3262 = vld [vmem:[%s3259 + $0x10] sm:$0xff]
      %v3263 = vld [vmem:[%s3259 + $0x18] sm:$0xff]
      %v3264 = vld [vmem:[%s3259 + $0x20] sm:$0xff]
      %v3265 = vld [vmem:[%s3259 + $0x28] sm:$0xff]
      %v3266 = vld [vmem:[%s3259 + $0x30] sm:$0xff]
      %v3267 = vld [vmem:[%s3259 + $0x38] sm:$0xff]
      %v3268 = vld [vmem:[%s3259 + $0x40] sm:$0xff]
      %v3269 = vld [vmem:[%s3259 + $0x48] sm:$0xff]
      %v3270 = vld [vmem:[%s3259 + $0x50] sm:$0xff]
      %v3271 = vld [vmem:[%s3259 + $0x58] sm:$0xff]
      %v3272 = vld [vmem:[%s3259 + $0x60] sm:$0xff]
      %v3273 = vld [vmem:[%s3259 + $0x68] sm:$0xff]
      %v3274 = vld [vmem:[%s3259 + $0x70] sm:$0xff]
      %v3275 = vld [vmem:[%s3259 + $0x78] sm:$0xff]
      %v3276 = vld [vmem:[%s3259 + $0x80] sm:$0xff]
      %v3277 = vld [vmem:[%s3259 + $0x88] sm:$0xff]
      %v3278 = vld [vmem:[%s3259 + $0x90] sm:$0xff]
      %v3279 = vld [vmem:[%s3259 + $0x98] sm:$0xff]
      %v3280 = vld [vmem:[%s3259 + $0xa0] sm:$0xff]
      %v3281 = vld [vmem:[%s3259 + $0xa8] sm:$0xff]
      %v3282 = vld [vmem:[%s3259 + $0xb0] sm:$0xff]
      %v3283 = vld [vmem:[%s3259 + $0xb8] sm:$0xff]
      %v3284 = vld [vmem:[%s3259 + $0xc0] sm:$0xff]
      %v3285 = vld [vmem:[%s3259 + $0xc8] sm:$0xff]
      %v3286 = vld [vmem:[%s3259 + $0xd0] sm:$0xff]
      %v3287 = vld [vmem:[%s3259 + $0xd8] sm:$0xff]
      %v3288 = vld [vmem:[%s3259 + $0xe0] sm:$0xff]
      %v3289 = vld [vmem:[%s3259 + $0xe8] sm:$0xff]
      %v3290 = vld [vmem:[%s3259 + $0xf0] sm:$0xff]
      %v3291 = vld [vmem:[%s3259 + $0xf8] sm:$0xff]
      %v3324 = vunpack.c.l.b16 %v3260
      %v3325 = vunpack.c.h.b16 %v3260
      %v3326 = vunpack.c.l.b16 %v3261
      %v3327 = vunpack.c.h.b16 %v3261
      %v3328 = vunpack.c.l.b16 %v3262
      %v3329 = vunpack.c.h.b16 %v3262
      %v3330 = vunpack.c.l.b16 %v3263
      %v3331 = vunpack.c.h.b16 %v3263
      %v3332 = vunpack.c.l.b16 %v3264
      %v3333 = vunpack.c.h.b16 %v3264
      %v3334 = vunpack.c.l.b16 %v3265
      %v3335 = vunpack.c.h.b16 %v3265
      %v3336 = vunpack.c.l.b16 %v3266
      %v3337 = vunpack.c.h.b16 %v3266
      %v3338 = vunpack.c.l.b16 %v3267
      %v3339 = vunpack.c.h.b16 %v3267
      %v3340 = vunpack.c.l.b16 %v3268
      %v3341 = vunpack.c.h.b16 %v3268
      %v3342 = vunpack.c.l.b16 %v3269
      %v3343 = vunpack.c.h.b16 %v3269
      %v3344 = vunpack.c.l.b16 %v3270
      %v3345 = vunpack.c.h.b16 %v3270
      %v3346 = vunpack.c.l.b16 %v3271
      %v3347 = vunpack.c.h.b16 %v3271
      %v3348 = vunpack.c.l.b16 %v3272
      %v3349 = vunpack.c.h.b16 %v3272
      %v3350 = vunpack.c.l.b16 %v3273
      %v3351 = vunpack.c.h.b16 %v3273
      %v3352 = vunpack.c.l.b16 %v3274
      %v3353 = vunpack.c.h.b16 %v3274
      %v3354 = vunpack.c.l.b16 %v3275
      %v3355 = vunpack.c.h.b16 %v3275
      %v3356 = vunpack.c.l.b16 %v3276
      %v3357 = vunpack.c.h.b16 %v3276
      %v3358 = vunpack.c.l.b16 %v3277
      %v3359 = vunpack.c.h.b16 %v3277
      %v3360 = vunpack.c.l.b16 %v3278
      %v3361 = vunpack.c.h.b16 %v3278
      %v3362 = vunpack.c.l.b16 %v3279
      %v3363 = vunpack.c.h.b16 %v3279
      %v3364 = vunpack.c.l.b16 %v3280
      %v3365 = vunpack.c.h.b16 %v3280
      %v3366 = vunpack.c.l.b16 %v3281
      %v3367 = vunpack.c.h.b16 %v3281
      %v3368 = vunpack.c.l.b16 %v3282
      %v3369 = vunpack.c.h.b16 %v3282
      %v3370 = vunpack.c.l.b16 %v3283
      %v3371 = vunpack.c.h.b16 %v3283
      %v3372 = vunpack.c.l.b16 %v3284
      %v3373 = vunpack.c.h.b16 %v3284
      %v3374 = vunpack.c.l.b16 %v3285
      %v3375 = vunpack.c.h.b16 %v3285
      %v3376 = vunpack.c.l.b16 %v3286
      %v3377 = vunpack.c.h.b16 %v3286
      %v3378 = vunpack.c.l.b16 %v3287
      %v3379 = vunpack.c.h.b16 %v3287
      %v3380 = vunpack.c.l.b16 %v3288
      %v3381 = vunpack.c.h.b16 %v3288
      %v3382 = vunpack.c.l.b16 %v3289
      %v3383 = vunpack.c.h.b16 %v3289
      %v3384 = vunpack.c.l.b16 %v3290
      %v3385 = vunpack.c.h.b16 %v3290
      %v3386 = vunpack.c.l.b16 %v3291
      %v3387 = vunpack.c.h.b16 %v3291
      %v3388 = vpack.c.b16 %v3326, %v3324
      %v3389 = vpack.c.b16 %v3327, %v3325
      %v3390 = vpack.c.b16 %v3330, %v3328
      %v3391 = vpack.c.b16 %v3331, %v3329
      %v3392 = vpack.c.b16 %v3334, %v3332
      %v3393 = vpack.c.b16 %v3335, %v3333
      %v3394 = vpack.c.b16 %v3338, %v3336
      %v3395 = vpack.c.b16 %v3339, %v3337
      %v3396 = vpack.c.b16 %v3342, %v3340
      %v3397 = vpack.c.b16 %v3343, %v3341
      %v3398 = vpack.c.b16 %v3346, %v3344
      %v3399 = vpack.c.b16 %v3347, %v3345
      %v3400 = vpack.c.b16 %v3350, %v3348
      %v3401 = vpack.c.b16 %v3351, %v3349
      %v3402 = vpack.c.b16 %v3354, %v3352
      %v3403 = vpack.c.b16 %v3355, %v3353
      %v3404 = vpack.c.b16 %v3358, %v3356
      %v3405 = vpack.c.b16 %v3359, %v3357
      %v3406 = vpack.c.b16 %v3362, %v3360
      %v3407 = vpack.c.b16 %v3363, %v3361
      %v3408 = vpack.c.b16 %v3366, %v3364
      %v3409 = vpack.c.b16 %v3367, %v3365
      %v3410 = vpack.c.b16 %v3370, %v3368
      %v3411 = vpack.c.b16 %v3371, %v3369
      %v3412 = vpack.c.b16 %v3374, %v3372
      %v3413 = vpack.c.b16 %v3375, %v3373
      %v3414 = vpack.c.b16 %v3378, %v3376
      %v3415 = vpack.c.b16 %v3379, %v3377
      %v3416 = vpack.c.b16 %v3382, %v3380
      %v3417 = vpack.c.b16 %v3383, %v3381
      %v3418 = vpack.c.b16 %v3386, %v3384
      %v3419 = vpack.c.b16 %v3387, %v3385
      %3452 = vmatprep.subr.bf16.mxu0 %v3403
      %3453 = vmatpush1.bf16.msra.mxu0 %v3402
      %3454 = vmatprep.subr.bf16.mxu0 %v3401
      %3455 = vmatpush1.bf16.msra.mxu0 %v3400
      %3456 = vmatprep.subr.bf16.mxu0 %v3399
      %3457 = vmatpush1.bf16.msra.mxu0 %v3398
      %3458 = vmatprep.subr.bf16.mxu0 %v3397
      %3459 = vmatpush1.bf16.msra.mxu0 %v3396
      %3460 = vmatprep.subr.bf16.mxu0 %v3395
      %3461 = vmatpush1.bf16.msra.mxu0 %v3394
      %3462 = vmatprep.subr.bf16.mxu0 %v3393
      %3463 = vmatpush1.bf16.msra.mxu0 %v3392
      %3464 = vmatprep.subr.bf16.mxu0 %v3391
      %3465 = vmatpush1.bf16.msra.mxu0 %v3390
      %3466 = vmatprep.subr.bf16.mxu0 %v3389
      %3467 = vmatpush1.bf16.msra.mxu0 %v3388
      %3468 = vmatprep.subr.bf16.mxu0 %v3419
      %3469 = vmatpush2.bf16.msra.mxu0 %v3418
      %3470 = vmatprep.subr.bf16.mxu0 %v3417
      %3471 = vmatpush2.bf16.msra.mxu0 %v3416
      %3472 = vmatprep.subr.bf16.mxu0 %v3415
      %3473 = vmatpush2.bf16.msra.mxu0 %v3414
      %3474 = vmatprep.subr.bf16.mxu0 %v3413
      %3475 = vmatpush2.bf16.msra.mxu0 %v3412
      %3476 = vmatprep.subr.bf16.mxu0 %v3411
      %3477 = vmatpush2.bf16.msra.mxu0 %v3410
      %3478 = vmatprep.subr.bf16.mxu0 %v3409
      %3479 = vmatpush2.bf16.msra.mxu0 %v3408
      %3480 = vmatprep.subr.bf16.mxu0 %v3407
      %3481 = vmatpush2.bf16.msra.mxu0 %v3406
      %3482 = vmatprep.subr.bf16.mxu0 %v3405
      %3483 = vmatpush2.bf16.msra.mxu0 %v3404
      %3484 = vmatprep.mubr.bf16.mxu0 %v3258
      %3485 = vmatmul.mubr.bf16.gmra.mxu0 %v3257
      %v3486 = vpop.f32.mrf.mxu0
      %v3487 = vadd.f32 0.0, %v3486
      %v3488 = vpop.f32.mrf.mxu0
      %v3489 = vadd.f32 0.0, %v3488
      %v3490 = vpop.f32.mrf.mxu0
      %v3491 = vpop.f32.mrf.mxu0
      %3492 = vdwg.mxu0
      %v3493 = vadd.f32 %v3210, %v3487
      %v3494 = vadd.f32 %v3212, %v3489
      %v3495 = vlaneseq
      %v3496 = vshrl.u32 %v3495, 7
      %v3497 = vsub.s32 4, %v3496
      %v3498 = vrot.slane %v1855, %v3497
      %v3499 = vlaneseq
      %v3500 = vshrl.u32 %v3499, 7
      %v3501 = vsub.s32 4, %v3500
      %v3502 = vrot.slane %v1856, %v3501
      %v3503 = vmul.f32 %v3493, %v3498
      %v3504 = vmul.f32 %v3494, %v3502
      %v3505 = vlaneseq
      %v3506 = vshrl.u32 %v3505, 7
      %v3507 = vsub.s32 5, %v3506
      %v3508 = vrot.slane %v1855, %v3507
      %v3509 = vlaneseq
      %v3510 = vshrl.u32 %v3509, 7
      %v3511 = vsub.s32 5, %v3510
      %v3512 = vrot.slane %v1856, %v3511
      %v3513 = vadd.f32 %v3503, %v3508
      %v3514 = vadd.f32 %v3504, %v3512
      %v3515 = vadd.f32 %v3513, %v1877
      %v3516 = vadd.f32 %v3514, %v1878
      %v3517 = vmax.f32 %v3515, 0.0
      %v3518 = vmax.f32 %v3516, 0.0
      %v3519 = vadd.f32 %v1877, %v3517
      %v3520 = vadd.f32 %v1878, %v3518
      %3521 = vst [vmem:[%s292] sm:$0xff] %v3519
      %3522 = vst [vmem:[%s292 + $0x8] sm:$0xff] %v3520
      %p3523 = scmp.lt.s32.totalorder %s18, 1
      %s3524 = scalar_select %p3523, %s18, 1
      %s3525 = smul.addr %s3524, 2
      %s3526 = smul.addr %s3525, 8
      %s3527 = scalar_lea.vmem %s7, %s3526
      // Predicated region
      $region49: #{layer_block_forward.1} parent=47 // pred_check
        %p3528 = pneg %p193
      $region50: #{layer_block_forward.1} parent=47 // pred_check_branch
        %3530 = sbr.rel (%p3528) target = $region52
      $region51: #{layer_block_forward.1} parent=47 // pred_region
        _
      $region52: #{layer_block_forward.1} parent=47 // pred_fallthru
        _
    $region48: #{layer_block_forward.1} parent=5 // pred_fallthru
      _
    %p3531 = scmp.le.s32.totalorder 2, %s13
    // Predicated region
    $region53: #{layer_block_forward.1} parent=5 // pred_check
      %p3532 = pneg %p3531
    $region54: #{layer_block_forward.1} parent=5 // pred_check_branch
      %3534 = sbr.rel (%p3532) target = $region56
    $region55: #{layer_block_forward.1} parent=5 // pred_region
      %s3535 = ssub.s32 %s13, 2
      // Predicated region
      $region57: #{layer_block_forward.1} parent=55 // pred_check
        %p3536 = pneg %p199
      $region58: #{layer_block_forward.1} parent=55 // pred_check_branch
        %3538 = sbr.rel (%p3536) target = $region60
      $region59: #{layer_block_forward.1} parent=55 // pred_region
        %p3539 = scmp.lt.s32.totalorder %s19, 1
        %s3540 = scalar_select %p3539, %s19, 1
        %s3541 = smul.addr %s3540, 2
        %s3542 = smul.addr %s3541, 8
        %s3543 = scalar_lea.vmem %s7, %s3542
      $region60: #{layer_block_forward.1} parent=55 // pred_fallthru
        _
    $region56: #{layer_block_forward.1} parent=5 // pred_fallthru
      _
  $region6: #{layer_block_forward.1} parent=0 // loop_footer
    %s17 = sadd.s32 1, %s13
  $region7: #{layer_block_forward.1} parent=0 // loop_footer_branch
    %12 = sbr.rel target = $region3
  $region8: #{layer_block_forward.1} parent=0 // loop_exit
    _

</llo_original>
